<compile_context>
chip_gen: v7x
topology: tpu7x:2x2x1
jax: 0.10.0
libtpu: 0.0.40
codegen_flags: <defaults>
</compile_context>

<pallas_src>
import jax
import jax.numpy as jnp
from jax import lax
from jax.experimental import pallas as pl
from jax.experimental.pallas import tpu as pltpu

# ------------- small config consistent with the Vit module -------------
IMG_SIZE = 16          # img_size (small)
PATCH = 8              # patch_size
DEPTH = 2              # transformer depth (small)
NUM_CLASSES = 4
IN_CH = 1
DIM = 32               # d_model (small)
MLP = 64               # dim_feedforward (small)
NHEADS = 4
DHEAD = DIM // NHEADS
NUM_PATCHES = (IMG_SIZE // PATCH) ** 2      # 4
SEQ = NUM_PATCHES + 1                       # 5
CPP = IN_CH * PATCH * PATCH                 # 64 (flattened patch length)
LN_EPS = 1e-5          # PyTorch LayerNorm / TransformerEncoderLayer default

# ----- packed "small vector" slab layout: one (NROWS, VEC_W) f32 array -----
VEC_W = 3 * DIM                              # widest row (in-proj bias)
ROW_PB = 0                                   # patch-embed bias        (DIM)
ROW_CLS = 1                                  # cls token               (DIM)
ROW_POS = 2                                  # positional embedding    (SEQ x DIM)
ROW_LAYER0 = ROW_POS + SEQ
ROWS_PER_LAYER = 8                           # bin, bout, b1, b2, g1, be1, g2, be2
ROW_TAIL = ROW_LAYER0 + DEPTH * ROWS_PER_LAYER
NROWS = ROW_TAIL + 3                         # norm_g, norm_b, head_b


# ----------------------------- in-kernel math -----------------------------
def _erf(x):
    # Abramowitz & Stegun 7.1.26 (max abs err 1.5e-7 ~ f32 eps); matches the
    # exact-erf GELU without relying on an erf lowering.
    a1, a2, a3, a4, a5 = 0.254829592, -0.284496736, 1.421413741, -1.453152027, 1.061405429
    pp = 0.3275911
    s = jnp.where(x >= 0.0, 1.0, -1.0)
    z = jnp.abs(x)
    t = 1.0 / (1.0 + pp * z)
    poly = ((((a5 * t + a4) * t + a3) * t + a2) * t + a1) * t
    return s * (1.0 - poly * jnp.exp(-z * z))


def _gelu(x):
    # PyTorch activation='gelu' (exact erf form)
    return 0.5 * x * (1.0 + _erf(x * 0.7071067811865476))


def _layernorm(x, gamma, beta, eps=LN_EPS):
    mu = jnp.mean(x, axis=-1, keepdims=True)
    var = jnp.mean(jnp.square(x - mu), axis=-1, keepdims=True)
    return (x - mu) * lax.rsqrt(var + eps) * gamma + beta


# ----------------------------- fused Pallas kernel -----------------------------
def _vit_kernel(patches_ref, pw_ref, vecs_ref, win_ref, wout_ref,
                w1_ref, w2_ref, hw_ref, o_ref):
    # One grid step == one image (batch element).
    vecs = vecs_ref[...]                                        # (NROWS, VEC_W)

    pb = vecs[ROW_PB:ROW_PB + 1, :DIM]                          # (1, D)
    cls = vecs[ROW_CLS:ROW_CLS + 1, :DIM]                       # (1, D)
    pos = vecs[ROW_POS:ROW_POS + SEQ, :DIM]                     # (SEQ, D)

    # ---- patch embedding: (NP, C*P*P) @ (C*P*P, D) + b ----
    patches = patches_ref[0]                                    # (NP, CPP)
    emb = jnp.dot(patches, pw_ref[...],
                  preferred_element_type=jnp.float32) + pb      # (NP, D)

    # ---- token slab for this image: [cls ; patch tokens] + pos ----
    x = jnp.concatenate([cls, emb], axis=0) + pos               # (SEQ, D)
    # nn.Dropout: identity at inference time (eval mode)

    # ---- transformer encoder layers (post-norm, eval mode) ----
    for l in range(DEPTH):                                      # static unroll, DEPTH=2
        base = ROW_LAYER0 + l * ROWS_PER_LAYER
        bin_l = vecs[base + 0:base + 1, :3 * DIM]
        bout_l = vecs[base + 1:base + 2, :DIM]
        b1_l = vecs[base + 2:base + 3, :MLP]
        b2_l = vecs[base + 3:base + 4, :DIM]
        g1_l = vecs[base + 4:base + 5, :DIM]
        be1_l = vecs[base + 5:base + 6, :DIM]
        g2_l = vecs[base + 6:base + 7, :DIM]
        be2_l = vecs[base + 7:base + 8, :DIM]

        # --- self-attention, all heads batched ---
        qkv = jnp.dot(x, win_ref[l],
                      preferred_element_type=jnp.float32) + bin_l   # (SEQ, 3D)
        q = qkv[:, :DIM]                # 1/sqrt(dhead) already folded into W_q / b_q
        k = qkv[:, DIM:2 * DIM]
        v = qkv[:, 2 * DIM:]

        def heads(t):                   # (SEQ, D) -> (H, SEQ, DHEAD), head-major
            return jnp.stack(
                [t[:, h * DHEAD:(h + 1) * DHEAD] for h in range(NHEADS)], axis=0)

        qh, kh, vh = heads(q), heads(k), heads(v)
        sc = jnp.einsum('hqd,hkd->hqk', qh, kh,
                        preferred_element_type=jnp.float32)         # (H, S, S)
        sc = sc - jnp.max(sc, axis=-1, keepdims=True)
        p = jnp.exp(sc)
        p = p * pl.reciprocal(jnp.sum(p, axis=-1, keepdims=True), approx=True)
        ctx = jnp.einsum('hqk,hkd->hqd', p, vh,
                         preferred_element_type=jnp.float32)        # (H, S, DHEAD)
        # output projection: per-head slab of W_out (H, DHEAD, D), summed over heads
        # (== concat(heads) @ W_out), no lane-axis concat needed.
        proj = jnp.einsum('hqd,hde->hqe', ctx, wout_ref[l],
                          preferred_element_type=jnp.float32)       # (H, S, D)
        attn = jnp.sum(proj, axis=0) + bout_l                       # (S, D)

        # residual + LayerNorm 1 (norm_first=False)
        h1 = _layernorm(x + attn, g1_l, be1_l)

        # feed-forward (GELU)
        f = jnp.dot(h1, w1_ref[l], preferred_element_type=jnp.float32) + b1_l
        f = _gelu(f)
        f = jnp.dot(f, w2_ref[l], preferred_element_type=jnp.float32) + b2_l

        x = _layernorm(h1 + f, g2_l, be2_l)

    # ---- head: cls_token + mean(patch tokens), LayerNorm, linear ----
    pooled = x[0:1, :] + jnp.sum(x[1:, :], axis=0, keepdims=True) * (1.0 / NUM_PATCHES)
    norm_g = vecs[ROW_TAIL + 0:ROW_TAIL + 1, :DIM]
    norm_b = vecs[ROW_TAIL + 1:ROW_TAIL + 2, :DIM]
    head_b = vecs[ROW_TAIL + 2:ROW_TAIL + 3, :NUM_CLASSES]
    hfin = _layernorm(pooled, norm_g, norm_b)
    logits = jnp.dot(hfin, hw_ref[...],
                     preferred_element_type=jnp.float32) + head_b   # (1, NUM_CLASSES)
    o_ref[...] = logits[None].astype(o_ref.dtype)                   # (1, 1, NUM_CLASSES)


# ----------------------------- wrapper -----------------------------
def vit_fused(patches, params, batch):
    return pl.pallas_call(
        _vit_kernel,
        out_shape=jax.ShapeDtypeStruct((batch, 1, NUM_CLASSES), jnp.float32),
        grid=(batch,),
        in_specs=[
            pl.BlockSpec((1, NUM_PATCHES, CPP), lambda b: (b, 0, 0)),       # patches
            pl.BlockSpec((CPP, DIM), lambda b: (0, 0)),                     # patch_w
            pl.BlockSpec((NROWS, VEC_W), lambda b: (0, 0)),                 # packed vectors
            pl.BlockSpec((DEPTH, DIM, 3 * DIM), lambda b: (0, 0, 0)),       # W_in
            pl.BlockSpec((DEPTH, NHEADS, DHEAD, DIM), lambda b: (0, 0, 0, 0)),  # W_out
            pl.BlockSpec((DEPTH, DIM, MLP), lambda b: (0, 0, 0)),           # W_ff1
            pl.BlockSpec((DEPTH, MLP, DIM), lambda b: (0, 0, 0)),           # W_ff2
            pl.BlockSpec((DIM, NUM_CLASSES), lambda b: (0, 0)),             # head W
        ],
        out_specs=pl.BlockSpec((1, 1, NUM_CLASSES), lambda b: (b, 0, 0)),
        compiler_params=pltpu.CompilerParams(dimension_semantics=("parallel",)),
    )(patches, params["patch_w"], params["vecs"], params["win"], params["wout"],
      params["w1"], params["w2"], params["head_w"])


# ----------------------------- parameters -----------------------------
def init_params(key):
    ks = iter(jax.random.split(key, 64))
    std = 0.02

    def nrm(shape, scale=std):
        return scale * jax.random.normal(next(ks), shape, jnp.float32)

    # Conv2d(in_ch, dim, kernel=patch, stride=patch) -> flattened (C*p*p, dim)
    conv_w = nrm((DIM, IN_CH, PATCH, PATCH))
    patch_w = conv_w.reshape(DIM, IN_CH * PATCH * PATCH).T      # (CPP, D)
    patch_b = nrm((DIM,))
    cls = jax.random.normal(next(ks), (DIM,), jnp.float32)      # torch.randn
    pos = jax.random.normal(next(ks), (SEQ, DIM), jnp.float32)  # torch.randn

    # Fold the 1/sqrt(dhead) attention scale into the Q columns of the in-proj
    # weight (and bias — zero here, keep the scaling when loading real weights).
    attn_scale = 1.0 / float(DHEAD) ** 0.5
    qscale = jnp.concatenate([jnp.full((DIM,), attn_scale, jnp.float32),
                              jnp.ones((2 * DIM,), jnp.float32)])

    win_list, wout_list, w1_list, w2_list = [], [], [], []
    layer_rows = []
    for _ in range(DEPTH):
        win_list.append(nrm((3 * DIM, DIM)).T * qscale[None, :])        # (D, 3D)
        bin_ = jnp.zeros((3 * DIM,), jnp.float32) * qscale              # in-proj bias (scaled)
        wout = nrm((DIM, DIM)).T                                        # (D, D), rows = concat-head dim
        wout_list.append(wout.reshape(NHEADS, DHEAD, DIM))              # head-major
        bout = jnp.zeros((DIM,), jnp.float32)
        w1_list.append(nrm((MLP, DIM)).T)                               # (D, MLP)
        b1 = jnp.zeros((MLP,), jnp.float32)
        w2_list.append(nrm((DIM, MLP)).T)                               # (MLP, D)
        b2 = jnp.zeros((DIM,), jnp.float32)
        g1 = jnp.ones((DIM,), jnp.float32)
        be1 = jnp.zeros((DIM,), jnp.float32)
        g2 = jnp.ones((DIM,), jnp.float32)
        be2 = jnp.zeros((DIM,), jnp.float32)
        layer_rows += [bin_, bout, b1, b2, g1, be1, g2, be2]

    norm_g = jnp.ones((DIM,), jnp.float32)
    norm_b = jnp.zeros((DIM,), jnp.float32)
    head_w = nrm((NUM_CLASSES, DIM)).T                                  # (D, NUM_CLASSES)
    head_b = jnp.zeros((NUM_CLASSES,), jnp.float32)

    # Pack every small vector into one (NROWS, VEC_W) slab (single DMA).
    def pad_row(v):
        return jnp.pad(v.astype(jnp.float32), (0, VEC_W - v.shape[0]))

    rows = ([patch_b, cls] + [pos[i] for i in range(SEQ)]
            + layer_rows + [norm_g, norm_b, head_b])
    assert len(rows) == NROWS
    vecs = jnp.stack([pad_row(r) for r in rows], axis=0)                # (NROWS, VEC_W)

    return {
        "patch_w": patch_w,
        "vecs": vecs,
        "win": jnp.stack(win_list),      # (DEPTH, D, 3D)
        "wout": jnp.stack(wout_list),    # (DEPTH, NHEADS, DHEAD, D)
        "w1": jnp.stack(w1_list),        # (DEPTH, D, MLP)
        "w2": jnp.stack(w2_list),        # (DEPTH, MLP, D)
        "head_w": head_w,                # (D, NUM_CLASSES)
    }


# ----------------------------- forward -----------------------------
def vit_forward(x, params):
    b, c, h, w = x.shape
    gh, gw = h // PATCH, w // PATCH
    # Conv2d(kernel=stride=patch) == non-overlapping patch extraction + matmul.
    # Patch vector ordering is (c, ph, pw), matching the flattened conv kernel.
    patches = x.reshape(b, c, gh, PATCH, gw, PATCH)
    patches = patches.transpose(0, 2, 4, 1, 3, 5).reshape(b, gh * gw, c * PATCH * PATCH)
    out = vit_fused(patches, params, b)
    return out.reshape(b, NUM_CLASSES)


if __name__ == "__main__":
    key = jax.random.PRNGKey(0)
    pkey, xkey = jax.random.split(key)
    params = init_params(pkey)
    x = jax.random.normal(xkey, (2, IN_CH, IMG_SIZE, IMG_SIZE), jnp.float32)

    fwd = jax.jit(vit_forward)
    out = fwd(x, params)
    out = jax.block_until_ready(out)
    assert out.shape == (2, NUM_CLASSES)
    assert bool(jnp.all(jnp.isfinite(out)))
    print("KERNEL_OK")
</pallas_src>

<mosaic_0001>
module attributes {stable_mosaic.version = 11 : i64} {
  func.func @_vit_kernel(%arg0: i32, %arg1: memref<1x4x64xf32, #tpu.memory_space<vmem>>, %arg2: memref<64x32xf32, #tpu.memory_space<vmem>>, %arg3: memref<26x96xf32, #tpu.memory_space<vmem>>, %arg4: memref<2x32x96xf32, #tpu.memory_space<vmem>>, %arg5: memref<2x4x8x32xf32, #tpu.memory_space<vmem>>, %arg6: memref<2x32x64xf32, #tpu.memory_space<vmem>>, %arg7: memref<2x64x32xf32, #tpu.memory_space<vmem>>, %arg8: memref<32x4xf32, #tpu.memory_space<vmem>>, %arg9: memref<1x1x4xf32, #tpu.memory_space<vmem>>) attributes {dimension_semantics = [#tpu.dimension_semantics<parallel>], iteration_bounds = array<i64: 2>, scalar_prefetch = 0 : i64, scratch_operands = 0 : i64, tpu.core_type = #tpu.core_type<tc>, window_params = [{transform_indices = @transform_0, window_bounds = array<i64: 1, 4, 64>}, {pipeline_mode = #tpu.pipeline_mode<synchronous>, transform_indices = @transform_1, window_bounds = array<i64: 64, 32>}, {pipeline_mode = #tpu.pipeline_mode<synchronous>, transform_indices = @transform_2, window_bounds = array<i64: 26, 96>}, {pipeline_mode = #tpu.pipeline_mode<synchronous>, transform_indices = @transform_3, window_bounds = array<i64: 2, 32, 96>}, {pipeline_mode = #tpu.pipeline_mode<synchronous>, transform_indices = @transform_4, window_bounds = array<i64: 2, 4, 8, 32>}, {pipeline_mode = #tpu.pipeline_mode<synchronous>, transform_indices = @transform_5, window_bounds = array<i64: 2, 32, 64>}, {pipeline_mode = #tpu.pipeline_mode<synchronous>, transform_indices = @transform_6, window_bounds = array<i64: 2, 64, 32>}, {pipeline_mode = #tpu.pipeline_mode<synchronous>, transform_indices = @transform_7, window_bounds = array<i64: 32, 4>}, {transform_indices = @transform_8, window_bounds = array<i64: 1, 1, 4>}]} {
    %c0 = arith.constant 0 : index
    %c0_0 = arith.constant 0 : index
    %0 = vector.load %arg3[%c0, %c0_0] : memref<26x96xf32, #tpu.memory_space<vmem>>, vector<26x96xf32>
    %1 = vector.extract_strided_slice %0 {offsets = [0, 0], sizes = [1, 32], strides = [1, 1]} : vector<26x96xf32> to vector<1x32xf32>
    %2 = vector.extract_strided_slice %0 {offsets = [1, 0], sizes = [1, 32], strides = [1, 1]} : vector<26x96xf32> to vector<1x32xf32>
    %3 = vector.extract_strided_slice %0 {offsets = [2, 0], sizes = [5, 32], strides = [1, 1]} : vector<26x96xf32> to vector<5x32xf32>
    %c0_1 = arith.constant 0 : index
    %c0_2 = arith.constant 0 : index
    %c0_3 = arith.constant 0 : index
    %4 = vector.load %arg1[%c0_1, %c0_2, %c0_3] : memref<1x4x64xf32, #tpu.memory_space<vmem>>, vector<1x4x64xf32>
    %5 = vector.shape_cast %4 : vector<1x4x64xf32> to vector<4x64xf32>
    %c0_4 = arith.constant 0 : index
    %c0_5 = arith.constant 0 : index
    %6 = vector.load %arg2[%c0_4, %c0_5] : memref<64x32xf32, #tpu.memory_space<vmem>>, vector<64x32xf32>
    %cst = arith.constant dense<0.000000e+00> : vector<4x32xf32>
    %7 = tpu.matmul %5, %6, %cst {dimension_numbers = #tpu.dot_dimension_numbers<[1], [0], [0], [1], [0, 0, 1, 1], [], []>} : vector<4x64xf32>, vector<64x32xf32>, vector<4x32xf32> -> vector<4x32xf32>
    %8 = vector.broadcast %1 : vector<1x32xf32> to vector<4x32xf32>
    %9 = arith.addf %7, %8 : vector<4x32xf32>
    %10 = tpu.concatenate %2, %9 in 0 : vector<1x32xf32>, vector<4x32xf32> -> vector<5x32xf32>
    %11 = arith.addf %10, %3 : vector<5x32xf32>
    %12 = vector.extract_strided_slice %0 {offsets = [7, 0], sizes = [1, 96], strides = [1, 1]} : vector<26x96xf32> to vector<1x96xf32>
    %13 = vector.extract_strided_slice %0 {offsets = [8, 0], sizes = [1, 32], strides = [1, 1]} : vector<26x96xf32> to vector<1x32xf32>
    %14 = vector.extract_strided_slice %0 {offsets = [9, 0], sizes = [1, 64], strides = [1, 1]} : vector<26x96xf32> to vector<1x64xf32>
    %15 = vector.extract_strided_slice %0 {offsets = [10, 0], sizes = [1, 32], strides = [1, 1]} : vector<26x96xf32> to vector<1x32xf32>
    %16 = vector.extract_strided_slice %0 {offsets = [11, 0], sizes = [1, 32], strides = [1, 1]} : vector<26x96xf32> to vector<1x32xf32>
    %17 = vector.extract_strided_slice %0 {offsets = [12, 0], sizes = [1, 32], strides = [1, 1]} : vector<26x96xf32> to vector<1x32xf32>
    %18 = vector.extract_strided_slice %0 {offsets = [13, 0], sizes = [1, 32], strides = [1, 1]} : vector<26x96xf32> to vector<1x32xf32>
    %19 = vector.extract_strided_slice %0 {offsets = [14, 0], sizes = [1, 32], strides = [1, 1]} : vector<26x96xf32> to vector<1x32xf32>
    %c0_6 = arith.constant 0 : index
    %c0_7 = arith.constant 0 : index
    %c0_8 = arith.constant 0 : index
    %20 = vector.load %arg4[%c0_6, %c0_7, %c0_8] : memref<2x32x96xf32, #tpu.memory_space<vmem>>, vector<1x32x96xf32>
    %21 = vector.shape_cast %20 : vector<1x32x96xf32> to vector<32x96xf32>
    %cst_9 = arith.constant dense<0.000000e+00> : vector<5x96xf32>
    %22 = tpu.matmul %11, %21, %cst_9 {dimension_numbers = #tpu.dot_dimension_numbers<[1], [0], [0], [1], [0, 0, 1, 1], [], []>} : vector<5x32xf32>, vector<32x96xf32>, vector<5x96xf32> -> vector<5x96xf32>
    %23 = vector.broadcast %12 : vector<1x96xf32> to vector<5x96xf32>
    %24 = arith.addf %22, %23 : vector<5x96xf32>
    %25 = vector.extract_strided_slice %24 {offsets = [0, 0], sizes = [5, 32], strides = [1, 1]} : vector<5x96xf32> to vector<5x32xf32>
    %26 = vector.extract_strided_slice %24 {offsets = [0, 32], sizes = [5, 32], strides = [1, 1]} : vector<5x96xf32> to vector<5x32xf32>
    %27 = vector.extract_strided_slice %24 {offsets = [0, 64], sizes = [5, 32], strides = [1, 1]} : vector<5x96xf32> to vector<5x32xf32>
    %28 = vector.extract_strided_slice %25 {offsets = [0, 0], sizes = [5, 8], strides = [1, 1]} : vector<5x32xf32> to vector<5x8xf32>
    %29 = vector.extract_strided_slice %25 {offsets = [0, 8], sizes = [5, 8], strides = [1, 1]} : vector<5x32xf32> to vector<5x8xf32>
    %30 = vector.extract_strided_slice %25 {offsets = [0, 16], sizes = [5, 8], strides = [1, 1]} : vector<5x32xf32> to vector<5x8xf32>
    %31 = vector.extract_strided_slice %25 {offsets = [0, 24], sizes = [5, 8], strides = [1, 1]} : vector<5x32xf32> to vector<5x8xf32>
    %32 = vector.shape_cast %28 : vector<5x8xf32> to vector<1x5x8xf32>
    %33 = vector.shape_cast %29 : vector<5x8xf32> to vector<1x5x8xf32>
    %34 = vector.shape_cast %30 : vector<5x8xf32> to vector<1x5x8xf32>
    %35 = vector.shape_cast %31 : vector<5x8xf32> to vector<1x5x8xf32>
    %36 = tpu.concatenate %32, %33, %34, %35 in 0 : vector<1x5x8xf32>, vector<1x5x8xf32>, vector<1x5x8xf32>, vector<1x5x8xf32> -> vector<4x5x8xf32>
    %37 = vector.extract_strided_slice %26 {offsets = [0, 0], sizes = [5, 8], strides = [1, 1]} : vector<5x32xf32> to vector<5x8xf32>
    %38 = vector.extract_strided_slice %26 {offsets = [0, 8], sizes = [5, 8], strides = [1, 1]} : vector<5x32xf32> to vector<5x8xf32>
    %39 = vector.extract_strided_slice %26 {offsets = [0, 16], sizes = [5, 8], strides = [1, 1]} : vector<5x32xf32> to vector<5x8xf32>
    %40 = vector.extract_strided_slice %26 {offsets = [0, 24], sizes = [5, 8], strides = [1, 1]} : vector<5x32xf32> to vector<5x8xf32>
    %41 = vector.shape_cast %37 : vector<5x8xf32> to vector<1x5x8xf32>
    %42 = vector.shape_cast %38 : vector<5x8xf32> to vector<1x5x8xf32>
    %43 = vector.shape_cast %39 : vector<5x8xf32> to vector<1x5x8xf32>
    %44 = vector.shape_cast %40 : vector<5x8xf32> to vector<1x5x8xf32>
    %45 = tpu.concatenate %41, %42, %43, %44 in 0 : vector<1x5x8xf32>, vector<1x5x8xf32>, vector<1x5x8xf32>, vector<1x5x8xf32> -> vector<4x5x8xf32>
    %46 = vector.extract_strided_slice %27 {offsets = [0, 0], sizes = [5, 8], strides = [1, 1]} : vector<5x32xf32> to vector<5x8xf32>
    %47 = vector.extract_strided_slice %27 {offsets = [0, 8], sizes = [5, 8], strides = [1, 1]} : vector<5x32xf32> to vector<5x8xf32>
    %48 = vector.extract_strided_slice %27 {offsets = [0, 16], sizes = [5, 8], strides = [1, 1]} : vector<5x32xf32> to vector<5x8xf32>
    %49 = vector.extract_strided_slice %27 {offsets = [0, 24], sizes = [5, 8], strides = [1, 1]} : vector<5x32xf32> to vector<5x8xf32>
    %50 = vector.shape_cast %46 : vector<5x8xf32> to vector<1x5x8xf32>
    %51 = vector.shape_cast %47 : vector<5x8xf32> to vector<1x5x8xf32>
    %52 = vector.shape_cast %48 : vector<5x8xf32> to vector<1x5x8xf32>
    %53 = vector.shape_cast %49 : vector<5x8xf32> to vector<1x5x8xf32>
    %54 = tpu.concatenate %50, %51, %52, %53 in 0 : vector<1x5x8xf32>, vector<1x5x8xf32>, vector<1x5x8xf32>, vector<1x5x8xf32> -> vector<4x5x8xf32>
    "tpu.trace_start"() <{level = 10 : i32, message = "hqd,hkd->hqk"}> : () -> ()
    %cst_10 = arith.constant dense<0.000000e+00> : vector<4x5x5xf32>
    %55 = tpu.matmul %36, %45, %cst_10 {dimension_numbers = #tpu.dot_dimension_numbers<[2], [2], [1], [1], [0, 0, 0, 1, 1, 1], [0], [0]>} : vector<4x5x8xf32>, vector<4x5x8xf32>, vector<4x5x5xf32> -> vector<4x5x5xf32>
    "tpu.trace_stop"() : () -> ()
    %cst_11 = arith.constant dense<0xFF800000> : vector<4x5xf32>
    %56 = vector.multi_reduction <maximumf>, %55, %cst_11 [2] : vector<4x5x5xf32> to vector<4x5xf32>
    %57 = vector.shape_cast %56 : vector<4x5xf32> to vector<4x5x1xf32>
    %58 = vector.broadcast %57 : vector<4x5x1xf32> to vector<4x5x5xf32>
    %59 = arith.subf %55, %58 : vector<4x5x5xf32>
    %60 = math.exp %59 : vector<4x5x5xf32>
    %cst_12 = arith.constant dense<0.000000e+00> : vector<4x5xf32>
    %61 = vector.multi_reduction <add>, %60, %cst_12 [2] : vector<4x5x5xf32> to vector<4x5xf32>
    %62 = vector.shape_cast %61 : vector<4x5xf32> to vector<4x5x1xf32>
    %63 = tpu.reciprocal %62 {approx = true} : vector<4x5x1xf32> -> vector<4x5x1xf32>
    %64 = vector.broadcast %63 : vector<4x5x1xf32> to vector<4x5x5xf32>
    %65 = arith.mulf %60, %64 : vector<4x5x5xf32>
    "tpu.trace_start"() <{level = 10 : i32, message = "hqk,hkd->hqd"}> : () -> ()
    %cst_13 = arith.constant dense<0.000000e+00> : vector<4x5x8xf32>
    %66 = tpu.matmul %65, %54, %cst_13 {dimension_numbers = #tpu.dot_dimension_numbers<[2], [1], [1], [2], [0, 0, 0, 1, 1, 2], [0], [0]>} : vector<4x5x5xf32>, vector<4x5x8xf32>, vector<4x5x8xf32> -> vector<4x5x8xf32>
    "tpu.trace_stop"() : () -> ()
    %c0_14 = arith.constant 0 : index
    %c0_15 = arith.constant 0 : index
    %c0_16 = arith.constant 0 : index
    %c0_17 = arith.constant 0 : index
    %67 = vector.load %arg5[%c0_14, %c0_15, %c0_16, %c0_17] : memref<2x4x8x32xf32, #tpu.memory_space<vmem>>, vector<1x4x8x32xf32>
    %68 = vector.shape_cast %67 : vector<1x4x8x32xf32> to vector<4x8x32xf32>
    "tpu.trace_start"() <{level = 10 : i32, message = "hqd,hde->hqe"}> : () -> ()
    %cst_18 = arith.constant dense<0.000000e+00> : vector<4x5x32xf32>
    %69 = tpu.matmul %66, %68, %cst_18 {dimension_numbers = #tpu.dot_dimension_numbers<[2], [1], [1], [2], [0, 0, 0, 1, 1, 2], [0], [0]>} : vector<4x5x8xf32>, vector<4x8x32xf32>, vector<4x5x32xf32> -> vector<4x5x32xf32>
    "tpu.trace_stop"() : () -> ()
    %cst_19 = arith.constant dense<0.000000e+00> : vector<5x32xf32>
    %70 = vector.multi_reduction <add>, %69, %cst_19 [0] : vector<4x5x32xf32> to vector<5x32xf32>
    %71 = vector.broadcast %13 : vector<1x32xf32> to vector<5x32xf32>
    %72 = arith.addf %70, %71 : vector<5x32xf32>
    %73 = arith.addf %11, %72 : vector<5x32xf32>
    %cst_20 = arith.constant dense<0.000000e+00> : vector<5xf32>
    %74 = vector.multi_reduction <add>, %73, %cst_20 [1] : vector<5x32xf32> to vector<5xf32>
    %75 = vector.shape_cast %74 : vector<5xf32> to vector<5x1xf32>
    %cst_21 = arith.constant 3.200000e+01 : f32
    %76 = vector.broadcast %cst_21 : f32 to vector<5x1xf32>
    %77 = arith.divf %75, %76 : vector<5x1xf32>
    %78 = vector.broadcast %77 : vector<5x1xf32> to vector<5x32xf32>
    %79 = arith.subf %73, %78 : vector<5x32xf32>
    %80 = arith.mulf %79, %79 : vector<5x32xf32>
    %cst_22 = arith.constant dense<0.000000e+00> : vector<5xf32>
    %81 = vector.multi_reduction <add>, %80, %cst_22 [1] : vector<5x32xf32> to vector<5xf32>
    %82 = vector.shape_cast %81 : vector<5xf32> to vector<5x1xf32>
    %cst_23 = arith.constant 3.200000e+01 : f32
    %83 = vector.broadcast %cst_23 : f32 to vector<5x1xf32>
    %84 = arith.divf %82, %83 : vector<5x1xf32>
    %85 = vector.broadcast %77 : vector<5x1xf32> to vector<5x32xf32>
    %86 = arith.subf %73, %85 : vector<5x32xf32>
    %cst_24 = arith.constant 9.99999974E-6 : f32
    %87 = vector.broadcast %cst_24 : f32 to vector<5x1xf32>
    %88 = arith.addf %84, %87 : vector<5x1xf32>
    %89 = math.rsqrt %88 : vector<5x1xf32>
    %90 = vector.broadcast %89 : vector<5x1xf32> to vector<5x32xf32>
    %91 = arith.mulf %86, %90 : vector<5x32xf32>
    %92 = vector.broadcast %16 : vector<1x32xf32> to vector<5x32xf32>
    %93 = arith.mulf %91, %92 : vector<5x32xf32>
    %94 = vector.broadcast %17 : vector<1x32xf32> to vector<5x32xf32>
    %95 = arith.addf %93, %94 : vector<5x32xf32>
    %c0_25 = arith.constant 0 : index
    %c0_26 = arith.constant 0 : index
    %c0_27 = arith.constant 0 : index
    %96 = vector.load %arg6[%c0_25, %c0_26, %c0_27] : memref<2x32x64xf32, #tpu.memory_space<vmem>>, vector<1x32x64xf32>
    %97 = vector.shape_cast %96 : vector<1x32x64xf32> to vector<32x64xf32>
    %cst_28 = arith.constant dense<0.000000e+00> : vector<5x64xf32>
    %98 = tpu.matmul %95, %97, %cst_28 {dimension_numbers = #tpu.dot_dimension_numbers<[1], [0], [0], [1], [0, 0, 1, 1], [], []>} : vector<5x32xf32>, vector<32x64xf32>, vector<5x64xf32> -> vector<5x64xf32>
    %99 = vector.broadcast %14 : vector<1x64xf32> to vector<5x64xf32>
    %100 = arith.addf %98, %99 : vector<5x64xf32>
    %cst_29 = arith.constant 5.000000e-01 : f32
    %101 = vector.broadcast %cst_29 : f32 to vector<5x64xf32>
    %102 = arith.mulf %101, %100 : vector<5x64xf32>
    %cst_30 = arith.constant 0.707106769 : f32
    %103 = vector.broadcast %cst_30 : f32 to vector<5x64xf32>
    %104 = arith.mulf %100, %103 : vector<5x64xf32>
    %cst_31 = arith.constant 0.000000e+00 : f32
    %105 = vector.broadcast %cst_31 : f32 to vector<5x64xf32>
    %106 = arith.cmpf oge, %104, %105 : vector<5x64xf32>
    %cst_32 = arith.constant 1.000000e+00 : f32
    %cst_33 = arith.constant -1.000000e+00 : f32
    %107 = vector.broadcast %cst_32 : f32 to vector<5x64xf32>
    %108 = vector.broadcast %cst_33 : f32 to vector<5x64xf32>
    %109 = arith.select %106, %107, %108 : vector<5x64xi1>, vector<5x64xf32>
    %110 = math.absf %104 : vector<5x64xf32>
    %cst_34 = arith.constant 0.327591091 : f32
    %111 = vector.broadcast %cst_34 : f32 to vector<5x64xf32>
    %112 = arith.mulf %111, %110 : vector<5x64xf32>
    %cst_35 = arith.constant 1.000000e+00 : f32
    %113 = vector.broadcast %cst_35 : f32 to vector<5x64xf32>
    %114 = arith.addf %113, %112 : vector<5x64xf32>
    %cst_36 = arith.constant 1.000000e+00 : f32
    %115 = vector.broadcast %cst_36 : f32 to vector<5x64xf32>
    %116 = arith.divf %115, %114 : vector<5x64xf32>
    %cst_37 = arith.constant 1.06140542 : f32
    %117 = vector.broadcast %cst_37 : f32 to vector<5x64xf32>
    %118 = arith.mulf %117, %116 : vector<5x64xf32>
    %cst_38 = arith.constant -1.45315206 : f32
    %119 = vector.broadcast %cst_38 : f32 to vector<5x64xf32>
    %120 = arith.addf %118, %119 : vector<5x64xf32>
    %121 = arith.mulf %120, %116 : vector<5x64xf32>
    %cst_39 = arith.constant 1.42141378 : f32
    %122 = vector.broadcast %cst_39 : f32 to vector<5x64xf32>
    %123 = arith.addf %121, %122 : vector<5x64xf32>
    %124 = arith.mulf %123, %116 : vector<5x64xf32>
    %cst_40 = arith.constant -0.284496725 : f32
    %125 = vector.broadcast %cst_40 : f32 to vector<5x64xf32>
    %126 = arith.addf %124, %125 : vector<5x64xf32>
    %127 = arith.mulf %126, %116 : vector<5x64xf32>
    %cst_41 = arith.constant 0.254829586 : f32
    %128 = vector.broadcast %cst_41 : f32 to vector<5x64xf32>
    %129 = arith.addf %127, %128 : vector<5x64xf32>
    %130 = arith.mulf %129, %116 : vector<5x64xf32>
    %cst_42 = arith.constant 0.000000e+00 : f32
    %131 = vector.broadcast %cst_42 : f32 to vector<5x64xf32>
    %132 = arith.subf %131, %110 : vector<5x64xf32>
    %133 = arith.mulf %132, %110 : vector<5x64xf32>
    %134 = math.exp %133 : vector<5x64xf32>
    %135 = arith.mulf %130, %134 : vector<5x64xf32>
    %cst_43 = arith.constant 1.000000e+00 : f32
    %136 = vector.broadcast %cst_43 : f32 to vector<5x64xf32>
    %137 = arith.subf %136, %135 : vector<5x64xf32>
    %138 = arith.mulf %109, %137 : vector<5x64xf32>
    %cst_44 = arith.constant 1.000000e+00 : f32
    %139 = vector.broadcast %cst_44 : f32 to vector<5x64xf32>
    %140 = arith.addf %139, %138 : vector<5x64xf32>
    %141 = arith.mulf %102, %140 : vector<5x64xf32>
    %c0_45 = arith.constant 0 : index
    %c0_46 = arith.constant 0 : index
    %c0_47 = arith.constant 0 : index
    %142 = vector.load %arg7[%c0_45, %c0_46, %c0_47] : memref<2x64x32xf32, #tpu.memory_space<vmem>>, vector<1x64x32xf32>
    %143 = vector.shape_cast %142 : vector<1x64x32xf32> to vector<64x32xf32>
    %cst_48 = arith.constant dense<0.000000e+00> : vector<5x32xf32>
    %144 = tpu.matmul %141, %143, %cst_48 {dimension_numbers = #tpu.dot_dimension_numbers<[1], [0], [0], [1], [0, 0, 1, 1], [], []>} : vector<5x64xf32>, vector<64x32xf32>, vector<5x32xf32> -> vector<5x32xf32>
    %145 = vector.broadcast %15 : vector<1x32xf32> to vector<5x32xf32>
    %146 = arith.addf %144, %145 : vector<5x32xf32>
    %147 = arith.addf %95, %146 : vector<5x32xf32>
    %cst_49 = arith.constant dense<0.000000e+00> : vector<5xf32>
    %148 = vector.multi_reduction <add>, %147, %cst_49 [1] : vector<5x32xf32> to vector<5xf32>
    %149 = vector.shape_cast %148 : vector<5xf32> to vector<5x1xf32>
    %cst_50 = arith.constant 3.200000e+01 : f32
    %150 = vector.broadcast %cst_50 : f32 to vector<5x1xf32>
    %151 = arith.divf %149, %150 : vector<5x1xf32>
    %152 = vector.broadcast %151 : vector<5x1xf32> to vector<5x32xf32>
    %153 = arith.subf %147, %152 : vector<5x32xf32>
    %154 = arith.mulf %153, %153 : vector<5x32xf32>
    %cst_51 = arith.constant dense<0.000000e+00> : vector<5xf32>
    %155 = vector.multi_reduction <add>, %154, %cst_51 [1] : vector<5x32xf32> to vector<5xf32>
    %156 = vector.shape_cast %155 : vector<5xf32> to vector<5x1xf32>
    %cst_52 = arith.constant 3.200000e+01 : f32
    %157 = vector.broadcast %cst_52 : f32 to vector<5x1xf32>
    %158 = arith.divf %156, %157 : vector<5x1xf32>
    %159 = vector.broadcast %151 : vector<5x1xf32> to vector<5x32xf32>
    %160 = arith.subf %147, %159 : vector<5x32xf32>
    %cst_53 = arith.constant 9.99999974E-6 : f32
    %161 = vector.broadcast %cst_53 : f32 to vector<5x1xf32>
    %162 = arith.addf %158, %161 : vector<5x1xf32>
    %163 = math.rsqrt %162 : vector<5x1xf32>
    %164 = vector.broadcast %163 : vector<5x1xf32> to vector<5x32xf32>
    %165 = arith.mulf %160, %164 : vector<5x32xf32>
    %166 = vector.broadcast %18 : vector<1x32xf32> to vector<5x32xf32>
    %167 = arith.mulf %165, %166 : vector<5x32xf32>
    %168 = vector.broadcast %19 : vector<1x32xf32> to vector<5x32xf32>
    %169 = arith.addf %167, %168 : vector<5x32xf32>
    %170 = vector.extract_strided_slice %0 {offsets = [15, 0], sizes = [1, 96], strides = [1, 1]} : vector<26x96xf32> to vector<1x96xf32>
    %171 = vector.extract_strided_slice %0 {offsets = [16, 0], sizes = [1, 32], strides = [1, 1]} : vector<26x96xf32> to vector<1x32xf32>
    %172 = vector.extract_strided_slice %0 {offsets = [17, 0], sizes = [1, 64], strides = [1, 1]} : vector<26x96xf32> to vector<1x64xf32>
    %173 = vector.extract_strided_slice %0 {offsets = [18, 0], sizes = [1, 32], strides = [1, 1]} : vector<26x96xf32> to vector<1x32xf32>
    %174 = vector.extract_strided_slice %0 {offsets = [19, 0], sizes = [1, 32], strides = [1, 1]} : vector<26x96xf32> to vector<1x32xf32>
    %175 = vector.extract_strided_slice %0 {offsets = [20, 0], sizes = [1, 32], strides = [1, 1]} : vector<26x96xf32> to vector<1x32xf32>
    %176 = vector.extract_strided_slice %0 {offsets = [21, 0], sizes = [1, 32], strides = [1, 1]} : vector<26x96xf32> to vector<1x32xf32>
    %177 = vector.extract_strided_slice %0 {offsets = [22, 0], sizes = [1, 32], strides = [1, 1]} : vector<26x96xf32> to vector<1x32xf32>
    %c1 = arith.constant 1 : index
    %c0_54 = arith.constant 0 : index
    %c0_55 = arith.constant 0 : index
    %178 = vector.load %arg4[%c1, %c0_54, %c0_55] : memref<2x32x96xf32, #tpu.memory_space<vmem>>, vector<1x32x96xf32>
    %179 = vector.shape_cast %178 : vector<1x32x96xf32> to vector<32x96xf32>
    %cst_56 = arith.constant dense<0.000000e+00> : vector<5x96xf32>
    %180 = tpu.matmul %169, %179, %cst_56 {dimension_numbers = #tpu.dot_dimension_numbers<[1], [0], [0], [1], [0, 0, 1, 1], [], []>} : vector<5x32xf32>, vector<32x96xf32>, vector<5x96xf32> -> vector<5x96xf32>
    %181 = vector.broadcast %170 : vector<1x96xf32> to vector<5x96xf32>
    %182 = arith.addf %180, %181 : vector<5x96xf32>
    %183 = vector.extract_strided_slice %182 {offsets = [0, 0], sizes = [5, 32], strides = [1, 1]} : vector<5x96xf32> to vector<5x32xf32>
    %184 = vector.extract_strided_slice %182 {offsets = [0, 32], sizes = [5, 32], strides = [1, 1]} : vector<5x96xf32> to vector<5x32xf32>
    %185 = vector.extract_strided_slice %182 {offsets = [0, 64], sizes = [5, 32], strides = [1, 1]} : vector<5x96xf32> to vector<5x32xf32>
    %186 = vector.extract_strided_slice %183 {offsets = [0, 0], sizes = [5, 8], strides = [1, 1]} : vector<5x32xf32> to vector<5x8xf32>
    %187 = vector.extract_strided_slice %183 {offsets = [0, 8], sizes = [5, 8], strides = [1, 1]} : vector<5x32xf32> to vector<5x8xf32>
    %188 = vector.extract_strided_slice %183 {offsets = [0, 16], sizes = [5, 8], strides = [1, 1]} : vector<5x32xf32> to vector<5x8xf32>
    %189 = vector.extract_strided_slice %183 {offsets = [0, 24], sizes = [5, 8], strides = [1, 1]} : vector<5x32xf32> to vector<5x8xf32>
    %190 = vector.shape_cast %186 : vector<5x8xf32> to vector<1x5x8xf32>
    %191 = vector.shape_cast %187 : vector<5x8xf32> to vector<1x5x8xf32>
    %192 = vector.shape_cast %188 : vector<5x8xf32> to vector<1x5x8xf32>
    %193 = vector.shape_cast %189 : vector<5x8xf32> to vector<1x5x8xf32>
    %194 = tpu.concatenate %190, %191, %192, %193 in 0 : vector<1x5x8xf32>, vector<1x5x8xf32>, vector<1x5x8xf32>, vector<1x5x8xf32> -> vector<4x5x8xf32>
    %195 = vector.extract_strided_slice %184 {offsets = [0, 0], sizes = [5, 8], strides = [1, 1]} : vector<5x32xf32> to vector<5x8xf32>
    %196 = vector.extract_strided_slice %184 {offsets = [0, 8], sizes = [5, 8], strides = [1, 1]} : vector<5x32xf32> to vector<5x8xf32>
    %197 = vector.extract_strided_slice %184 {offsets = [0, 16], sizes = [5, 8], strides = [1, 1]} : vector<5x32xf32> to vector<5x8xf32>
    %198 = vector.extract_strided_slice %184 {offsets = [0, 24], sizes = [5, 8], strides = [1, 1]} : vector<5x32xf32> to vector<5x8xf32>
    %199 = vector.shape_cast %195 : vector<5x8xf32> to vector<1x5x8xf32>
    %200 = vector.shape_cast %196 : vector<5x8xf32> to vector<1x5x8xf32>
    %201 = vector.shape_cast %197 : vector<5x8xf32> to vector<1x5x8xf32>
    %202 = vector.shape_cast %198 : vector<5x8xf32> to vector<1x5x8xf32>
    %203 = tpu.concatenate %199, %200, %201, %202 in 0 : vector<1x5x8xf32>, vector<1x5x8xf32>, vector<1x5x8xf32>, vector<1x5x8xf32> -> vector<4x5x8xf32>
    %204 = vector.extract_strided_slice %185 {offsets = [0, 0], sizes = [5, 8], strides = [1, 1]} : vector<5x32xf32> to vector<5x8xf32>
    %205 = vector.extract_strided_slice %185 {offsets = [0, 8], sizes = [5, 8], strides = [1, 1]} : vector<5x32xf32> to vector<5x8xf32>
    %206 = vector.extract_strided_slice %185 {offsets = [0, 16], sizes = [5, 8], strides = [1, 1]} : vector<5x32xf32> to vector<5x8xf32>
    %207 = vector.extract_strided_slice %185 {offsets = [0, 24], sizes = [5, 8], strides = [1, 1]} : vector<5x32xf32> to vector<5x8xf32>
    %208 = vector.shape_cast %204 : vector<5x8xf32> to vector<1x5x8xf32>
    %209 = vector.shape_cast %205 : vector<5x8xf32> to vector<1x5x8xf32>
    %210 = vector.shape_cast %206 : vector<5x8xf32> to vector<1x5x8xf32>
    %211 = vector.shape_cast %207 : vector<5x8xf32> to vector<1x5x8xf32>
    %212 = tpu.concatenate %208, %209, %210, %211 in 0 : vector<1x5x8xf32>, vector<1x5x8xf32>, vector<1x5x8xf32>, vector<1x5x8xf32> -> vector<4x5x8xf32>
    "tpu.trace_start"() <{level = 10 : i32, message = "hqd,hkd->hqk"}> : () -> ()
    %cst_57 = arith.constant dense<0.000000e+00> : vector<4x5x5xf32>
    %213 = tpu.matmul %194, %203, %cst_57 {dimension_numbers = #tpu.dot_dimension_numbers<[2], [2], [1], [1], [0, 0, 0, 1, 1, 1], [0], [0]>} : vector<4x5x8xf32>, vector<4x5x8xf32>, vector<4x5x5xf32> -> vector<4x5x5xf32>
    "tpu.trace_stop"() : () -> ()
    %cst_58 = arith.constant dense<0xFF800000> : vector<4x5xf32>
    %214 = vector.multi_reduction <maximumf>, %213, %cst_58 [2] : vector<4x5x5xf32> to vector<4x5xf32>
    %215 = vector.shape_cast %214 : vector<4x5xf32> to vector<4x5x1xf32>
    %216 = vector.broadcast %215 : vector<4x5x1xf32> to vector<4x5x5xf32>
    %217 = arith.subf %213, %216 : vector<4x5x5xf32>
    %218 = math.exp %217 : vector<4x5x5xf32>
    %cst_59 = arith.constant dense<0.000000e+00> : vector<4x5xf32>
    %219 = vector.multi_reduction <add>, %218, %cst_59 [2] : vector<4x5x5xf32> to vector<4x5xf32>
    %220 = vector.shape_cast %219 : vector<4x5xf32> to vector<4x5x1xf32>
    %221 = tpu.reciprocal %220 {approx = true} : vector<4x5x1xf32> -> vector<4x5x1xf32>
    %222 = vector.broadcast %221 : vector<4x5x1xf32> to vector<4x5x5xf32>
    %223 = arith.mulf %218, %222 : vector<4x5x5xf32>
    "tpu.trace_start"() <{level = 10 : i32, message = "hqk,hkd->hqd"}> : () -> ()
    %cst_60 = arith.constant dense<0.000000e+00> : vector<4x5x8xf32>
    %224 = tpu.matmul %223, %212, %cst_60 {dimension_numbers = #tpu.dot_dimension_numbers<[2], [1], [1], [2], [0, 0, 0, 1, 1, 2], [0], [0]>} : vector<4x5x5xf32>, vector<4x5x8xf32>, vector<4x5x8xf32> -> vector<4x5x8xf32>
    "tpu.trace_stop"() : () -> ()
    %c1_61 = arith.constant 1 : index
    %c0_62 = arith.constant 0 : index
    %c0_63 = arith.constant 0 : index
    %c0_64 = arith.constant 0 : index
    %225 = vector.load %arg5[%c1_61, %c0_62, %c0_63, %c0_64] : memref<2x4x8x32xf32, #tpu.memory_space<vmem>>, vector<1x4x8x32xf32>
    %226 = vector.shape_cast %225 : vector<1x4x8x32xf32> to vector<4x8x32xf32>
    "tpu.trace_start"() <{level = 10 : i32, message = "hqd,hde->hqe"}> : () -> ()
    %cst_65 = arith.constant dense<0.000000e+00> : vector<4x5x32xf32>
    %227 = tpu.matmul %224, %226, %cst_65 {dimension_numbers = #tpu.dot_dimension_numbers<[2], [1], [1], [2], [0, 0, 0, 1, 1, 2], [0], [0]>} : vector<4x5x8xf32>, vector<4x8x32xf32>, vector<4x5x32xf32> -> vector<4x5x32xf32>
    "tpu.trace_stop"() : () -> ()
    %cst_66 = arith.constant dense<0.000000e+00> : vector<5x32xf32>
    %228 = vector.multi_reduction <add>, %227, %cst_66 [0] : vector<4x5x32xf32> to vector<5x32xf32>
    %229 = vector.broadcast %171 : vector<1x32xf32> to vector<5x32xf32>
    %230 = arith.addf %228, %229 : vector<5x32xf32>
    %231 = arith.addf %169, %230 : vector<5x32xf32>
    %cst_67 = arith.constant dense<0.000000e+00> : vector<5xf32>
    %232 = vector.multi_reduction <add>, %231, %cst_67 [1] : vector<5x32xf32> to vector<5xf32>
    %233 = vector.shape_cast %232 : vector<5xf32> to vector<5x1xf32>
    %cst_68 = arith.constant 3.200000e+01 : f32
    %234 = vector.broadcast %cst_68 : f32 to vector<5x1xf32>
    %235 = arith.divf %233, %234 : vector<5x1xf32>
    %236 = vector.broadcast %235 : vector<5x1xf32> to vector<5x32xf32>
    %237 = arith.subf %231, %236 : vector<5x32xf32>
    %238 = arith.mulf %237, %237 : vector<5x32xf32>
    %cst_69 = arith.constant dense<0.000000e+00> : vector<5xf32>
    %239 = vector.multi_reduction <add>, %238, %cst_69 [1] : vector<5x32xf32> to vector<5xf32>
    %240 = vector.shape_cast %239 : vector<5xf32> to vector<5x1xf32>
    %cst_70 = arith.constant 3.200000e+01 : f32
    %241 = vector.broadcast %cst_70 : f32 to vector<5x1xf32>
    %242 = arith.divf %240, %241 : vector<5x1xf32>
    %243 = vector.broadcast %235 : vector<5x1xf32> to vector<5x32xf32>
    %244 = arith.subf %231, %243 : vector<5x32xf32>
    %cst_71 = arith.constant 9.99999974E-6 : f32
    %245 = vector.broadcast %cst_71 : f32 to vector<5x1xf32>
    %246 = arith.addf %242, %245 : vector<5x1xf32>
    %247 = math.rsqrt %246 : vector<5x1xf32>
    %248 = vector.broadcast %247 : vector<5x1xf32> to vector<5x32xf32>
    %249 = arith.mulf %244, %248 : vector<5x32xf32>
    %250 = vector.broadcast %174 : vector<1x32xf32> to vector<5x32xf32>
    %251 = arith.mulf %249, %250 : vector<5x32xf32>
    %252 = vector.broadcast %175 : vector<1x32xf32> to vector<5x32xf32>
    %253 = arith.addf %251, %252 : vector<5x32xf32>
    %c1_72 = arith.constant 1 : index
    %c0_73 = arith.constant 0 : index
    %c0_74 = arith.constant 0 : index
    %254 = vector.load %arg6[%c1_72, %c0_73, %c0_74] : memref<2x32x64xf32, #tpu.memory_space<vmem>>, vector<1x32x64xf32>
    %255 = vector.shape_cast %254 : vector<1x32x64xf32> to vector<32x64xf32>
    %cst_75 = arith.constant dense<0.000000e+00> : vector<5x64xf32>
    %256 = tpu.matmul %253, %255, %cst_75 {dimension_numbers = #tpu.dot_dimension_numbers<[1], [0], [0], [1], [0, 0, 1, 1], [], []>} : vector<5x32xf32>, vector<32x64xf32>, vector<5x64xf32> -> vector<5x64xf32>
    %257 = vector.broadcast %172 : vector<1x64xf32> to vector<5x64xf32>
    %258 = arith.addf %256, %257 : vector<5x64xf32>
    %cst_76 = arith.constant 5.000000e-01 : f32
    %259 = vector.broadcast %cst_76 : f32 to vector<5x64xf32>
    %260 = arith.mulf %259, %258 : vector<5x64xf32>
    %cst_77 = arith.constant 0.707106769 : f32
    %261 = vector.broadcast %cst_77 : f32 to vector<5x64xf32>
    %262 = arith.mulf %258, %261 : vector<5x64xf32>
    %cst_78 = arith.constant 0.000000e+00 : f32
    %263 = vector.broadcast %cst_78 : f32 to vector<5x64xf32>
    %264 = arith.cmpf oge, %262, %263 : vector<5x64xf32>
    %cst_79 = arith.constant 1.000000e+00 : f32
    %cst_80 = arith.constant -1.000000e+00 : f32
    %265 = vector.broadcast %cst_79 : f32 to vector<5x64xf32>
    %266 = vector.broadcast %cst_80 : f32 to vector<5x64xf32>
    %267 = arith.select %264, %265, %266 : vector<5x64xi1>, vector<5x64xf32>
    %268 = math.absf %262 : vector<5x64xf32>
    %cst_81 = arith.constant 0.327591091 : f32
    %269 = vector.broadcast %cst_81 : f32 to vector<5x64xf32>
    %270 = arith.mulf %269, %268 : vector<5x64xf32>
    %cst_82 = arith.constant 1.000000e+00 : f32
    %271 = vector.broadcast %cst_82 : f32 to vector<5x64xf32>
    %272 = arith.addf %271, %270 : vector<5x64xf32>
    %cst_83 = arith.constant 1.000000e+00 : f32
    %273 = vector.broadcast %cst_83 : f32 to vector<5x64xf32>
    %274 = arith.divf %273, %272 : vector<5x64xf32>
    %cst_84 = arith.constant 1.06140542 : f32
    %275 = vector.broadcast %cst_84 : f32 to vector<5x64xf32>
    %276 = arith.mulf %275, %274 : vector<5x64xf32>
    %cst_85 = arith.constant -1.45315206 : f32
    %277 = vector.broadcast %cst_85 : f32 to vector<5x64xf32>
    %278 = arith.addf %276, %277 : vector<5x64xf32>
    %279 = arith.mulf %278, %274 : vector<5x64xf32>
    %cst_86 = arith.constant 1.42141378 : f32
    %280 = vector.broadcast %cst_86 : f32 to vector<5x64xf32>
    %281 = arith.addf %279, %280 : vector<5x64xf32>
    %282 = arith.mulf %281, %274 : vector<5x64xf32>
    %cst_87 = arith.constant -0.284496725 : f32
    %283 = vector.broadcast %cst_87 : f32 to vector<5x64xf32>
    %284 = arith.addf %282, %283 : vector<5x64xf32>
    %285 = arith.mulf %284, %274 : vector<5x64xf32>
    %cst_88 = arith.constant 0.254829586 : f32
    %286 = vector.broadcast %cst_88 : f32 to vector<5x64xf32>
    %287 = arith.addf %285, %286 : vector<5x64xf32>
    %288 = arith.mulf %287, %274 : vector<5x64xf32>
    %cst_89 = arith.constant 0.000000e+00 : f32
    %289 = vector.broadcast %cst_89 : f32 to vector<5x64xf32>
    %290 = arith.subf %289, %268 : vector<5x64xf32>
    %291 = arith.mulf %290, %268 : vector<5x64xf32>
    %292 = math.exp %291 : vector<5x64xf32>
    %293 = arith.mulf %288, %292 : vector<5x64xf32>
    %cst_90 = arith.constant 1.000000e+00 : f32
    %294 = vector.broadcast %cst_90 : f32 to vector<5x64xf32>
    %295 = arith.subf %294, %293 : vector<5x64xf32>
    %296 = arith.mulf %267, %295 : vector<5x64xf32>
    %cst_91 = arith.constant 1.000000e+00 : f32
    %297 = vector.broadcast %cst_91 : f32 to vector<5x64xf32>
    %298 = arith.addf %297, %296 : vector<5x64xf32>
    %299 = arith.mulf %260, %298 : vector<5x64xf32>
    %c1_92 = arith.constant 1 : index
    %c0_93 = arith.constant 0 : index
    %c0_94 = arith.constant 0 : index
    %300 = vector.load %arg7[%c1_92, %c0_93, %c0_94] : memref<2x64x32xf32, #tpu.memory_space<vmem>>, vector<1x64x32xf32>
    %301 = vector.shape_cast %300 : vector<1x64x32xf32> to vector<64x32xf32>
    %cst_95 = arith.constant dense<0.000000e+00> : vector<5x32xf32>
    %302 = tpu.matmul %299, %301, %cst_95 {dimension_numbers = #tpu.dot_dimension_numbers<[1], [0], [0], [1], [0, 0, 1, 1], [], []>} : vector<5x64xf32>, vector<64x32xf32>, vector<5x32xf32> -> vector<5x32xf32>
    %303 = vector.broadcast %173 : vector<1x32xf32> to vector<5x32xf32>
    %304 = arith.addf %302, %303 : vector<5x32xf32>
    %305 = arith.addf %253, %304 : vector<5x32xf32>
    %cst_96 = arith.constant dense<0.000000e+00> : vector<5xf32>
    %306 = vector.multi_reduction <add>, %305, %cst_96 [1] : vector<5x32xf32> to vector<5xf32>
    %307 = vector.shape_cast %306 : vector<5xf32> to vector<5x1xf32>
    %cst_97 = arith.constant 3.200000e+01 : f32
    %308 = vector.broadcast %cst_97 : f32 to vector<5x1xf32>
    %309 = arith.divf %307, %308 : vector<5x1xf32>
    %310 = vector.broadcast %309 : vector<5x1xf32> to vector<5x32xf32>
    %311 = arith.subf %305, %310 : vector<5x32xf32>
    %312 = arith.mulf %311, %311 : vector<5x32xf32>
    %cst_98 = arith.constant dense<0.000000e+00> : vector<5xf32>
    %313 = vector.multi_reduction <add>, %312, %cst_98 [1] : vector<5x32xf32> to vector<5xf32>
    %314 = vector.shape_cast %313 : vector<5xf32> to vector<5x1xf32>
    %cst_99 = arith.constant 3.200000e+01 : f32
    %315 = vector.broadcast %cst_99 : f32 to vector<5x1xf32>
    %316 = arith.divf %314, %315 : vector<5x1xf32>
    %317 = vector.broadcast %309 : vector<5x1xf32> to vector<5x32xf32>
    %318 = arith.subf %305, %317 : vector<5x32xf32>
    %cst_100 = arith.constant 9.99999974E-6 : f32
    %319 = vector.broadcast %cst_100 : f32 to vector<5x1xf32>
    %320 = arith.addf %316, %319 : vector<5x1xf32>
    %321 = math.rsqrt %320 : vector<5x1xf32>
    %322 = vector.broadcast %321 : vector<5x1xf32> to vector<5x32xf32>
    %323 = arith.mulf %318, %322 : vector<5x32xf32>
    %324 = vector.broadcast %176 : vector<1x32xf32> to vector<5x32xf32>
    %325 = arith.mulf %323, %324 : vector<5x32xf32>
    %326 = vector.broadcast %177 : vector<1x32xf32> to vector<5x32xf32>
    %327 = arith.addf %325, %326 : vector<5x32xf32>
    %328 = vector.extract_strided_slice %327 {offsets = [0, 0], sizes = [1, 32], strides = [1, 1]} : vector<5x32xf32> to vector<1x32xf32>
    %329 = vector.extract_strided_slice %327 {offsets = [1, 0], sizes = [4, 32], strides = [1, 1]} : vector<5x32xf32> to vector<4x32xf32>
    %cst_101 = arith.constant dense<0.000000e+00> : vector<32xf32>
    %330 = vector.multi_reduction <add>, %329, %cst_101 [0] : vector<4x32xf32> to vector<32xf32>
    %331 = vector.shape_cast %330 : vector<32xf32> to vector<1x32xf32>
    %cst_102 = arith.constant 2.500000e-01 : f32
    %332 = vector.broadcast %cst_102 : f32 to vector<1x32xf32>
    %333 = arith.mulf %331, %332 : vector<1x32xf32>
    %334 = arith.addf %328, %333 : vector<1x32xf32>
    %335 = vector.extract_strided_slice %0 {offsets = [23, 0], sizes = [1, 32], strides = [1, 1]} : vector<26x96xf32> to vector<1x32xf32>
    %336 = vector.extract_strided_slice %0 {offsets = [24, 0], sizes = [1, 32], strides = [1, 1]} : vector<26x96xf32> to vector<1x32xf32>
    %337 = vector.extract_strided_slice %0 {offsets = [25, 0], sizes = [1, 4], strides = [1, 1]} : vector<26x96xf32> to vector<1x4xf32>
    %cst_103 = arith.constant dense<0.000000e+00> : vector<1xf32>
    %338 = vector.multi_reduction <add>, %334, %cst_103 [1] : vector<1x32xf32> to vector<1xf32>
    %339 = vector.shape_cast %338 : vector<1xf32> to vector<1x1xf32>
    %cst_104 = arith.constant 3.200000e+01 : f32
    %340 = vector.broadcast %cst_104 : f32 to vector<1x1xf32>
    %341 = arith.divf %339, %340 : vector<1x1xf32>
    %342 = vector.broadcast %341 : vector<1x1xf32> to vector<1x32xf32>
    %343 = arith.subf %334, %342 : vector<1x32xf32>
    %344 = arith.mulf %343, %343 : vector<1x32xf32>
    %cst_105 = arith.constant dense<0.000000e+00> : vector<1xf32>
    %345 = vector.multi_reduction <add>, %344, %cst_105 [1] : vector<1x32xf32> to vector<1xf32>
    %346 = vector.shape_cast %345 : vector<1xf32> to vector<1x1xf32>
    %cst_106 = arith.constant 3.200000e+01 : f32
    %347 = vector.broadcast %cst_106 : f32 to vector<1x1xf32>
    %348 = arith.divf %346, %347 : vector<1x1xf32>
    %349 = vector.broadcast %341 : vector<1x1xf32> to vector<1x32xf32>
    %350 = arith.subf %334, %349 : vector<1x32xf32>
    %cst_107 = arith.constant 9.99999974E-6 : f32
    %351 = vector.broadcast %cst_107 : f32 to vector<1x1xf32>
    %352 = arith.addf %348, %351 : vector<1x1xf32>
    %353 = math.rsqrt %352 : vector<1x1xf32>
    %354 = vector.broadcast %353 : vector<1x1xf32> to vector<1x32xf32>
    %355 = arith.mulf %350, %354 : vector<1x32xf32>
    %356 = arith.mulf %355, %335 : vector<1x32xf32>
    %357 = arith.addf %356, %336 : vector<1x32xf32>
    %c0_108 = arith.constant 0 : index
    %c0_109 = arith.constant 0 : index
    %358 = vector.load %arg8[%c0_108, %c0_109] : memref<32x4xf32, #tpu.memory_space<vmem>>, vector<32x4xf32>
    %cst_110 = arith.constant dense<0.000000e+00> : vector<1x4xf32>
    %359 = tpu.matmul %357, %358, %cst_110 {dimension_numbers = #tpu.dot_dimension_numbers<[1], [0], [0], [1], [0, 0, 1, 1], [], []>} : vector<1x32xf32>, vector<32x4xf32>, vector<1x4xf32> -> vector<1x4xf32>
    %360 = arith.addf %359, %337 : vector<1x4xf32>
    %361 = vector.shape_cast %360 : vector<1x4xf32> to vector<1x1x4xf32>
    %c0_111 = arith.constant 0 : index
    %c0_112 = arith.constant 0 : index
    %c0_113 = arith.constant 0 : index
    %362 = vector.load %arg9[%c0_111, %c0_112, %c0_113] : memref<1x1x4xf32, #tpu.memory_space<vmem>>, vector<1x1x4xf32>
    tpu.vector_store %arg9[%c0_111, %c0_112, %c0_113], %361 {strides = array<i32>} : memref<1x1x4xf32, #tpu.memory_space<vmem>>, vector<1x1x4xf32>,
    return
  }
  func.func @transform_0(%arg0: i32) -> (i32, i32, i32) {
    %c0_i32 = arith.constant 0 : i32
    %c0_i32_0 = arith.constant 0 : i32
    %c0_i32_1 = arith.constant 0 : i32
    return %arg0, %c0_i32, %c0_i32_0 : i32, i32, i32
  }
  func.func @transform_1(%arg0: i32) -> (i32, i32) {
    %c0_i32 = arith.constant 0 : i32
    %c0_i32_0 = arith.constant 0 : i32
    %c0_i32_1 = arith.constant 0 : i32
    return %c0_i32, %c0_i32_0 : i32, i32
  }
  func.func @transform_2(%arg0: i32) -> (i32, i32) {
    %c0_i32 = arith.constant 0 : i32
    %c0_i32_0 = arith.constant 0 : i32
    %c0_i32_1 = arith.constant 0 : i32
    return %c0_i32, %c0_i32_0 : i32, i32
  }
  func.func @transform_3(%arg0: i32) -> (i32, i32, i32) {
    %c0_i32 = arith.constant 0 : i32
    %c0_i32_0 = arith.constant 0 : i32
    %c0_i32_1 = arith.constant 0 : i32
    %c0_i32_2 = arith.constant 0 : i32
    return %c0_i32, %c0_i32_0, %c0_i32_1 : i32, i32, i32
  }
  func.func @transform_4(%arg0: i32) -> (i32, i32, i32, i32) {
    %c0_i32 = arith.constant 0 : i32
    %c0_i32_0 = arith.constant 0 : i32
    %c0_i32_1 = arith.constant 0 : i32
    %c0_i32_2 = arith.constant 0 : i32
    %c0_i32_3 = arith.constant 0 : i32
    return %c0_i32, %c0_i32_0, %c0_i32_1, %c0_i32_2 : i32, i32, i32, i32
  }
  func.func @transform_5(%arg0: i32) -> (i32, i32, i32) {
    %c0_i32 = arith.constant 0 : i32
    %c0_i32_0 = arith.constant 0 : i32
    %c0_i32_1 = arith.constant 0 : i32
    %c0_i32_2 = arith.constant 0 : i32
    return %c0_i32, %c0_i32_0, %c0_i32_1 : i32, i32, i32
  }
  func.func @transform_6(%arg0: i32) -> (i32, i32, i32) {
    %c0_i32 = arith.constant 0 : i32
    %c0_i32_0 = arith.constant 0 : i32
    %c0_i32_1 = arith.constant 0 : i32
    %c0_i32_2 = arith.constant 0 : i32
    return %c0_i32, %c0_i32_0, %c0_i32_1 : i32, i32, i32
  }
  func.func @transform_7(%arg0: i32) -> (i32, i32) {
    %c0_i32 = arith.constant 0 : i32
    %c0_i32_0 = arith.constant 0 : i32
    %c0_i32_1 = arith.constant 0 : i32
    return %c0_i32, %c0_i32_0 : i32, i32
  }
  func.func @transform_8(%arg0: i32) -> (i32, i32, i32) {
    %c0_i32 = arith.constant 0 : i32
    %c0_i32_0 = arith.constant 0 : i32
    %c0_i32_1 = arith.constant 0 : i32
    return %arg0, %c0_i32, %c0_i32_0 : i32, i32, i32
  }
}

</mosaic_0001>

<llo_original>
// kernel: vit_forward.1
$region0: #{vit_forward.1}
  #allocation0 [shape = 'u32[]', space=smem, size = 0x4, offset = 0x4, fixed_abs, tag = 'smem constant byte address 0x4 - core index']
  #allocation1 [shape = 'u32[144,128]{1,0:T(1,128)}', space=vmem, size = 0x12000, scoped, tag = 'internal scratch']
  %s0 = inlined_call_operand.vmem [shape: f32[2,4,64], index: 0, kind: input, shape index: {}]
  %s1 = inlined_call_operand.vmem [shape: f32[64,32], index: 1, kind: input, shape index: {}]
  %s2 = inlined_call_operand.vmem [shape: f32[26,96], index: 2, kind: input, shape index: {}]
  %s3 = inlined_call_operand.vmem [shape: f32[2,32,96], index: 3, kind: input, shape index: {}]
  %s4 = inlined_call_operand.vmem [shape: f32[2,4,8,32], index: 4, kind: input, shape index: {}]
  %s5 = inlined_call_operand.vmem [shape: f32[2,32,64], index: 5, kind: input, shape index: {}]
  %s6 = inlined_call_operand.vmem [shape: f32[2,64,32], index: 6, kind: input, shape index: {}]
  %s7 = inlined_call_operand.vmem [shape: f32[32,4], index: 7, kind: input, shape index: {}]
  %s8 = inlined_call_operand.hbm [shape: f32[2,1,4], index: 8, kind: output, shape index: {}]
  %s9 = sld [smem:[#allocation0]]
  $region65: #{vit_forward.1} parent=0
    _
  %s11 = ssub.s32 1, %s9
  %s12 = scalar_select 0, %s11, %s9
  $region1: #{vit_forward.1} parent=0
    #allocation2 [shape = 'u8[1024]{0}', space=vmem, size = 0x400, scoped, tag = 'output window, operand 0']
    #allocation3 [shape = 's32[2]{0}', space=sflag, size = 0x8, scoped, tag = 'scoped memory for vit_forward.1']
    %13 = vsyncpa [#allocation3], 0
    %s14 = scalar_lea.sflag [#allocation3], 1
    %15 = vsyncpa %s14, 0
    loop: start=0, step=1, limit=4
    $region2: #{vit_forward.1} parent=1 // loop_pre_header
      _
    $region3: #{vit_forward.1} parent=1 // loop_header
      %s17 = sphi 0, %s21
      %p18 = scmp.ge.s32.totalorder %s17, 4
      %s27 = sphi 0, %s29
      %s30 = sphi 0, %s27
      %s31 = sphi 0, %s30
      %s47 = sphi 0, %s31
      %s51 = sphi 0, %s51
      %s53 = sphi 0, %s51
      %s54 = sphi 0, %s53
      %s68 = sphi 0, %s54
      %s72 = sphi 0, %s72
      %s74 = sphi 0, %s72
      %s75 = sphi 0, %s74
      %s89 = sphi 0, %s75
      %s93 = sphi 0, %s93
      %s95 = sphi 0, %s93
      %s96 = sphi 0, %s95
      %s110 = sphi 0, %s96
      %s114 = sphi 0, %s114
      %s116 = sphi 0, %s114
      %s117 = sphi 0, %s116
      %s131 = sphi 0, %s117
      %s135 = sphi 0, %s135
      %s137 = sphi 0, %s135
      %s138 = sphi 0, %s137
      %s152 = sphi 0, %s138
      %s156 = sphi 0, %s156
      %s158 = sphi 0, %s156
      %s159 = sphi 0, %s158
      %s173 = sphi 0, %s159
      %s177 = sphi 0, %s177
      %s179 = sphi 0, %s177
      %s180 = sphi 0, %s179
      %s194 = sphi 0, %s180
      %s200 = sphi 0, %s202
      %s203 = sphi 0, %s200
      %s204 = sphi 0, %s203
      %s220 = sphi 0, %s204
    $region4: #{vit_forward.1} parent=1 // loop_header_branch
      %20 = sbr.rel (%p18) target = $region8
    $region5: #{vit_forward.1} parent=1 // loop_body
      %s22 = ssub.s32 %s17, 1
      %s23 = ssub.s32 %s17, 2
      %s24 = sadd.s32 %s17, 1
      %s25 = ssub.s32 %s17, %s24
      %p26 = scmp.eq.s32.totalorder %s25, 0
      %s28 = sadd.s32 %s27, 1
      %s29 = scalar_select %p26, %s27, %s28
      %p32 = pneg %p26
      %p33 = scmp.eq.s32.totalorder %s17, 1
      %p34 = por %p32, %p33
      %p35 = scmp.ne.s32.totalorder %s27, %s30
      %p36 = scmp.eq.s32.totalorder %s17, 0
      %p37 = por %p35, %p36
      %p38 = scmp.ne.s32.totalorder %s27, %s30
      %p39 = scmp.eq.s32.totalorder %s22, 1
      %p40 = por %p38, %p39
      %p41 = scmp.ne.s32.totalorder %s30, %s31
      %p42 = scmp.eq.s32.totalorder %s22, 0
      %p43 = por %p41, %p42
      %p44 = scmp.ne.s32.totalorder %s30, %s31
      %p45 = scmp.eq.s32.totalorder %s23, 1
      %p46 = por %p44, %p45
      %p48 = scmp.ne.s32.totalorder %s31, %s47
      %p49 = scmp.eq.s32.totalorder %s23, 0
      %p50 = por %p48, %p49
      %s52 = sadd.s32 %s51, 1
      %p55 = scmp.eq.s32.totalorder %s17, 1
      %p56 = scmp.ne.s32.totalorder %s51, %s53
      %p57 = scmp.eq.s32.totalorder %s17, 0
      %p58 = por %p56, %p57
      %p59 = scmp.ne.s32.totalorder %s51, %s53
      %p60 = scmp.eq.s32.totalorder %s22, 1
      %p61 = por %p59, %p60
      %p62 = scmp.ne.s32.totalorder %s53, %s54
      %p63 = scmp.eq.s32.totalorder %s22, 0
      %p64 = por %p62, %p63
      %p65 = scmp.ne.s32.totalorder %s53, %s54
      %p66 = scmp.eq.s32.totalorder %s23, 1
      %p67 = por %p65, %p66
      %p69 = scmp.ne.s32.totalorder %s54, %s68
      %p70 = scmp.eq.s32.totalorder %s23, 0
      %p71 = por %p69, %p70
      %s73 = sadd.s32 %s72, 1
      %p76 = scmp.eq.s32.totalorder %s17, 1
      %p77 = scmp.ne.s32.totalorder %s72, %s74
      %p78 = scmp.eq.s32.totalorder %s17, 0
      %p79 = por %p77, %p78
      %p80 = scmp.ne.s32.totalorder %s72, %s74
      %p81 = scmp.eq.s32.totalorder %s22, 1
      %p82 = por %p80, %p81
      %p83 = scmp.ne.s32.totalorder %s74, %s75
      %p84 = scmp.eq.s32.totalorder %s22, 0
      %p85 = por %p83, %p84
      %p86 = scmp.ne.s32.totalorder %s74, %s75
      %p87 = scmp.eq.s32.totalorder %s23, 1
      %p88 = por %p86, %p87
      %p90 = scmp.ne.s32.totalorder %s75, %s89
      %p91 = scmp.eq.s32.totalorder %s23, 0
      %p92 = por %p90, %p91
      %s94 = sadd.s32 %s93, 1
      %p97 = scmp.eq.s32.totalorder %s17, 1
      %p98 = scmp.ne.s32.totalorder %s93, %s95
      %p99 = scmp.eq.s32.totalorder %s17, 0
      %p100 = por %p98, %p99
      %p101 = scmp.ne.s32.totalorder %s93, %s95
      %p102 = scmp.eq.s32.totalorder %s22, 1
      %p103 = por %p101, %p102
      %p104 = scmp.ne.s32.totalorder %s95, %s96
      %p105 = scmp.eq.s32.totalorder %s22, 0
      %p106 = por %p104, %p105
      %p107 = scmp.ne.s32.totalorder %s95, %s96
      %p108 = scmp.eq.s32.totalorder %s23, 1
      %p109 = por %p107, %p108
      %p111 = scmp.ne.s32.totalorder %s96, %s110
      %p112 = scmp.eq.s32.totalorder %s23, 0
      %p113 = por %p111, %p112
      %s115 = sadd.s32 %s114, 1
      %p118 = scmp.eq.s32.totalorder %s17, 1
      %p119 = scmp.ne.s32.totalorder %s114, %s116
      %p120 = scmp.eq.s32.totalorder %s17, 0
      %p121 = por %p119, %p120
      %p122 = scmp.ne.s32.totalorder %s114, %s116
      %p123 = scmp.eq.s32.totalorder %s22, 1
      %p124 = por %p122, %p123
      %p125 = scmp.ne.s32.totalorder %s116, %s117
      %p126 = scmp.eq.s32.totalorder %s22, 0
      %p127 = por %p125, %p126
      %p128 = scmp.ne.s32.totalorder %s116, %s117
      %p129 = scmp.eq.s32.totalorder %s23, 1
      %p130 = por %p128, %p129
      %p132 = scmp.ne.s32.totalorder %s117, %s131
      %p133 = scmp.eq.s32.totalorder %s23, 0
      %p134 = por %p132, %p133
      %s136 = sadd.s32 %s135, 1
      %p139 = scmp.eq.s32.totalorder %s17, 1
      %p140 = scmp.ne.s32.totalorder %s135, %s137
      %p141 = scmp.eq.s32.totalorder %s17, 0
      %p142 = por %p140, %p141
      %p143 = scmp.ne.s32.totalorder %s135, %s137
      %p144 = scmp.eq.s32.totalorder %s22, 1
      %p145 = por %p143, %p144
      %p146 = scmp.ne.s32.totalorder %s137, %s138
      %p147 = scmp.eq.s32.totalorder %s22, 0
      %p148 = por %p146, %p147
      %p149 = scmp.ne.s32.totalorder %s137, %s138
      %p150 = scmp.eq.s32.totalorder %s23, 1
      %p151 = por %p149, %p150
      %p153 = scmp.ne.s32.totalorder %s138, %s152
      %p154 = scmp.eq.s32.totalorder %s23, 0
      %p155 = por %p153, %p154
      %s157 = sadd.s32 %s156, 1
      %p160 = scmp.eq.s32.totalorder %s17, 1
      %p161 = scmp.ne.s32.totalorder %s156, %s158
      %p162 = scmp.eq.s32.totalorder %s17, 0
      %p163 = por %p161, %p162
      %p164 = scmp.ne.s32.totalorder %s156, %s158
      %p165 = scmp.eq.s32.totalorder %s22, 1
      %p166 = por %p164, %p165
      %p167 = scmp.ne.s32.totalorder %s158, %s159
      %p168 = scmp.eq.s32.totalorder %s22, 0
      %p169 = por %p167, %p168
      %p170 = scmp.ne.s32.totalorder %s158, %s159
      %p171 = scmp.eq.s32.totalorder %s23, 1
      %p172 = por %p170, %p171
      %p174 = scmp.ne.s32.totalorder %s159, %s173
      %p175 = scmp.eq.s32.totalorder %s23, 0
      %p176 = por %p174, %p175
      %s178 = sadd.s32 %s177, 1
      %p181 = scmp.eq.s32.totalorder %s17, 1
      %p182 = scmp.ne.s32.totalorder %s177, %s179
      %p183 = scmp.eq.s32.totalorder %s17, 0
      %p184 = por %p182, %p183
      %p185 = scmp.ne.s32.totalorder %s177, %s179
      %p186 = scmp.eq.s32.totalorder %s22, 1
      %p187 = por %p185, %p186
      %p188 = scmp.ne.s32.totalorder %s179, %s180
      %p189 = scmp.eq.s32.totalorder %s22, 0
      %p190 = por %p188, %p189
      %p191 = scmp.ne.s32.totalorder %s179, %s180
      %p192 = scmp.eq.s32.totalorder %s23, 1
      %p193 = por %p191, %p192
      %p195 = scmp.ne.s32.totalorder %s180, %s194
      %p196 = scmp.eq.s32.totalorder %s23, 0
      %p197 = por %p195, %p196
      %s198 = ssub.s32 %s17, %s24
      %p199 = scmp.eq.s32.totalorder %s198, 0
      %s201 = sadd.s32 %s200, 1
      %s202 = scalar_select %p199, %s200, %s201
      %p205 = pneg %p199
      %p206 = scmp.eq.s32.totalorder %s17, 1
      %p207 = por %p205, %p206
      %p208 = scmp.ne.s32.totalorder %s200, %s203
      %p209 = scmp.eq.s32.totalorder %s17, 0
      %p210 = por %p208, %p209
      %p211 = scmp.ne.s32.totalorder %s200, %s203
      %p212 = scmp.eq.s32.totalorder %s22, 1
      %p213 = por %p211, %p212
      %p214 = scmp.ne.s32.totalorder %s203, %s204
      %p215 = scmp.eq.s32.totalorder %s22, 0
      %p216 = por %p214, %p215
      %p217 = scmp.ne.s32.totalorder %s203, %s204
      %p218 = scmp.eq.s32.totalorder %s23, 1
      %p219 = por %p217, %p218
      %p221 = scmp.ne.s32.totalorder %s204, %s220
      %p222 = scmp.eq.s32.totalorder %s23, 0
      %p223 = por %p221, %p222
      %p224 = scmp.le.s32.totalorder 1, %s17
      %p225 = scmp.lt.s32.totalorder %s17, 3
      %p226 = pnand %p224, %p225
      %p227 = pneg %p226
      // Predicated region
      $region9: #{vit_forward.1} parent=5 // pred_check
        _
      $region10: #{vit_forward.1} parent=5 // pred_check_branch
        %229 = sbr.rel (%p226) target = $region12
      $region11: #{vit_forward.1} parent=5 // pred_region
        %s230 = ssub.s32 %s17, 1
        // Predicated region
        $region13: #{vit_forward.1} parent=11 // pred_check
          %p231 = pneg %p64
        $region14: #{vit_forward.1} parent=11 // pred_check_branch
          %233 = sbr.rel (%p231) target = $region16
        $region15: #{vit_forward.1} parent=11 // pred_region
          _
        $region16: #{vit_forward.1} parent=11 // pred_fallthru
          _
        // Predicated region
        $region17: #{vit_forward.1} parent=11 // pred_check
          %p234 = pneg %p85
        $region18: #{vit_forward.1} parent=11 // pred_check_branch
          %236 = sbr.rel (%p234) target = $region20
        $region19: #{vit_forward.1} parent=11 // pred_region
          _
        $region20: #{vit_forward.1} parent=11 // pred_fallthru
          _
        // Predicated region
        $region21: #{vit_forward.1} parent=11 // pred_check
          %p237 = pneg %p106
        $region22: #{vit_forward.1} parent=11 // pred_check_branch
          %239 = sbr.rel (%p237) target = $region24
        $region23: #{vit_forward.1} parent=11 // pred_region
          _
        $region24: #{vit_forward.1} parent=11 // pred_fallthru
          _
        // Predicated region
        $region25: #{vit_forward.1} parent=11 // pred_check
          %p240 = pneg %p127
        $region26: #{vit_forward.1} parent=11 // pred_check_branch
          %242 = sbr.rel (%p240) target = $region28
        $region27: #{vit_forward.1} parent=11 // pred_region
          _
        $region28: #{vit_forward.1} parent=11 // pred_fallthru
          _
        // Predicated region
        $region29: #{vit_forward.1} parent=11 // pred_check
          %p243 = pneg %p148
        $region30: #{vit_forward.1} parent=11 // pred_check_branch
          %245 = sbr.rel (%p243) target = $region32
        $region31: #{vit_forward.1} parent=11 // pred_region
          _
        $region32: #{vit_forward.1} parent=11 // pred_fallthru
          _
        // Predicated region
        $region33: #{vit_forward.1} parent=11 // pred_check
          %p246 = pneg %p169
        $region34: #{vit_forward.1} parent=11 // pred_check_branch
          %248 = sbr.rel (%p246) target = $region36
        $region35: #{vit_forward.1} parent=11 // pred_region
          _
        $region36: #{vit_forward.1} parent=11 // pred_fallthru
          _
        // Predicated region
        $region37: #{vit_forward.1} parent=11 // pred_check
          %p249 = pneg %p190
        $region38: #{vit_forward.1} parent=11 // pred_check_branch
          %251 = sbr.rel (%p249) target = $region40
        $region39: #{vit_forward.1} parent=11 // pred_region
          _
        $region40: #{vit_forward.1} parent=11 // pred_fallthru
          _
      $region12: #{vit_forward.1} parent=5 // pred_fallthru
        _
      %p252 = scmp.lt.s32.totalorder %s17, 2
      // Predicated region
      $region41: #{vit_forward.1} parent=5 // pred_check
        %p253 = pneg %p252
      $region42: #{vit_forward.1} parent=5 // pred_check_branch
        %255 = sbr.rel (%p253) target = $region44
      $region43: #{vit_forward.1} parent=5 // pred_region
        // Predicated region
        $region45: #{vit_forward.1} parent=43 // pred_check
          %p256 = pneg %p37
        $region46: #{vit_forward.1} parent=43 // pred_check_branch
          %258 = sbr.rel (%p256) target = $region48
        $region47: #{vit_forward.1} parent=43 // pred_region
          %p259 = scmp.lt.s32.totalorder %s17, 1
          %s260 = scalar_select %p259, %s17, 1
          %s261 = smul.addr %s260, 4
          %s262 = scalar_lea.vmem %s0, %s261
        $region48: #{vit_forward.1} parent=43 // pred_fallthru
          _
      $region44: #{vit_forward.1} parent=5 // pred_fallthru
        _
      %p263 = scmp.le.s32.totalorder 1, %s17
      %p264 = scmp.lt.s32.totalorder %s17, 3
      %p265 = pnand %p263, %p264
      %p266 = pneg %p265
      // Predicated region
      $region49: #{vit_forward.1} parent=5 // pred_check
        _
      $region50: #{vit_forward.1} parent=5 // pred_check_branch
        %268 = sbr.rel (%p265) target = $region52
      $region51: #{vit_forward.1} parent=5 // pred_region
        %s269 = ssub.s32 %s17, 1
        %p270 = scmp.lt.s32.totalorder %s22, 1
        %s271 = scalar_select %p270, %s22, 1
        %s272 = smul.addr %s271, 4
        %s273 = scalar_lea.vmem %s0, %s272
        %p274 = pneg %p43
        %p275 = pneg %p40
        %p276 = pneg %p64
        %p277 = pneg %p61
        %p278 = pneg %p85
        %p279 = pneg %p82
        %p280 = pneg %p106
        %p281 = pneg %p103
        %p282 = pneg %p127
        %p283 = pneg %p124
        %p284 = pneg %p148
        %p285 = pneg %p145
        %p286 = pneg %p169
        %p287 = pneg %p166
        %p288 = pneg %p190
        %p289 = pneg %p187
        %p290 = pneg %p216
        %p291 = pneg %p213
        %s292 = sand.u32 %s203, 1
        %s293 = scalar_lea.sflag [#allocation3], %s292
        %s294 = sand.u32 %s203, 1
        %s295 = scalar_lea.vmem [#allocation2], %s294
        %p296 = scmp.lt.s32.totalorder %s22, 1
        %s297 = scalar_select %p296, %s22, 1
        %s298 = smul.addr %s297, 4
        %s299 = scalar_lea.vmem %s0, %s298
        %v300 = vld [vmem:[%s2] sm:$0xff]
        %v301 = vld [vmem:[%s2 + $0x8] sm:$0xff]
        %v302 = vld [vmem:[%s2 + $0x10] sm:$0xff]
        %v303 = vld [vmem:[%s2 + $0x18] sm:$0x3]
        %v304 = vld [vmem:[%s299] sm:$0xf]
        %v305 = vld [vmem:[%s1] sm:$0xff]
        %v306 = vld [vmem:[%s1 + $0x8] sm:$0xff]
        %v307 = vld [vmem:[%s1 + $0x10] sm:$0xff]
        %v308 = vld [vmem:[%s1 + $0x18] sm:$0xff]
        %v309 = vld [vmem:[%s1 + $0x20] sm:$0xff]
        %v310 = vld [vmem:[%s1 + $0x28] sm:$0xff]
        %v311 = vld [vmem:[%s1 + $0x30] sm:$0xff]
        %v312 = vld [vmem:[%s1 + $0x38] sm:$0xff]
        %v313 = vlaneseq
        %v314 = vshrl.u32 %v313, 7
        %v315 = vsub.s32 0, %v314
        %v316 = vrot.slane %v300, %v315
        %vm317 = vcmask 523264
        %v319 = vsel %vm317, %v304, 0
        %321 = vmatprep.subr.mxu0 0.0
        %322 = vmatpush1.msra.mxu0 %v305
        %323 = vmatprep.subr.mxu0 0.0
        %324 = vmatpush1.msra.mxu0 %v306
        %325 = vmatprep.subr.mxu0 0.0
        %326 = vmatpush1.msra.mxu0 %v307
        %327 = vmatprep.subr.mxu0 0.0
        %328 = vmatpush1.msra.mxu0 %v308
        %329 = vmatprep.subr.mxu0 0.0
        %330 = vmatpush1.msra.mxu0 %v309
        %331 = vmatprep.subr.mxu0 0.0
        %332 = vmatpush1.msra.mxu0 %v310
        %333 = vmatprep.subr.mxu0 0.0
        %334 = vmatpush1.msra.mxu0 %v311
        %335 = vmatprep.subr.mxu0 0.0
        %336 = vmatpush1.msra.mxu0 %v312
        %337 = vmatprep.subr.mxu0 0.0
        %338 = vmatpush1.msra.mxu0 0.0
        %339 = vmatprep.subr.mxu0 0.0
        %340 = vmatpush1.msra.mxu0 0.0
        %341 = vmatprep.subr.mxu0 0.0
        %342 = vmatpush1.msra.mxu0 0.0
        %343 = vmatprep.subr.mxu0 0.0
        %344 = vmatpush1.msra.mxu0 0.0
        %345 = vmatprep.subr.mxu0 0.0
        %346 = vmatpush1.msra.mxu0 0.0
        %347 = vmatprep.subr.mxu0 0.0
        %348 = vmatpush1.msra.mxu0 0.0
        %349 = vmatprep.subr.mxu0 0.0
        %350 = vmatpush1.msra.mxu0 0.0
        %351 = vmatprep.subr.mxu0 0.0
        %352 = vmatpush1.msra.mxu0 0.0
        %353 = vmatprep.subr.mxu0 0.0
        %354 = vmatpush1.msra.mxu0 0.0
        %355 = vmatprep.subr.mxu0 0.0
        %356 = vmatpush1.msra.mxu0 0.0
        %357 = vmatprep.subr.mxu0 0.0
        %358 = vmatpush1.msra.mxu0 0.0
        %359 = vmatprep.subr.mxu0 0.0
        %360 = vmatpush1.msra.mxu0 0.0
        %361 = vmatprep.subr.mxu0 0.0
        %362 = vmatpush1.msra.mxu0 0.0
        %363 = vmatprep.subr.mxu0 0.0
        %364 = vmatpush1.msra.mxu0 0.0
        %365 = vmatprep.subr.mxu0 0.0
        %366 = vmatpush1.msra.mxu0 0.0
        %367 = vmatprep.subr.mxu0 0.0
        %368 = vmatpush1.msra.mxu0 0.0
        %369 = vmatprep.subr.mxu0 0.0
        %370 = vmatpush1.msra.mxu0 0.0
        %371 = vmatprep.subr.mxu0 0.0
        %372 = vmatpush1.msra.mxu0 0.0
        %373 = vmatprep.subr.mxu0 0.0
        %374 = vmatpush1.msra.mxu0 0.0
        %375 = vmatprep.subr.mxu0 0.0
        %376 = vmatpush1.msra.mxu0 0.0
        %377 = vmatprep.subr.mxu0 0.0
        %378 = vmatpush1.msra.mxu0 0.0
        %379 = vmatprep.subr.mxu0 0.0
        %380 = vmatpush1.msra.mxu0 0.0
        %381 = vmatprep.subr.mxu0 0.0
        %382 = vmatpush1.msra.mxu0 0.0
        %383 = vmatprep.subr.mxu0 0.0
        %384 = vmatpush1.msra.mxu0 0.0
        %385 = vmatprep.mubr.f32.mxu0 0.0
        %386 = vmatmul.mubr.f32.gmra.mrb[0].mxu0 %v319
        %v387 = vpop.f32.mrb[0].mxu0
        %v388 = vadd.f32 %v316, %v387
        %v389 = vpop.f32.mrb[0].mxu0
        %390 = vdwg.mxu0
        %v392 = vrot.slane %v300, 1
        %v395 = vrot.slane %v388, 7
        %vm397 = vcmask 1040384
        %v398 = vsel %vm397, %v392, %v395
        %v399 = vrot.slane %v300, 2
        %v401 = vadd.f32 %v398, %v399
        %v402 = vld [vmem:[%s3] sm:$0xff]
        %v403 = vld [vmem:[%s3 + $0x8] sm:$0xff]
        %v404 = vld [vmem:[%s3 + $0x10] sm:$0xff]
        %v405 = vld [vmem:[%s3 + $0x18] sm:$0xff]
        %v406 = vlaneseq
        %v407 = vshrl.u32 %v406, 7
        %v408 = vsub.s32 7, %v407
        %v409 = vrot.slane %v300, %v408
        %vm410 = vcmask 261120
        %v412 = vsel %vm410, %v401, 0
        %414 = vmatprep.subr.mxu0 0.0
        %415 = vmatpush1.msra.mxu0 %v402
        %416 = vmatprep.subr.mxu0 0.0
        %417 = vmatpush1.msra.mxu0 %v403
        %418 = vmatprep.subr.mxu0 0.0
        %419 = vmatpush1.msra.mxu0 %v404
        %420 = vmatprep.subr.mxu0 0.0
        %421 = vmatpush1.msra.mxu0 %v405
        %422 = vmatprep.subr.mxu0 0.0
        %423 = vmatpush1.msra.mxu0 0.0
        %424 = vmatprep.subr.mxu0 0.0
        %425 = vmatpush1.msra.mxu0 0.0
        %426 = vmatprep.subr.mxu0 0.0
        %427 = vmatpush1.msra.mxu0 0.0
        %428 = vmatprep.subr.mxu0 0.0
        %429 = vmatpush1.msra.mxu0 0.0
        %430 = vmatprep.subr.mxu0 0.0
        %431 = vmatpush1.msra.mxu0 0.0
        %432 = vmatprep.subr.mxu0 0.0
        %433 = vmatpush1.msra.mxu0 0.0
        %434 = vmatprep.subr.mxu0 0.0
        %435 = vmatpush1.msra.mxu0 0.0
        %436 = vmatprep.subr.mxu0 0.0
        %437 = vmatpush1.msra.mxu0 0.0
        %438 = vmatprep.subr.mxu0 0.0
        %439 = vmatpush1.msra.mxu0 0.0
        %440 = vmatprep.subr.mxu0 0.0
        %441 = vmatpush1.msra.mxu0 0.0
        %442 = vmatprep.subr.mxu0 0.0
        %443 = vmatpush1.msra.mxu0 0.0
        %444 = vmatprep.subr.mxu0 0.0
        %445 = vmatpush1.msra.mxu0 0.0
        %446 = vmatprep.subr.mxu0 0.0
        %447 = vmatpush1.msra.mxu0 0.0
        %448 = vmatprep.subr.mxu0 0.0
        %449 = vmatpush1.msra.mxu0 0.0
        %450 = vmatprep.subr.mxu0 0.0
        %451 = vmatpush1.msra.mxu0 0.0
        %452 = vmatprep.subr.mxu0 0.0
        %453 = vmatpush1.msra.mxu0 0.0
        %454 = vmatprep.subr.mxu0 0.0
        %455 = vmatpush1.msra.mxu0 0.0
        %456 = vmatprep.subr.mxu0 0.0
        %457 = vmatpush1.msra.mxu0 0.0
        %458 = vmatprep.subr.mxu0 0.0
        %459 = vmatpush1.msra.mxu0 0.0
        %460 = vmatprep.subr.mxu0 0.0
        %461 = vmatpush1.msra.mxu0 0.0
        %462 = vmatprep.subr.mxu0 0.0
        %463 = vmatpush1.msra.mxu0 0.0
        %464 = vmatprep.subr.mxu0 0.0
        %465 = vmatpush1.msra.mxu0 0.0
        %466 = vmatprep.subr.mxu0 0.0
        %467 = vmatpush1.msra.mxu0 0.0
        %468 = vmatprep.subr.mxu0 0.0
        %469 = vmatpush1.msra.mxu0 0.0
        %470 = vmatprep.subr.mxu0 0.0
        %471 = vmatpush1.msra.mxu0 0.0
        %472 = vmatprep.subr.mxu0 0.0
        %473 = vmatpush1.msra.mxu0 0.0
        %474 = vmatprep.subr.mxu0 0.0
        %475 = vmatpush1.msra.mxu0 0.0
        %476 = vmatprep.subr.mxu0 0.0
        %477 = vmatpush1.msra.mxu0 0.0
        %478 = vmatprep.mubr.f32.mxu0 0.0
        %479 = vmatmul.mubr.f32.gmra.mrb[0].mxu0 %v412
        %v480 = vpop.f32.mrb[0].mxu0
        %v481 = vadd.f32 %v409, %v480
        %v482 = vpop.f32.mrb[0].mxu0
        %483 = vdwg.mxu0
        %485 = vrot.lane.b32.xlu0 %v481, 120
        %v486 = vpop.permute.xlu0 %485
        %487 = vrot.lane.b32.xlu0 %v481, 112
        %v488 = vpop.permute.xlu0 %487
        %489 = vrot.lane.b32.xlu0 %v481, 104
        %v490 = vpop.permute.xlu0 %489
        %491 = vrot.lane.b32.xlu0 %v481, 96
        %v492 = vpop.permute.xlu0 %491
        %vm493 = vcmask 64512
        %v494 = vsel %vm493, %v481, 0
        %v496 = vsel %vm493, %v492, 0
        %498 = vmatprep.subr.mxu0 0.0
        %499 = vmatpush1.xpose.msra.mxu0 %v496
        %500 = vmatprep.subr.mxu0 0.0
        %501 = vmatpush1.xpose.msra.mxu0 0.0
        %502 = vmatprep.subr.mxu0 0.0
        %503 = vmatpush1.xpose.msra.mxu0 0.0
        %504 = vmatprep.subr.mxu0 0.0
        %505 = vmatpush1.xpose.msra.mxu0 0.0
        %506 = vmatprep.subr.mxu0 0.0
        %507 = vmatpush1.xpose.msra.mxu0 0.0
        %508 = vmatprep.subr.mxu0 0.0
        %509 = vmatpush1.xpose.msra.mxu0 0.0
        %510 = vmatprep.subr.mxu0 0.0
        %511 = vmatpush1.xpose.msra.mxu0 0.0
        %512 = vmatprep.subr.mxu0 0.0
        %513 = vmatpush1.xpose.msra.mxu0 0.0
        %514 = vmatprep.subr.mxu0 0.0
        %515 = vmatpush1.xpose.msra.mxu0 0.0
        %516 = vmatprep.subr.mxu0 0.0
        %517 = vmatpush1.xpose.msra.mxu0 0.0
        %518 = vmatprep.subr.mxu0 0.0
        %519 = vmatpush1.xpose.msra.mxu0 0.0
        %520 = vmatprep.subr.mxu0 0.0
        %521 = vmatpush1.xpose.msra.mxu0 0.0
        %522 = vmatprep.subr.mxu0 0.0
        %523 = vmatpush1.xpose.msra.mxu0 0.0
        %524 = vmatprep.subr.mxu0 0.0
        %525 = vmatpush1.xpose.msra.mxu0 0.0
        %526 = vmatprep.subr.mxu0 0.0
        %527 = vmatpush1.xpose.msra.mxu0 0.0
        %528 = vmatprep.subr.mxu0 0.0
        %529 = vmatpush1.xpose.msra.mxu0 0.0
        %530 = vmatprep.subr.mxu0 0.0
        %531 = vmatpush1.xpose.msra.mxu0 0.0
        %532 = vmatprep.subr.mxu0 0.0
        %533 = vmatpush1.xpose.msra.mxu0 0.0
        %534 = vmatprep.subr.mxu0 0.0
        %535 = vmatpush1.xpose.msra.mxu0 0.0
        %536 = vmatprep.subr.mxu0 0.0
        %537 = vmatpush1.xpose.msra.mxu0 0.0
        %538 = vmatprep.subr.mxu0 0.0
        %539 = vmatpush1.xpose.msra.mxu0 0.0
        %540 = vmatprep.subr.mxu0 0.0
        %541 = vmatpush1.xpose.msra.mxu0 0.0
        %542 = vmatprep.subr.mxu0 0.0
        %543 = vmatpush1.xpose.msra.mxu0 0.0
        %544 = vmatprep.subr.mxu0 0.0
        %545 = vmatpush1.xpose.msra.mxu0 0.0
        %546 = vmatprep.subr.mxu0 0.0
        %547 = vmatpush1.xpose.msra.mxu0 0.0
        %548 = vmatprep.subr.mxu0 0.0
        %549 = vmatpush1.xpose.msra.mxu0 0.0
        %550 = vmatprep.subr.mxu0 0.0
        %551 = vmatpush1.xpose.msra.mxu0 0.0
        %552 = vmatprep.subr.mxu0 0.0
        %553 = vmatpush1.xpose.msra.mxu0 0.0
        %554 = vmatprep.subr.mxu0 0.0
        %555 = vmatpush1.xpose.msra.mxu0 0.0
        %556 = vmatprep.subr.mxu0 0.0
        %557 = vmatpush1.xpose.msra.mxu0 0.0
        %558 = vmatprep.subr.mxu0 0.0
        %559 = vmatpush1.xpose.msra.mxu0 0.0
        %560 = vmatprep.subr.mxu0 0.0
        %561 = vmatpush1.xpose.msra.mxu0 0.0
        %562 = vmatprep.mubr.f32.mxu0 0.0
        %563 = vmatmul.mubr.f32.gmra.mrb[0].mxu0 %v494
        %v564 = vpop.f32.mrb[0].mxu0
        %v565 = vadd.f32 0.0, %v564
        %v566 = vpop.f32.mrb[0].mxu0
        %567 = vdwg.mxu0
        %568 = vrot.lane.b32.xlu0 %v486, 96
        %v569 = vpop.permute.xlu0 %568
        %v570 = vsel %vm493, %v486, 0
        %v572 = vsel %vm493, %v569, 0
        %574 = vmatprep.subr.mxu0 0.0
        %575 = vmatpush1.xpose.msra.mxu0 %v572
        %576 = vmatprep.subr.mxu0 0.0
        %577 = vmatpush1.xpose.msra.mxu0 0.0
        %578 = vmatprep.subr.mxu0 0.0
        %579 = vmatpush1.xpose.msra.mxu0 0.0
        %580 = vmatprep.subr.mxu0 0.0
        %581 = vmatpush1.xpose.msra.mxu0 0.0
        %582 = vmatprep.subr.mxu0 0.0
        %583 = vmatpush1.xpose.msra.mxu0 0.0
        %584 = vmatprep.subr.mxu0 0.0
        %585 = vmatpush1.xpose.msra.mxu0 0.0
        %586 = vmatprep.subr.mxu0 0.0
        %587 = vmatpush1.xpose.msra.mxu0 0.0
        %588 = vmatprep.subr.mxu0 0.0
        %589 = vmatpush1.xpose.msra.mxu0 0.0
        %590 = vmatprep.subr.mxu0 0.0
        %591 = vmatpush1.xpose.msra.mxu0 0.0
        %592 = vmatprep.subr.mxu0 0.0
        %593 = vmatpush1.xpose.msra.mxu0 0.0
        %594 = vmatprep.subr.mxu0 0.0
        %595 = vmatpush1.xpose.msra.mxu0 0.0
        %596 = vmatprep.subr.mxu0 0.0
        %597 = vmatpush1.xpose.msra.mxu0 0.0
        %598 = vmatprep.subr.mxu0 0.0
        %599 = vmatpush1.xpose.msra.mxu0 0.0
        %600 = vmatprep.subr.mxu0 0.0
        %601 = vmatpush1.xpose.msra.mxu0 0.0
        %602 = vmatprep.subr.mxu0 0.0
        %603 = vmatpush1.xpose.msra.mxu0 0.0
        %604 = vmatprep.subr.mxu0 0.0
        %605 = vmatpush1.xpose.msra.mxu0 0.0
        %606 = vmatprep.subr.mxu0 0.0
        %607 = vmatpush1.xpose.msra.mxu0 0.0
        %608 = vmatprep.subr.mxu0 0.0
        %609 = vmatpush1.xpose.msra.mxu0 0.0
        %610 = vmatprep.subr.mxu0 0.0
        %611 = vmatpush1.xpose.msra.mxu0 0.0
        %612 = vmatprep.subr.mxu0 0.0
        %613 = vmatpush1.xpose.msra.mxu0 0.0
        %614 = vmatprep.subr.mxu0 0.0
        %615 = vmatpush1.xpose.msra.mxu0 0.0
        %616 = vmatprep.subr.mxu0 0.0
        %617 = vmatpush1.xpose.msra.mxu0 0.0
        %618 = vmatprep.subr.mxu0 0.0
        %619 = vmatpush1.xpose.msra.mxu0 0.0
        %620 = vmatprep.subr.mxu0 0.0
        %621 = vmatpush1.xpose.msra.mxu0 0.0
        %622 = vmatprep.subr.mxu0 0.0
        %623 = vmatpush1.xpose.msra.mxu0 0.0
        %624 = vmatprep.subr.mxu0 0.0
        %625 = vmatpush1.xpose.msra.mxu0 0.0
        %626 = vmatprep.subr.mxu0 0.0
        %627 = vmatpush1.xpose.msra.mxu0 0.0
        %628 = vmatprep.subr.mxu0 0.0
        %629 = vmatpush1.xpose.msra.mxu0 0.0
        %630 = vmatprep.subr.mxu0 0.0
        %631 = vmatpush1.xpose.msra.mxu0 0.0
        %632 = vmatprep.subr.mxu0 0.0
        %633 = vmatpush1.xpose.msra.mxu0 0.0
        %634 = vmatprep.subr.mxu0 0.0
        %635 = vmatpush1.xpose.msra.mxu0 0.0
        %636 = vmatprep.subr.mxu0 0.0
        %637 = vmatpush1.xpose.msra.mxu0 0.0
        %638 = vmatprep.mubr.f32.mxu0 0.0
        %639 = vmatmul.mubr.f32.gmra.mrb[0].mxu0 %v570
        %v640 = vpop.f32.mrb[0].mxu0
        %v641 = vadd.f32 0.0, %v640
        %v642 = vpop.f32.mrb[0].mxu0
        %643 = vdwg.mxu0
        %644 = vrot.lane.b32.xlu0 %v488, 96
        %v645 = vpop.permute.xlu0 %644
        %v646 = vsel %vm493, %v488, 0
        %v648 = vsel %vm493, %v645, 0
        %650 = vmatprep.subr.mxu0 0.0
        %651 = vmatpush1.xpose.msra.mxu0 %v648
        %652 = vmatprep.subr.mxu0 0.0
        %653 = vmatpush1.xpose.msra.mxu0 0.0
        %654 = vmatprep.subr.mxu0 0.0
        %655 = vmatpush1.xpose.msra.mxu0 0.0
        %656 = vmatprep.subr.mxu0 0.0
        %657 = vmatpush1.xpose.msra.mxu0 0.0
        %658 = vmatprep.subr.mxu0 0.0
        %659 = vmatpush1.xpose.msra.mxu0 0.0
        %660 = vmatprep.subr.mxu0 0.0
        %661 = vmatpush1.xpose.msra.mxu0 0.0
        %662 = vmatprep.subr.mxu0 0.0
        %663 = vmatpush1.xpose.msra.mxu0 0.0
        %664 = vmatprep.subr.mxu0 0.0
        %665 = vmatpush1.xpose.msra.mxu0 0.0
        %666 = vmatprep.subr.mxu0 0.0
        %667 = vmatpush1.xpose.msra.mxu0 0.0
        %668 = vmatprep.subr.mxu0 0.0
        %669 = vmatpush1.xpose.msra.mxu0 0.0
        %670 = vmatprep.subr.mxu0 0.0
        %671 = vmatpush1.xpose.msra.mxu0 0.0
        %672 = vmatprep.subr.mxu0 0.0
        %673 = vmatpush1.xpose.msra.mxu0 0.0
        %674 = vmatprep.subr.mxu0 0.0
        %675 = vmatpush1.xpose.msra.mxu0 0.0
        %676 = vmatprep.subr.mxu0 0.0
        %677 = vmatpush1.xpose.msra.mxu0 0.0
        %678 = vmatprep.subr.mxu0 0.0
        %679 = vmatpush1.xpose.msra.mxu0 0.0
        %680 = vmatprep.subr.mxu0 0.0
        %681 = vmatpush1.xpose.msra.mxu0 0.0
        %682 = vmatprep.subr.mxu0 0.0
        %683 = vmatpush1.xpose.msra.mxu0 0.0
        %684 = vmatprep.subr.mxu0 0.0
        %685 = vmatpush1.xpose.msra.mxu0 0.0
        %686 = vmatprep.subr.mxu0 0.0
        %687 = vmatpush1.xpose.msra.mxu0 0.0
        %688 = vmatprep.subr.mxu0 0.0
        %689 = vmatpush1.xpose.msra.mxu0 0.0
        %690 = vmatprep.subr.mxu0 0.0
        %691 = vmatpush1.xpose.msra.mxu0 0.0
        %692 = vmatprep.subr.mxu0 0.0
        %693 = vmatpush1.xpose.msra.mxu0 0.0
        %694 = vmatprep.subr.mxu0 0.0
        %695 = vmatpush1.xpose.msra.mxu0 0.0
        %696 = vmatprep.subr.mxu0 0.0
        %697 = vmatpush1.xpose.msra.mxu0 0.0
        %698 = vmatprep.subr.mxu0 0.0
        %699 = vmatpush1.xpose.msra.mxu0 0.0
        %700 = vmatprep.subr.mxu0 0.0
        %701 = vmatpush1.xpose.msra.mxu0 0.0
        %702 = vmatprep.subr.mxu0 0.0
        %703 = vmatpush1.xpose.msra.mxu0 0.0
        %704 = vmatprep.subr.mxu0 0.0
        %705 = vmatpush1.xpose.msra.mxu0 0.0
        %706 = vmatprep.subr.mxu0 0.0
        %707 = vmatpush1.xpose.msra.mxu0 0.0
        %708 = vmatprep.subr.mxu0 0.0
        %709 = vmatpush1.xpose.msra.mxu0 0.0
        %710 = vmatprep.subr.mxu0 0.0
        %711 = vmatpush1.xpose.msra.mxu0 0.0
        %712 = vmatprep.subr.mxu0 0.0
        %713 = vmatpush1.xpose.msra.mxu0 0.0
        %714 = vmatprep.mubr.f32.mxu0 0.0
        %715 = vmatmul.mubr.f32.gmra.mrb[0].mxu0 %v646
        %v716 = vpop.f32.mrb[0].mxu0
        %v717 = vadd.f32 0.0, %v716
        %v718 = vpop.f32.mrb[0].mxu0
        %719 = vdwg.mxu0
        %720 = vrot.lane.b32.xlu0 %v490, 96
        %v721 = vpop.permute.xlu0 %720
        %v722 = vsel %vm493, %v490, 0
        %v724 = vsel %vm493, %v721, 0
        %726 = vmatprep.subr.mxu0 0.0
        %727 = vmatpush1.xpose.msra.mxu0 %v724
        %728 = vmatprep.subr.mxu0 0.0
        %729 = vmatpush1.xpose.msra.mxu0 0.0
        %730 = vmatprep.subr.mxu0 0.0
        %731 = vmatpush1.xpose.msra.mxu0 0.0
        %732 = vmatprep.subr.mxu0 0.0
        %733 = vmatpush1.xpose.msra.mxu0 0.0
        %734 = vmatprep.subr.mxu0 0.0
        %735 = vmatpush1.xpose.msra.mxu0 0.0
        %736 = vmatprep.subr.mxu0 0.0
        %737 = vmatpush1.xpose.msra.mxu0 0.0
        %738 = vmatprep.subr.mxu0 0.0
        %739 = vmatpush1.xpose.msra.mxu0 0.0
        %740 = vmatprep.subr.mxu0 0.0
        %741 = vmatpush1.xpose.msra.mxu0 0.0
        %742 = vmatprep.subr.mxu0 0.0
        %743 = vmatpush1.xpose.msra.mxu0 0.0
        %744 = vmatprep.subr.mxu0 0.0
        %745 = vmatpush1.xpose.msra.mxu0 0.0
        %746 = vmatprep.subr.mxu0 0.0
        %747 = vmatpush1.xpose.msra.mxu0 0.0
        %748 = vmatprep.subr.mxu0 0.0
        %749 = vmatpush1.xpose.msra.mxu0 0.0
        %750 = vmatprep.subr.mxu0 0.0
        %751 = vmatpush1.xpose.msra.mxu0 0.0
        %752 = vmatprep.subr.mxu0 0.0
        %753 = vmatpush1.xpose.msra.mxu0 0.0
        %754 = vmatprep.subr.mxu0 0.0
        %755 = vmatpush1.xpose.msra.mxu0 0.0
        %756 = vmatprep.subr.mxu0 0.0
        %757 = vmatpush1.xpose.msra.mxu0 0.0
        %758 = vmatprep.subr.mxu0 0.0
        %759 = vmatpush1.xpose.msra.mxu0 0.0
        %760 = vmatprep.subr.mxu0 0.0
        %761 = vmatpush1.xpose.msra.mxu0 0.0
        %762 = vmatprep.subr.mxu0 0.0
        %763 = vmatpush1.xpose.msra.mxu0 0.0
        %764 = vmatprep.subr.mxu0 0.0
        %765 = vmatpush1.xpose.msra.mxu0 0.0
        %766 = vmatprep.subr.mxu0 0.0
        %767 = vmatpush1.xpose.msra.mxu0 0.0
        %768 = vmatprep.subr.mxu0 0.0
        %769 = vmatpush1.xpose.msra.mxu0 0.0
        %770 = vmatprep.subr.mxu0 0.0
        %771 = vmatpush1.xpose.msra.mxu0 0.0
        %772 = vmatprep.subr.mxu0 0.0
        %773 = vmatpush1.xpose.msra.mxu0 0.0
        %774 = vmatprep.subr.mxu0 0.0
        %775 = vmatpush1.xpose.msra.mxu0 0.0
        %776 = vmatprep.subr.mxu0 0.0
        %777 = vmatpush1.xpose.msra.mxu0 0.0
        %778 = vmatprep.subr.mxu0 0.0
        %779 = vmatpush1.xpose.msra.mxu0 0.0
        %780 = vmatprep.subr.mxu0 0.0
        %781 = vmatpush1.xpose.msra.mxu0 0.0
        %782 = vmatprep.subr.mxu0 0.0
        %783 = vmatpush1.xpose.msra.mxu0 0.0
        %784 = vmatprep.subr.mxu0 0.0
        %785 = vmatpush1.xpose.msra.mxu0 0.0
        %786 = vmatprep.subr.mxu0 0.0
        %787 = vmatpush1.xpose.msra.mxu0 0.0
        %788 = vmatprep.subr.mxu0 0.0
        %789 = vmatpush1.xpose.msra.mxu0 0.0
        %790 = vmatprep.mubr.f32.mxu0 0.0
        %791 = vmatmul.mubr.f32.gmra.mrb[0].mxu0 %v722
        %v792 = vpop.f32.mrb[0].mxu0
        %v793 = vadd.f32 0.0, %v792
        %v794 = vpop.f32.mrb[0].mxu0
        %795 = vdwg.mxu0
        %vm796 = vcmask 36864
        %v797 = vsel %vm796, %v565, -inf
        %798 = vmax.xlane.f32.xlu0 %v797
        %v799 = vpop.xlane.xlu0 %798
        %v800 = vsel %vm796, %v641, -inf
        %801 = vmax.xlane.f32.xlu0 %v800
        %v802 = vpop.xlane.xlu0 %801
        %v803 = vsel %vm796, %v717, -inf
        %804 = vmax.xlane.f32.xlu0 %v803
        %v805 = vpop.xlane.xlu0 %804
        %v806 = vsel %vm796, %v793, -inf
        %807 = vmax.xlane.f32.xlu0 %v806
        %v808 = vpop.xlane.xlu0 %807
        %v809 = vsub.f32 %v565, %v799
        %v810 = vsub.f32 %v641, %v802
        %v811 = vsub.f32 %v717, %v805
        %v812 = vsub.f32 %v793, %v808
        %v813 = vmul.f32 %v809, 1.442695
        %v814 = vpow.pop %v813
        %v815 = vmul.f32 %v810, 1.442695
        %v816 = vpow.pop %v815
        %v817 = vmul.f32 %v811, 1.442695
        %v818 = vpow.pop %v817
        %v819 = vmul.f32 %v812, 1.442695
        %v820 = vpow.pop %v819
        %v821 = vsel %vm796, %v814, 0.0
        %822 = vadd.xlane.f32.xlu0 %v821
        %v823 = vpop.xlane.xlu0 %822
        %v824 = vsel %vm796, %v816, 0.0
        %825 = vadd.xlane.f32.xlu0 %v824
        %v826 = vpop.xlane.xlu0 %825
        %v827 = vsel %vm796, %v818, 0.0
        %828 = vadd.xlane.f32.xlu0 %v827
        %v829 = vpop.xlane.xlu0 %828
        %v830 = vsel %vm796, %v820, 0.0
        %831 = vadd.xlane.f32.xlu0 %v830
        %v832 = vpop.xlane.xlu0 %831
        %v833 = vrcp.pop %v823
        %v834 = vrcp.pop %v826
        %v835 = vrcp.pop %v829
        %v836 = vrcp.pop %v832
        %v837 = vmul.f32 %v814, %v833
        %v838 = vmul.f32 %v816, %v834
        %v839 = vmul.f32 %v818, %v835
        %v840 = vmul.f32 %v820, %v836
        %841 = vrot.lane.b32.xlu0 %v481, 64
        %v842 = vpop.permute.xlu0 %841
        %vm843 = vcmask 39936
        %v845 = vsel %vm843, %v837, 0
        %vm847 = vcmask 1044480
        %v848 = vsel %vm847, %v842, 0
        %850 = vmatprep.subr.mxu0 0.0
        %851 = vmatpush1.msra.mxu0 %v848
        %852 = vmatprep.subr.mxu0 0.0
        %853 = vmatpush1.msra.mxu0 0.0
        %854 = vmatprep.subr.mxu0 0.0
        %855 = vmatpush1.msra.mxu0 0.0
        %856 = vmatprep.subr.mxu0 0.0
        %857 = vmatpush1.msra.mxu0 0.0
        %858 = vmatprep.subr.mxu0 0.0
        %859 = vmatpush1.msra.mxu0 0.0
        %860 = vmatprep.subr.mxu0 0.0
        %861 = vmatpush1.msra.mxu0 0.0
        %862 = vmatprep.subr.mxu0 0.0
        %863 = vmatpush1.msra.mxu0 0.0
        %864 = vmatprep.subr.mxu0 0.0
        %865 = vmatpush1.msra.mxu0 0.0
        %866 = vmatprep.subr.mxu0 0.0
        %867 = vmatpush1.msra.mxu0 0.0
        %868 = vmatprep.subr.mxu0 0.0
        %869 = vmatpush1.msra.mxu0 0.0
        %870 = vmatprep.subr.mxu0 0.0
        %871 = vmatpush1.msra.mxu0 0.0
        %872 = vmatprep.subr.mxu0 0.0
        %873 = vmatpush1.msra.mxu0 0.0
        %874 = vmatprep.subr.mxu0 0.0
        %875 = vmatpush1.msra.mxu0 0.0
        %876 = vmatprep.subr.mxu0 0.0
        %877 = vmatpush1.msra.mxu0 0.0
        %878 = vmatprep.subr.mxu0 0.0
        %879 = vmatpush1.msra.mxu0 0.0
        %880 = vmatprep.subr.mxu0 0.0
        %881 = vmatpush1.msra.mxu0 0.0
        %882 = vmatprep.subr.mxu0 0.0
        %883 = vmatpush1.msra.mxu0 0.0
        %884 = vmatprep.subr.mxu0 0.0
        %885 = vmatpush1.msra.mxu0 0.0
        %886 = vmatprep.subr.mxu0 0.0
        %887 = vmatpush1.msra.mxu0 0.0
        %888 = vmatprep.subr.mxu0 0.0
        %889 = vmatpush1.msra.mxu0 0.0
        %890 = vmatprep.subr.mxu0 0.0
        %891 = vmatpush1.msra.mxu0 0.0
        %892 = vmatprep.subr.mxu0 0.0
        %893 = vmatpush1.msra.mxu0 0.0
        %894 = vmatprep.subr.mxu0 0.0
        %895 = vmatpush1.msra.mxu0 0.0
        %896 = vmatprep.subr.mxu0 0.0
        %897 = vmatpush1.msra.mxu0 0.0
        %898 = vmatprep.subr.mxu0 0.0
        %899 = vmatpush1.msra.mxu0 0.0
        %900 = vmatprep.subr.mxu0 0.0
        %901 = vmatpush1.msra.mxu0 0.0
        %902 = vmatprep.subr.mxu0 0.0
        %903 = vmatpush1.msra.mxu0 0.0
        %904 = vmatprep.subr.mxu0 0.0
        %905 = vmatpush1.msra.mxu0 0.0
        %906 = vmatprep.subr.mxu0 0.0
        %907 = vmatpush1.msra.mxu0 0.0
        %908 = vmatprep.subr.mxu0 0.0
        %909 = vmatpush1.msra.mxu0 0.0
        %910 = vmatprep.subr.mxu0 0.0
        %911 = vmatpush1.msra.mxu0 0.0
        %912 = vmatprep.subr.mxu0 0.0
        %913 = vmatpush1.msra.mxu0 0.0
        %914 = vmatprep.mubr.f32.mxu0 0.0
        %915 = vmatmul.mubr.f32.gmra.mrb[0].mxu0 %v845
        %v916 = vpop.f32.mrb[0].mxu0
        %v917 = vadd.f32 0.0, %v916
        %v918 = vpop.f32.mrb[0].mxu0
        %919 = vdwg.mxu0
        %920 = vrot.lane.b32.xlu0 %v486, 64
        %v921 = vpop.permute.xlu0 %920
        %v923 = vsel %vm843, %v838, 0
        %v925 = vsel %vm847, %v921, 0
        %927 = vmatprep.subr.mxu0 0.0
        %928 = vmatpush1.msra.mxu0 %v925
        %929 = vmatprep.subr.mxu0 0.0
        %930 = vmatpush1.msra.mxu0 0.0
        %931 = vmatprep.subr.mxu0 0.0
        %932 = vmatpush1.msra.mxu0 0.0
        %933 = vmatprep.subr.mxu0 0.0
        %934 = vmatpush1.msra.mxu0 0.0
        %935 = vmatprep.subr.mxu0 0.0
        %936 = vmatpush1.msra.mxu0 0.0
        %937 = vmatprep.subr.mxu0 0.0
        %938 = vmatpush1.msra.mxu0 0.0
        %939 = vmatprep.subr.mxu0 0.0
        %940 = vmatpush1.msra.mxu0 0.0
        %941 = vmatprep.subr.mxu0 0.0
        %942 = vmatpush1.msra.mxu0 0.0
        %943 = vmatprep.subr.mxu0 0.0
        %944 = vmatpush1.msra.mxu0 0.0
        %945 = vmatprep.subr.mxu0 0.0
        %946 = vmatpush1.msra.mxu0 0.0
        %947 = vmatprep.subr.mxu0 0.0
        %948 = vmatpush1.msra.mxu0 0.0
        %949 = vmatprep.subr.mxu0 0.0
        %950 = vmatpush1.msra.mxu0 0.0
        %951 = vmatprep.subr.mxu0 0.0
        %952 = vmatpush1.msra.mxu0 0.0
        %953 = vmatprep.subr.mxu0 0.0
        %954 = vmatpush1.msra.mxu0 0.0
        %955 = vmatprep.subr.mxu0 0.0
        %956 = vmatpush1.msra.mxu0 0.0
        %957 = vmatprep.subr.mxu0 0.0
        %958 = vmatpush1.msra.mxu0 0.0
        %959 = vmatprep.subr.mxu0 0.0
        %960 = vmatpush1.msra.mxu0 0.0
        %961 = vmatprep.subr.mxu0 0.0
        %962 = vmatpush1.msra.mxu0 0.0
        %963 = vmatprep.subr.mxu0 0.0
        %964 = vmatpush1.msra.mxu0 0.0
        %965 = vmatprep.subr.mxu0 0.0
        %966 = vmatpush1.msra.mxu0 0.0
        %967 = vmatprep.subr.mxu0 0.0
        %968 = vmatpush1.msra.mxu0 0.0
        %969 = vmatprep.subr.mxu0 0.0
        %970 = vmatpush1.msra.mxu0 0.0
        %971 = vmatprep.subr.mxu0 0.0
        %972 = vmatpush1.msra.mxu0 0.0
        %973 = vmatprep.subr.mxu0 0.0
        %974 = vmatpush1.msra.mxu0 0.0
        %975 = vmatprep.subr.mxu0 0.0
        %976 = vmatpush1.msra.mxu0 0.0
        %977 = vmatprep.subr.mxu0 0.0
        %978 = vmatpush1.msra.mxu0 0.0
        %979 = vmatprep.subr.mxu0 0.0
        %980 = vmatpush1.msra.mxu0 0.0
        %981 = vmatprep.subr.mxu0 0.0
        %982 = vmatpush1.msra.mxu0 0.0
        %983 = vmatprep.subr.mxu0 0.0
        %984 = vmatpush1.msra.mxu0 0.0
        %985 = vmatprep.subr.mxu0 0.0
        %986 = vmatpush1.msra.mxu0 0.0
        %987 = vmatprep.subr.mxu0 0.0
        %988 = vmatpush1.msra.mxu0 0.0
        %989 = vmatprep.subr.mxu0 0.0
        %990 = vmatpush1.msra.mxu0 0.0
        %991 = vmatprep.mubr.f32.mxu0 0.0
        %992 = vmatmul.mubr.f32.gmra.mrb[0].mxu0 %v923
        %v993 = vpop.f32.mrb[0].mxu0
        %v994 = vadd.f32 0.0, %v993
        %v995 = vpop.f32.mrb[0].mxu0
        %996 = vdwg.mxu0
        %997 = vrot.lane.b32.xlu0 %v488, 64
        %v998 = vpop.permute.xlu0 %997
        %v1000 = vsel %vm843, %v839, 0
        %v1002 = vsel %vm847, %v998, 0
        %1004 = vmatprep.subr.mxu0 0.0
        %1005 = vmatpush1.msra.mxu0 %v1002
        %1006 = vmatprep.subr.mxu0 0.0
        %1007 = vmatpush1.msra.mxu0 0.0
        %1008 = vmatprep.subr.mxu0 0.0
        %1009 = vmatpush1.msra.mxu0 0.0
        %1010 = vmatprep.subr.mxu0 0.0
        %1011 = vmatpush1.msra.mxu0 0.0
        %1012 = vmatprep.subr.mxu0 0.0
        %1013 = vmatpush1.msra.mxu0 0.0
        %1014 = vmatprep.subr.mxu0 0.0
        %1015 = vmatpush1.msra.mxu0 0.0
        %1016 = vmatprep.subr.mxu0 0.0
        %1017 = vmatpush1.msra.mxu0 0.0
        %1018 = vmatprep.subr.mxu0 0.0
        %1019 = vmatpush1.msra.mxu0 0.0
        %1020 = vmatprep.subr.mxu0 0.0
        %1021 = vmatpush1.msra.mxu0 0.0
        %1022 = vmatprep.subr.mxu0 0.0
        %1023 = vmatpush1.msra.mxu0 0.0
        %1024 = vmatprep.subr.mxu0 0.0
        %1025 = vmatpush1.msra.mxu0 0.0
        %1026 = vmatprep.subr.mxu0 0.0
        %1027 = vmatpush1.msra.mxu0 0.0
        %1028 = vmatprep.subr.mxu0 0.0
        %1029 = vmatpush1.msra.mxu0 0.0
        %1030 = vmatprep.subr.mxu0 0.0
        %1031 = vmatpush1.msra.mxu0 0.0
        %1032 = vmatprep.subr.mxu0 0.0
        %1033 = vmatpush1.msra.mxu0 0.0
        %1034 = vmatprep.subr.mxu0 0.0
        %1035 = vmatpush1.msra.mxu0 0.0
        %1036 = vmatprep.subr.mxu0 0.0
        %1037 = vmatpush1.msra.mxu0 0.0
        %1038 = vmatprep.subr.mxu0 0.0
        %1039 = vmatpush1.msra.mxu0 0.0
        %1040 = vmatprep.subr.mxu0 0.0
        %1041 = vmatpush1.msra.mxu0 0.0
        %1042 = vmatprep.subr.mxu0 0.0
        %1043 = vmatpush1.msra.mxu0 0.0
        %1044 = vmatprep.subr.mxu0 0.0
        %1045 = vmatpush1.msra.mxu0 0.0
        %1046 = vmatprep.subr.mxu0 0.0
        %1047 = vmatpush1.msra.mxu0 0.0
        %1048 = vmatprep.subr.mxu0 0.0
        %1049 = vmatpush1.msra.mxu0 0.0
        %1050 = vmatprep.subr.mxu0 0.0
        %1051 = vmatpush1.msra.mxu0 0.0
        %1052 = vmatprep.subr.mxu0 0.0
        %1053 = vmatpush1.msra.mxu0 0.0
        %1054 = vmatprep.subr.mxu0 0.0
        %1055 = vmatpush1.msra.mxu0 0.0
        %1056 = vmatprep.subr.mxu0 0.0
        %1057 = vmatpush1.msra.mxu0 0.0
        %1058 = vmatprep.subr.mxu0 0.0
        %1059 = vmatpush1.msra.mxu0 0.0
        %1060 = vmatprep.subr.mxu0 0.0
        %1061 = vmatpush1.msra.mxu0 0.0
        %1062 = vmatprep.subr.mxu0 0.0
        %1063 = vmatpush1.msra.mxu0 0.0
        %1064 = vmatprep.subr.mxu0 0.0
        %1065 = vmatpush1.msra.mxu0 0.0
        %1066 = vmatprep.subr.mxu0 0.0
        %1067 = vmatpush1.msra.mxu0 0.0
        %1068 = vmatprep.mubr.f32.mxu0 0.0
        %1069 = vmatmul.mubr.f32.gmra.mrb[0].mxu0 %v1000
        %v1070 = vpop.f32.mrb[0].mxu0
        %v1071 = vadd.f32 0.0, %v1070
        %v1072 = vpop.f32.mrb[0].mxu0
        %1073 = vdwg.mxu0
        %1074 = vrot.lane.b32.xlu0 %v490, 64
        %v1075 = vpop.permute.xlu0 %1074
        %v1077 = vsel %vm843, %v840, 0
        %v1079 = vsel %vm847, %v1075, 0
        %1081 = vmatprep.subr.mxu0 0.0
        %1082 = vmatpush1.msra.mxu0 %v1079
        %1083 = vmatprep.subr.mxu0 0.0
        %1084 = vmatpush1.msra.mxu0 0.0
        %1085 = vmatprep.subr.mxu0 0.0
        %1086 = vmatpush1.msra.mxu0 0.0
        %1087 = vmatprep.subr.mxu0 0.0
        %1088 = vmatpush1.msra.mxu0 0.0
        %1089 = vmatprep.subr.mxu0 0.0
        %1090 = vmatpush1.msra.mxu0 0.0
        %1091 = vmatprep.subr.mxu0 0.0
        %1092 = vmatpush1.msra.mxu0 0.0
        %1093 = vmatprep.subr.mxu0 0.0
        %1094 = vmatpush1.msra.mxu0 0.0
        %1095 = vmatprep.subr.mxu0 0.0
        %1096 = vmatpush1.msra.mxu0 0.0
        %1097 = vmatprep.subr.mxu0 0.0
        %1098 = vmatpush1.msra.mxu0 0.0
        %1099 = vmatprep.subr.mxu0 0.0
        %1100 = vmatpush1.msra.mxu0 0.0
        %1101 = vmatprep.subr.mxu0 0.0
        %1102 = vmatpush1.msra.mxu0 0.0
        %1103 = vmatprep.subr.mxu0 0.0
        %1104 = vmatpush1.msra.mxu0 0.0
        %1105 = vmatprep.subr.mxu0 0.0
        %1106 = vmatpush1.msra.mxu0 0.0
        %1107 = vmatprep.subr.mxu0 0.0
        %1108 = vmatpush1.msra.mxu0 0.0
        %1109 = vmatprep.subr.mxu0 0.0
        %1110 = vmatpush1.msra.mxu0 0.0
        %1111 = vmatprep.subr.mxu0 0.0
        %1112 = vmatpush1.msra.mxu0 0.0
        %1113 = vmatprep.subr.mxu0 0.0
        %1114 = vmatpush1.msra.mxu0 0.0
        %1115 = vmatprep.subr.mxu0 0.0
        %1116 = vmatpush1.msra.mxu0 0.0
        %1117 = vmatprep.subr.mxu0 0.0
        %1118 = vmatpush1.msra.mxu0 0.0
        %1119 = vmatprep.subr.mxu0 0.0
        %1120 = vmatpush1.msra.mxu0 0.0
        %1121 = vmatprep.subr.mxu0 0.0
        %1122 = vmatpush1.msra.mxu0 0.0
        %1123 = vmatprep.subr.mxu0 0.0
        %1124 = vmatpush1.msra.mxu0 0.0
        %1125 = vmatprep.subr.mxu0 0.0
        %1126 = vmatpush1.msra.mxu0 0.0
        %1127 = vmatprep.subr.mxu0 0.0
        %1128 = vmatpush1.msra.mxu0 0.0
        %1129 = vmatprep.subr.mxu0 0.0
        %1130 = vmatpush1.msra.mxu0 0.0
        %1131 = vmatprep.subr.mxu0 0.0
        %1132 = vmatpush1.msra.mxu0 0.0
        %1133 = vmatprep.subr.mxu0 0.0
        %1134 = vmatpush1.msra.mxu0 0.0
        %1135 = vmatprep.subr.mxu0 0.0
        %1136 = vmatpush1.msra.mxu0 0.0
        %1137 = vmatprep.subr.mxu0 0.0
        %1138 = vmatpush1.msra.mxu0 0.0
        %1139 = vmatprep.subr.mxu0 0.0
        %1140 = vmatpush1.msra.mxu0 0.0
        %1141 = vmatprep.subr.mxu0 0.0
        %1142 = vmatpush1.msra.mxu0 0.0
        %1143 = vmatprep.subr.mxu0 0.0
        %1144 = vmatpush1.msra.mxu0 0.0
        %1145 = vmatprep.mubr.f32.mxu0 0.0
        %1146 = vmatmul.mubr.f32.gmra.mrb[0].mxu0 %v1077
        %v1147 = vpop.f32.mrb[0].mxu0
        %v1148 = vadd.f32 0.0, %v1147
        %v1149 = vpop.f32.mrb[0].mxu0
        %1150 = vdwg.mxu0
        %v1151 = vld [vmem:[%s4] sm:$0xff]
        %v1152 = vld [vmem:[%s4 + $0x8] sm:$0xff]
        %v1153 = vld [vmem:[%s4 + $0x10] sm:$0xff]
        %v1154 = vld [vmem:[%s4 + $0x18] sm:$0xff]
        %v1156 = vsel %vm493, %v917, 0
        %1158 = vmatprep.subr.mxu0 0.0
        %1159 = vmatpush1.msra.mxu0 %v1151
        %1160 = vmatprep.subr.mxu0 0.0
        %1161 = vmatpush1.msra.mxu0 0.0
        %1162 = vmatprep.subr.mxu0 0.0
        %1163 = vmatpush1.msra.mxu0 0.0
        %1164 = vmatprep.subr.mxu0 0.0
        %1165 = vmatpush1.msra.mxu0 0.0
        %1166 = vmatprep.subr.mxu0 0.0
        %1167 = vmatpush1.msra.mxu0 0.0
        %1168 = vmatprep.subr.mxu0 0.0
        %1169 = vmatpush1.msra.mxu0 0.0
        %1170 = vmatprep.subr.mxu0 0.0
        %1171 = vmatpush1.msra.mxu0 0.0
        %1172 = vmatprep.subr.mxu0 0.0
        %1173 = vmatpush1.msra.mxu0 0.0
        %1174 = vmatprep.subr.mxu0 0.0
        %1175 = vmatpush1.msra.mxu0 0.0
        %1176 = vmatprep.subr.mxu0 0.0
        %1177 = vmatpush1.msra.mxu0 0.0
        %1178 = vmatprep.subr.mxu0 0.0
        %1179 = vmatpush1.msra.mxu0 0.0
        %1180 = vmatprep.subr.mxu0 0.0
        %1181 = vmatpush1.msra.mxu0 0.0
        %1182 = vmatprep.subr.mxu0 0.0
        %1183 = vmatpush1.msra.mxu0 0.0
        %1184 = vmatprep.subr.mxu0 0.0
        %1185 = vmatpush1.msra.mxu0 0.0
        %1186 = vmatprep.subr.mxu0 0.0
        %1187 = vmatpush1.msra.mxu0 0.0
        %1188 = vmatprep.subr.mxu0 0.0
        %1189 = vmatpush1.msra.mxu0 0.0
        %1190 = vmatprep.subr.mxu0 0.0
        %1191 = vmatpush1.msra.mxu0 0.0
        %1192 = vmatprep.subr.mxu0 0.0
        %1193 = vmatpush1.msra.mxu0 0.0
        %1194 = vmatprep.subr.mxu0 0.0
        %1195 = vmatpush1.msra.mxu0 0.0
        %1196 = vmatprep.subr.mxu0 0.0
        %1197 = vmatpush1.msra.mxu0 0.0
        %1198 = vmatprep.subr.mxu0 0.0
        %1199 = vmatpush1.msra.mxu0 0.0
        %1200 = vmatprep.subr.mxu0 0.0
        %1201 = vmatpush1.msra.mxu0 0.0
        %1202 = vmatprep.subr.mxu0 0.0
        %1203 = vmatpush1.msra.mxu0 0.0
        %1204 = vmatprep.subr.mxu0 0.0
        %1205 = vmatpush1.msra.mxu0 0.0
        %1206 = vmatprep.subr.mxu0 0.0
        %1207 = vmatpush1.msra.mxu0 0.0
        %1208 = vmatprep.subr.mxu0 0.0
        %1209 = vmatpush1.msra.mxu0 0.0
        %1210 = vmatprep.subr.mxu0 0.0
        %1211 = vmatpush1.msra.mxu0 0.0
        %1212 = vmatprep.subr.mxu0 0.0
        %1213 = vmatpush1.msra.mxu0 0.0
        %1214 = vmatprep.subr.mxu0 0.0
        %1215 = vmatpush1.msra.mxu0 0.0
        %1216 = vmatprep.subr.mxu0 0.0
        %1217 = vmatpush1.msra.mxu0 0.0
        %1218 = vmatprep.subr.mxu0 0.0
        %1219 = vmatpush1.msra.mxu0 0.0
        %1220 = vmatprep.subr.mxu0 0.0
        %1221 = vmatpush1.msra.mxu0 0.0
        %1222 = vmatprep.mubr.f32.mxu0 0.0
        %1223 = vmatmul.mubr.f32.gmra.mrb[0].mxu0 %v1156
        %v1224 = vpop.f32.mrb[0].mxu0
        %v1225 = vadd.f32 0.0, %v1224
        %v1226 = vpop.f32.mrb[0].mxu0
        %1227 = vdwg.mxu0
        %v1229 = vsel %vm493, %v994, 0
        %1231 = vmatprep.subr.mxu0 0.0
        %1232 = vmatpush1.msra.mxu0 %v1152
        %1233 = vmatprep.subr.mxu0 0.0
        %1234 = vmatpush1.msra.mxu0 0.0
        %1235 = vmatprep.subr.mxu0 0.0
        %1236 = vmatpush1.msra.mxu0 0.0
        %1237 = vmatprep.subr.mxu0 0.0
        %1238 = vmatpush1.msra.mxu0 0.0
        %1239 = vmatprep.subr.mxu0 0.0
        %1240 = vmatpush1.msra.mxu0 0.0
        %1241 = vmatprep.subr.mxu0 0.0
        %1242 = vmatpush1.msra.mxu0 0.0
        %1243 = vmatprep.subr.mxu0 0.0
        %1244 = vmatpush1.msra.mxu0 0.0
        %1245 = vmatprep.subr.mxu0 0.0
        %1246 = vmatpush1.msra.mxu0 0.0
        %1247 = vmatprep.subr.mxu0 0.0
        %1248 = vmatpush1.msra.mxu0 0.0
        %1249 = vmatprep.subr.mxu0 0.0
        %1250 = vmatpush1.msra.mxu0 0.0
        %1251 = vmatprep.subr.mxu0 0.0
        %1252 = vmatpush1.msra.mxu0 0.0
        %1253 = vmatprep.subr.mxu0 0.0
        %1254 = vmatpush1.msra.mxu0 0.0
        %1255 = vmatprep.subr.mxu0 0.0
        %1256 = vmatpush1.msra.mxu0 0.0
        %1257 = vmatprep.subr.mxu0 0.0
        %1258 = vmatpush1.msra.mxu0 0.0
        %1259 = vmatprep.subr.mxu0 0.0
        %1260 = vmatpush1.msra.mxu0 0.0
        %1261 = vmatprep.subr.mxu0 0.0
        %1262 = vmatpush1.msra.mxu0 0.0
        %1263 = vmatprep.subr.mxu0 0.0
        %1264 = vmatpush1.msra.mxu0 0.0
        %1265 = vmatprep.subr.mxu0 0.0
        %1266 = vmatpush1.msra.mxu0 0.0
        %1267 = vmatprep.subr.mxu0 0.0
        %1268 = vmatpush1.msra.mxu0 0.0
        %1269 = vmatprep.subr.mxu0 0.0
        %1270 = vmatpush1.msra.mxu0 0.0
        %1271 = vmatprep.subr.mxu0 0.0
        %1272 = vmatpush1.msra.mxu0 0.0
        %1273 = vmatprep.subr.mxu0 0.0
        %1274 = vmatpush1.msra.mxu0 0.0
        %1275 = vmatprep.subr.mxu0 0.0
        %1276 = vmatpush1.msra.mxu0 0.0
        %1277 = vmatprep.subr.mxu0 0.0
        %1278 = vmatpush1.msra.mxu0 0.0
        %1279 = vmatprep.subr.mxu0 0.0
        %1280 = vmatpush1.msra.mxu0 0.0
        %1281 = vmatprep.subr.mxu0 0.0
        %1282 = vmatpush1.msra.mxu0 0.0
        %1283 = vmatprep.subr.mxu0 0.0
        %1284 = vmatpush1.msra.mxu0 0.0
        %1285 = vmatprep.subr.mxu0 0.0
        %1286 = vmatpush1.msra.mxu0 0.0
        %1287 = vmatprep.subr.mxu0 0.0
        %1288 = vmatpush1.msra.mxu0 0.0
        %1289 = vmatprep.subr.mxu0 0.0
        %1290 = vmatpush1.msra.mxu0 0.0
        %1291 = vmatprep.subr.mxu0 0.0
        %1292 = vmatpush1.msra.mxu0 0.0
        %1293 = vmatprep.subr.mxu0 0.0
        %1294 = vmatpush1.msra.mxu0 0.0
        %1295 = vmatprep.mubr.f32.mxu0 0.0
        %1296 = vmatmul.mubr.f32.gmra.mrb[0].mxu0 %v1229
        %v1297 = vpop.f32.mrb[0].mxu0
        %v1298 = vadd.f32 0.0, %v1297
        %v1299 = vpop.f32.mrb[0].mxu0
        %1300 = vdwg.mxu0
        %v1302 = vsel %vm493, %v1071, 0
        %1304 = vmatprep.subr.mxu0 0.0
        %1305 = vmatpush1.msra.mxu0 %v1153
        %1306 = vmatprep.subr.mxu0 0.0
        %1307 = vmatpush1.msra.mxu0 0.0
        %1308 = vmatprep.subr.mxu0 0.0
        %1309 = vmatpush1.msra.mxu0 0.0
        %1310 = vmatprep.subr.mxu0 0.0
        %1311 = vmatpush1.msra.mxu0 0.0
        %1312 = vmatprep.subr.mxu0 0.0
        %1313 = vmatpush1.msra.mxu0 0.0
        %1314 = vmatprep.subr.mxu0 0.0
        %1315 = vmatpush1.msra.mxu0 0.0
        %1316 = vmatprep.subr.mxu0 0.0
        %1317 = vmatpush1.msra.mxu0 0.0
        %1318 = vmatprep.subr.mxu0 0.0
        %1319 = vmatpush1.msra.mxu0 0.0
        %1320 = vmatprep.subr.mxu0 0.0
        %1321 = vmatpush1.msra.mxu0 0.0
        %1322 = vmatprep.subr.mxu0 0.0
        %1323 = vmatpush1.msra.mxu0 0.0
        %1324 = vmatprep.subr.mxu0 0.0
        %1325 = vmatpush1.msra.mxu0 0.0
        %1326 = vmatprep.subr.mxu0 0.0
        %1327 = vmatpush1.msra.mxu0 0.0
        %1328 = vmatprep.subr.mxu0 0.0
        %1329 = vmatpush1.msra.mxu0 0.0
        %1330 = vmatprep.subr.mxu0 0.0
        %1331 = vmatpush1.msra.mxu0 0.0
        %1332 = vmatprep.subr.mxu0 0.0
        %1333 = vmatpush1.msra.mxu0 0.0
        %1334 = vmatprep.subr.mxu0 0.0
        %1335 = vmatpush1.msra.mxu0 0.0
        %1336 = vmatprep.subr.mxu0 0.0
        %1337 = vmatpush1.msra.mxu0 0.0
        %1338 = vmatprep.subr.mxu0 0.0
        %1339 = vmatpush1.msra.mxu0 0.0
        %1340 = vmatprep.subr.mxu0 0.0
        %1341 = vmatpush1.msra.mxu0 0.0
        %1342 = vmatprep.subr.mxu0 0.0
        %1343 = vmatpush1.msra.mxu0 0.0
        %1344 = vmatprep.subr.mxu0 0.0
        %1345 = vmatpush1.msra.mxu0 0.0
        %1346 = vmatprep.subr.mxu0 0.0
        %1347 = vmatpush1.msra.mxu0 0.0
        %1348 = vmatprep.subr.mxu0 0.0
        %1349 = vmatpush1.msra.mxu0 0.0
        %1350 = vmatprep.subr.mxu0 0.0
        %1351 = vmatpush1.msra.mxu0 0.0
        %1352 = vmatprep.subr.mxu0 0.0
        %1353 = vmatpush1.msra.mxu0 0.0
        %1354 = vmatprep.subr.mxu0 0.0
        %1355 = vmatpush1.msra.mxu0 0.0
        %1356 = vmatprep.subr.mxu0 0.0
        %1357 = vmatpush1.msra.mxu0 0.0
        %1358 = vmatprep.subr.mxu0 0.0
        %1359 = vmatpush1.msra.mxu0 0.0
        %1360 = vmatprep.subr.mxu0 0.0
        %1361 = vmatpush1.msra.mxu0 0.0
        %1362 = vmatprep.subr.mxu0 0.0
        %1363 = vmatpush1.msra.mxu0 0.0
        %1364 = vmatprep.subr.mxu0 0.0
        %1365 = vmatpush1.msra.mxu0 0.0
        %1366 = vmatprep.subr.mxu0 0.0
        %1367 = vmatpush1.msra.mxu0 0.0
        %1368 = vmatprep.mubr.f32.mxu0 0.0
        %1369 = vmatmul.mubr.f32.gmra.mrb[0].mxu0 %v1302
        %v1370 = vpop.f32.mrb[0].mxu0
        %v1371 = vadd.f32 0.0, %v1370
        %v1372 = vpop.f32.mrb[0].mxu0
        %1373 = vdwg.mxu0
        %v1375 = vsel %vm493, %v1148, 0
        %1377 = vmatprep.subr.mxu0 0.0
        %1378 = vmatpush1.msra.mxu0 %v1154
        %1379 = vmatprep.subr.mxu0 0.0
        %1380 = vmatpush1.msra.mxu0 0.0
        %1381 = vmatprep.subr.mxu0 0.0
        %1382 = vmatpush1.msra.mxu0 0.0
        %1383 = vmatprep.subr.mxu0 0.0
        %1384 = vmatpush1.msra.mxu0 0.0
        %1385 = vmatprep.subr.mxu0 0.0
        %1386 = vmatpush1.msra.mxu0 0.0
        %1387 = vmatprep.subr.mxu0 0.0
        %1388 = vmatpush1.msra.mxu0 0.0
        %1389 = vmatprep.subr.mxu0 0.0
        %1390 = vmatpush1.msra.mxu0 0.0
        %1391 = vmatprep.subr.mxu0 0.0
        %1392 = vmatpush1.msra.mxu0 0.0
        %1393 = vmatprep.subr.mxu0 0.0
        %1394 = vmatpush1.msra.mxu0 0.0
        %1395 = vmatprep.subr.mxu0 0.0
        %1396 = vmatpush1.msra.mxu0 0.0
        %1397 = vmatprep.subr.mxu0 0.0
        %1398 = vmatpush1.msra.mxu0 0.0
        %1399 = vmatprep.subr.mxu0 0.0
        %1400 = vmatpush1.msra.mxu0 0.0
        %1401 = vmatprep.subr.mxu0 0.0
        %1402 = vmatpush1.msra.mxu0 0.0
        %1403 = vmatprep.subr.mxu0 0.0
        %1404 = vmatpush1.msra.mxu0 0.0
        %1405 = vmatprep.subr.mxu0 0.0
        %1406 = vmatpush1.msra.mxu0 0.0
        %1407 = vmatprep.subr.mxu0 0.0
        %1408 = vmatpush1.msra.mxu0 0.0
        %1409 = vmatprep.subr.mxu0 0.0
        %1410 = vmatpush1.msra.mxu0 0.0
        %1411 = vmatprep.subr.mxu0 0.0
        %1412 = vmatpush1.msra.mxu0 0.0
        %1413 = vmatprep.subr.mxu0 0.0
        %1414 = vmatpush1.msra.mxu0 0.0
        %1415 = vmatprep.subr.mxu0 0.0
        %1416 = vmatpush1.msra.mxu0 0.0
        %1417 = vmatprep.subr.mxu0 0.0
        %1418 = vmatpush1.msra.mxu0 0.0
        %1419 = vmatprep.subr.mxu0 0.0
        %1420 = vmatpush1.msra.mxu0 0.0
        %1421 = vmatprep.subr.mxu0 0.0
        %1422 = vmatpush1.msra.mxu0 0.0
        %1423 = vmatprep.subr.mxu0 0.0
        %1424 = vmatpush1.msra.mxu0 0.0
        %1425 = vmatprep.subr.mxu0 0.0
        %1426 = vmatpush1.msra.mxu0 0.0
        %1427 = vmatprep.subr.mxu0 0.0
        %1428 = vmatpush1.msra.mxu0 0.0
        %1429 = vmatprep.subr.mxu0 0.0
        %1430 = vmatpush1.msra.mxu0 0.0
        %1431 = vmatprep.subr.mxu0 0.0
        %1432 = vmatpush1.msra.mxu0 0.0
        %1433 = vmatprep.subr.mxu0 0.0
        %1434 = vmatpush1.msra.mxu0 0.0
        %1435 = vmatprep.subr.mxu0 0.0
        %1436 = vmatpush1.msra.mxu0 0.0
        %1437 = vmatprep.subr.mxu0 0.0
        %1438 = vmatpush1.msra.mxu0 0.0
        %1439 = vmatprep.subr.mxu0 0.0
        %1440 = vmatpush1.msra.mxu0 0.0
        %1441 = vmatprep.mubr.f32.mxu0 0.0
        %1442 = vmatmul.mubr.f32.gmra.mrb[0].mxu0 %v1375
        %v1443 = vpop.f32.mrb[0].mxu0
        %v1444 = vadd.f32 0.0, %v1443
        %v1445 = vpop.f32.mrb[0].mxu0
        %1446 = vdwg.mxu0
        %vm1447 = vcmask 258048
        %v1448 = vsel %vm1447, %v1225, 0.0
        %v1449 = vsel %vm1447, %v1298, 0.0
        %v1450 = vadd.f32 %v1448, %v1449
        %v1451 = vsel %vm1447, %v1371, 0.0
        %v1452 = vadd.f32 %v1450, %v1451
        %v1453 = vsel %vm1447, %v1444, 0.0
        %v1454 = vadd.f32 %v1452, %v1453
        %v1455 = vlaneseq
        %v1456 = vshrl.u32 %v1455, 7
        %v1457 = vsub.s32 0, %v1456
        %v1458 = vrot.slane %v301, %v1457
        %v1459 = vadd.f32 %v1454, %v1458
        %v1460 = vadd.f32 %v401, %v1459
        %v1461 = vsel %vm1447, %v1460, 0.0
        %1462 = vadd.xlane.f32.xlu0 %v1461
        %v1463 = vpop.xlane.xlu0 %1462
        %v1464 = vrcp.pop 32.0
        %v1465 = vmul.f32 %v1463, %v1464
        %v1466 = vsub.f32 %v1460, %v1465
        %v1467 = vmul.f32 %v1466, %v1466
        %v1468 = vsel %vm1447, %v1467, 0.0
        %1469 = vadd.xlane.f32.xlu0 %v1468
        %v1470 = vpop.xlane.xlu0 %1469
        %v1471 = vmul.f32 %v1470, %v1464
        %v1472 = vadd.f32 %v1471, 1e-05
        %v1473 = vrsqrt.pop %v1472
        %v1474 = vmul.f32 %v1466, %v1473
        %v1475 = vlaneseq
        %v1476 = vshrl.u32 %v1475, 7
        %v1477 = vsub.s32 3, %v1476
        %v1478 = vrot.slane %v301, %v1477
        %v1479 = vmul.f32 %v1474, %v1478
        %v1480 = vlaneseq
        %v1481 = vshrl.u32 %v1480, 7
        %v1482 = vsub.s32 4, %v1481
        %v1483 = vrot.slane %v301, %v1482
        %v1484 = vadd.f32 %v1479, %v1483
        %v1485 = vld [vmem:[%s5] sm:$0xff]
        %v1486 = vld [vmem:[%s5 + $0x8] sm:$0xff]
        %v1487 = vld [vmem:[%s5 + $0x10] sm:$0xff]
        %v1488 = vld [vmem:[%s5 + $0x18] sm:$0xff]
        %v1489 = vlaneseq
        %v1490 = vshrl.u32 %v1489, 7
        %v1491 = vsub.s32 1, %v1490
        %v1492 = vrot.slane %v301, %v1491
        %v1494 = vsel %vm410, %v1484, 0
        %1496 = vmatprep.subr.mxu0 0.0
        %1497 = vmatpush1.msra.mxu0 %v1485
        %1498 = vmatprep.subr.mxu0 0.0
        %1499 = vmatpush1.msra.mxu0 %v1486
        %1500 = vmatprep.subr.mxu0 0.0
        %1501 = vmatpush1.msra.mxu0 %v1487
        %1502 = vmatprep.subr.mxu0 0.0
        %1503 = vmatpush1.msra.mxu0 %v1488
        %1504 = vmatprep.subr.mxu0 0.0
        %1505 = vmatpush1.msra.mxu0 0.0
        %1506 = vmatprep.subr.mxu0 0.0
        %1507 = vmatpush1.msra.mxu0 0.0
        %1508 = vmatprep.subr.mxu0 0.0
        %1509 = vmatpush1.msra.mxu0 0.0
        %1510 = vmatprep.subr.mxu0 0.0
        %1511 = vmatpush1.msra.mxu0 0.0
        %1512 = vmatprep.subr.mxu0 0.0
        %1513 = vmatpush1.msra.mxu0 0.0
        %1514 = vmatprep.subr.mxu0 0.0
        %1515 = vmatpush1.msra.mxu0 0.0
        %1516 = vmatprep.subr.mxu0 0.0
        %1517 = vmatpush1.msra.mxu0 0.0
        %1518 = vmatprep.subr.mxu0 0.0
        %1519 = vmatpush1.msra.mxu0 0.0
        %1520 = vmatprep.subr.mxu0 0.0
        %1521 = vmatpush1.msra.mxu0 0.0
        %1522 = vmatprep.subr.mxu0 0.0
        %1523 = vmatpush1.msra.mxu0 0.0
        %1524 = vmatprep.subr.mxu0 0.0
        %1525 = vmatpush1.msra.mxu0 0.0
        %1526 = vmatprep.subr.mxu0 0.0
        %1527 = vmatpush1.msra.mxu0 0.0
        %1528 = vmatprep.subr.mxu0 0.0
        %1529 = vmatpush1.msra.mxu0 0.0
        %1530 = vmatprep.subr.mxu0 0.0
        %1531 = vmatpush1.msra.mxu0 0.0
        %1532 = vmatprep.subr.mxu0 0.0
        %1533 = vmatpush1.msra.mxu0 0.0
        %1534 = vmatprep.subr.mxu0 0.0
        %1535 = vmatpush1.msra.mxu0 0.0
        %1536 = vmatprep.subr.mxu0 0.0
        %1537 = vmatpush1.msra.mxu0 0.0
        %1538 = vmatprep.subr.mxu0 0.0
        %1539 = vmatpush1.msra.mxu0 0.0
        %1540 = vmatprep.subr.mxu0 0.0
        %1541 = vmatpush1.msra.mxu0 0.0
        %1542 = vmatprep.subr.mxu0 0.0
        %1543 = vmatpush1.msra.mxu0 0.0
        %1544 = vmatprep.subr.mxu0 0.0
        %1545 = vmatpush1.msra.mxu0 0.0
        %1546 = vmatprep.subr.mxu0 0.0
        %1547 = vmatpush1.msra.mxu0 0.0
        %1548 = vmatprep.subr.mxu0 0.0
        %1549 = vmatpush1.msra.mxu0 0.0
        %1550 = vmatprep.subr.mxu0 0.0
        %1551 = vmatpush1.msra.mxu0 0.0
        %1552 = vmatprep.subr.mxu0 0.0
        %1553 = vmatpush1.msra.mxu0 0.0
        %1554 = vmatprep.subr.mxu0 0.0
        %1555 = vmatpush1.msra.mxu0 0.0
        %1556 = vmatprep.subr.mxu0 0.0
        %1557 = vmatpush1.msra.mxu0 0.0
        %1558 = vmatprep.subr.mxu0 0.0
        %1559 = vmatpush1.msra.mxu0 0.0
        %1560 = vmatprep.mubr.f32.mxu0 0.0
        %1561 = vmatmul.mubr.f32.gmra.mrb[0].mxu0 %v1494
        %v1562 = vpop.f32.mrb[0].mxu0
        %v1563 = vadd.f32 %v1492, %v1562
        %v1564 = vpop.f32.mrb[0].mxu0
        %1565 = vdwg.mxu0
        %v1566 = vmul.f32 %v1563, 0.5
        %v1567 = vmul.f32 %v1563, 0.70710677
        %vm1568 = vcmp.ge.f32.partialorder %v1567, 0.0
        %v1569 = vsel %vm1568, 1.0, -1.0
        %v1570 = vand.u32 2147483647, %v1567
        %v1571 = vmul.f32 %v1570, 0.3275911
        %v1572 = vadd.f32 %v1571, 1.0
        %v1573 = vrcp.pop %v1572
        %v1574 = vmul.f32 1.0, %v1573
        %v1575 = vmul.f32 %v1574, 1.0614054
        %v1576 = vadd.f32 %v1575, -1.4531521
        %v1577 = vmul.f32 %v1576, %v1574
        %v1578 = vadd.f32 %v1577, 1.4214138
        %v1579 = vmul.f32 %v1578, %v1574
        %v1580 = vadd.f32 %v1579, -0.28449672
        %v1581 = vmul.f32 %v1580, %v1574
        %v1582 = vadd.f32 %v1581, 0.2548296
        %v1583 = vmul.f32 %v1582, %v1574
        %v1584 = vsub.f32 0.0, %v1570
        %v1585 = vmul.f32 %v1584, %v1570
        %v1586 = vmul.f32 %v1585, 1.442695
        %v1587 = vpow.pop %v1586
        %v1588 = vmul.f32 %v1583, %v1587
        %v1589 = vsub.f32 1.0, %v1588
        %v1590 = vmul.f32 %v1569, %v1589
        %v1591 = vadd.f32 %v1590, 1.0
        %v1592 = vmul.f32 %v1566, %v1591
        %v1593 = vld [vmem:[%s6] sm:$0xff]
        %v1594 = vld [vmem:[%s6 + $0x8] sm:$0xff]
        %v1595 = vld [vmem:[%s6 + $0x10] sm:$0xff]
        %v1596 = vld [vmem:[%s6 + $0x18] sm:$0xff]
        %v1597 = vld [vmem:[%s6 + $0x20] sm:$0xff]
        %v1598 = vld [vmem:[%s6 + $0x28] sm:$0xff]
        %v1599 = vld [vmem:[%s6 + $0x30] sm:$0xff]
        %v1600 = vld [vmem:[%s6 + $0x38] sm:$0xff]
        %v1601 = vlaneseq
        %v1602 = vshrl.u32 %v1601, 7
        %v1603 = vsub.s32 2, %v1602
        %v1604 = vrot.slane %v301, %v1603
        %v1606 = vsel %vm317, %v1592, 0
        %1608 = vmatprep.subr.mxu0 0.0
        %1609 = vmatpush1.msra.mxu0 %v1593
        %1610 = vmatprep.subr.mxu0 0.0
        %1611 = vmatpush1.msra.mxu0 %v1594
        %1612 = vmatprep.subr.mxu0 0.0
        %1613 = vmatpush1.msra.mxu0 %v1595
        %1614 = vmatprep.subr.mxu0 0.0
        %1615 = vmatpush1.msra.mxu0 %v1596
        %1616 = vmatprep.subr.mxu0 0.0
        %1617 = vmatpush1.msra.mxu0 %v1597
        %1618 = vmatprep.subr.mxu0 0.0
        %1619 = vmatpush1.msra.mxu0 %v1598
        %1620 = vmatprep.subr.mxu0 0.0
        %1621 = vmatpush1.msra.mxu0 %v1599
        %1622 = vmatprep.subr.mxu0 0.0
        %1623 = vmatpush1.msra.mxu0 %v1600
        %1624 = vmatprep.subr.mxu0 0.0
        %1625 = vmatpush1.msra.mxu0 0.0
        %1626 = vmatprep.subr.mxu0 0.0
        %1627 = vmatpush1.msra.mxu0 0.0
        %1628 = vmatprep.subr.mxu0 0.0
        %1629 = vmatpush1.msra.mxu0 0.0
        %1630 = vmatprep.subr.mxu0 0.0
        %1631 = vmatpush1.msra.mxu0 0.0
        %1632 = vmatprep.subr.mxu0 0.0
        %1633 = vmatpush1.msra.mxu0 0.0
        %1634 = vmatprep.subr.mxu0 0.0
        %1635 = vmatpush1.msra.mxu0 0.0
        %1636 = vmatprep.subr.mxu0 0.0
        %1637 = vmatpush1.msra.mxu0 0.0
        %1638 = vmatprep.subr.mxu0 0.0
        %1639 = vmatpush1.msra.mxu0 0.0
        %1640 = vmatprep.subr.mxu0 0.0
        %1641 = vmatpush1.msra.mxu0 0.0
        %1642 = vmatprep.subr.mxu0 0.0
        %1643 = vmatpush1.msra.mxu0 0.0
        %1644 = vmatprep.subr.mxu0 0.0
        %1645 = vmatpush1.msra.mxu0 0.0
        %1646 = vmatprep.subr.mxu0 0.0
        %1647 = vmatpush1.msra.mxu0 0.0
        %1648 = vmatprep.subr.mxu0 0.0
        %1649 = vmatpush1.msra.mxu0 0.0
        %1650 = vmatprep.subr.mxu0 0.0
        %1651 = vmatpush1.msra.mxu0 0.0
        %1652 = vmatprep.subr.mxu0 0.0
        %1653 = vmatpush1.msra.mxu0 0.0
        %1654 = vmatprep.subr.mxu0 0.0
        %1655 = vmatpush1.msra.mxu0 0.0
        %1656 = vmatprep.subr.mxu0 0.0
        %1657 = vmatpush1.msra.mxu0 0.0
        %1658 = vmatprep.subr.mxu0 0.0
        %1659 = vmatpush1.msra.mxu0 0.0
        %1660 = vmatprep.subr.mxu0 0.0
        %1661 = vmatpush1.msra.mxu0 0.0
        %1662 = vmatprep.subr.mxu0 0.0
        %1663 = vmatpush1.msra.mxu0 0.0
        %1664 = vmatprep.subr.mxu0 0.0
        %1665 = vmatpush1.msra.mxu0 0.0
        %1666 = vmatprep.subr.mxu0 0.0
        %1667 = vmatpush1.msra.mxu0 0.0
        %1668 = vmatprep.subr.mxu0 0.0
        %1669 = vmatpush1.msra.mxu0 0.0
        %1670 = vmatprep.subr.mxu0 0.0
        %1671 = vmatpush1.msra.mxu0 0.0
        %1672 = vmatprep.mubr.f32.mxu0 0.0
        %1673 = vmatmul.mubr.f32.gmra.mrb[0].mxu0 %v1606
        %v1674 = vpop.f32.mrb[0].mxu0
        %v1675 = vadd.f32 %v1604, %v1674
        %v1676 = vpop.f32.mrb[0].mxu0
        %1677 = vdwg.mxu0
        %v1678 = vadd.f32 %v1484, %v1675
        %v1679 = vsel %vm1447, %v1678, 0.0
        %1680 = vadd.xlane.f32.xlu0 %v1679
        %v1681 = vpop.xlane.xlu0 %1680
        %v1682 = vmul.f32 %v1681, %v1464
        %v1683 = vsub.f32 %v1678, %v1682
        %v1684 = vmul.f32 %v1683, %v1683
        %v1685 = vsel %vm1447, %v1684, 0.0
        %1686 = vadd.xlane.f32.xlu0 %v1685
        %v1687 = vpop.xlane.xlu0 %1686
        %v1688 = vmul.f32 %v1687, %v1464
        %v1689 = vadd.f32 %v1688, 1e-05
        %v1690 = vrsqrt.pop %v1689
        %v1691 = vmul.f32 %v1683, %v1690
        %v1692 = vlaneseq
        %v1693 = vshrl.u32 %v1692, 7
        %v1694 = vsub.s32 5, %v1693
        %v1695 = vrot.slane %v301, %v1694
        %v1696 = vmul.f32 %v1691, %v1695
        %v1697 = vlaneseq
        %v1698 = vshrl.u32 %v1697, 7
        %v1699 = vsub.s32 6, %v1698
        %v1700 = vrot.slane %v301, %v1699
        %v1701 = vadd.f32 %v1696, %v1700
        %s1702 = scalar_lea.vmem %s3, 32
        %v1703 = vld [vmem:[%s1702] sm:$0xff]
        %v1704 = vld [vmem:[%s1702 + $0x8] sm:$0xff]
        %v1705 = vld [vmem:[%s1702 + $0x10] sm:$0xff]
        %v1706 = vld [vmem:[%s1702 + $0x18] sm:$0xff]
        %v1707 = vlaneseq
        %v1708 = vshrl.u32 %v1707, 7
        %v1709 = vsub.s32 7, %v1708
        %v1710 = vrot.slane %v301, %v1709
        %v1712 = vsel %vm410, %v1701, 0
        %1714 = vmatprep.subr.mxu0 0.0
        %1715 = vmatpush1.msra.mxu0 %v1703
        %1716 = vmatprep.subr.mxu0 0.0
        %1717 = vmatpush1.msra.mxu0 %v1704
        %1718 = vmatprep.subr.mxu0 0.0
        %1719 = vmatpush1.msra.mxu0 %v1705
        %1720 = vmatprep.subr.mxu0 0.0
        %1721 = vmatpush1.msra.mxu0 %v1706
        %1722 = vmatprep.subr.mxu0 0.0
        %1723 = vmatpush1.msra.mxu0 0.0
        %1724 = vmatprep.subr.mxu0 0.0
        %1725 = vmatpush1.msra.mxu0 0.0
        %1726 = vmatprep.subr.mxu0 0.0
        %1727 = vmatpush1.msra.mxu0 0.0
        %1728 = vmatprep.subr.mxu0 0.0
        %1729 = vmatpush1.msra.mxu0 0.0
        %1730 = vmatprep.subr.mxu0 0.0
        %1731 = vmatpush1.msra.mxu0 0.0
        %1732 = vmatprep.subr.mxu0 0.0
        %1733 = vmatpush1.msra.mxu0 0.0
        %1734 = vmatprep.subr.mxu0 0.0
        %1735 = vmatpush1.msra.mxu0 0.0
        %1736 = vmatprep.subr.mxu0 0.0
        %1737 = vmatpush1.msra.mxu0 0.0
        %1738 = vmatprep.subr.mxu0 0.0
        %1739 = vmatpush1.msra.mxu0 0.0
        %1740 = vmatprep.subr.mxu0 0.0
        %1741 = vmatpush1.msra.mxu0 0.0
        %1742 = vmatprep.subr.mxu0 0.0
        %1743 = vmatpush1.msra.mxu0 0.0
        %1744 = vmatprep.subr.mxu0 0.0
        %1745 = vmatpush1.msra.mxu0 0.0
        %1746 = vmatprep.subr.mxu0 0.0
        %1747 = vmatpush1.msra.mxu0 0.0
        %1748 = vmatprep.subr.mxu0 0.0
        %1749 = vmatpush1.msra.mxu0 0.0
        %1750 = vmatprep.subr.mxu0 0.0
        %1751 = vmatpush1.msra.mxu0 0.0
        %1752 = vmatprep.subr.mxu0 0.0
        %1753 = vmatpush1.msra.mxu0 0.0
        %1754 = vmatprep.subr.mxu0 0.0
        %1755 = vmatpush1.msra.mxu0 0.0
        %1756 = vmatprep.subr.mxu0 0.0
        %1757 = vmatpush1.msra.mxu0 0.0
        %1758 = vmatprep.subr.mxu0 0.0
        %1759 = vmatpush1.msra.mxu0 0.0
        %1760 = vmatprep.subr.mxu0 0.0
        %1761 = vmatpush1.msra.mxu0 0.0
        %1762 = vmatprep.subr.mxu0 0.0
        %1763 = vmatpush1.msra.mxu0 0.0
        %1764 = vmatprep.subr.mxu0 0.0
        %1765 = vmatpush1.msra.mxu0 0.0
        %1766 = vmatprep.subr.mxu0 0.0
        %1767 = vmatpush1.msra.mxu0 0.0
        %1768 = vmatprep.subr.mxu0 0.0
        %1769 = vmatpush1.msra.mxu0 0.0
        %1770 = vmatprep.subr.mxu0 0.0
        %1771 = vmatpush1.msra.mxu0 0.0
        %1772 = vmatprep.subr.mxu0 0.0
        %1773 = vmatpush1.msra.mxu0 0.0
        %1774 = vmatprep.subr.mxu0 0.0
        %1775 = vmatpush1.msra.mxu0 0.0
        %1776 = vmatprep.subr.mxu0 0.0
        %1777 = vmatpush1.msra.mxu0 0.0
        %1778 = vmatprep.mubr.f32.mxu0 0.0
        %1779 = vmatmul.mubr.f32.gmra.mrb[0].mxu0 %v1712
        %v1780 = vpop.f32.mrb[0].mxu0
        %v1781 = vadd.f32 %v1710, %v1780
        %v1782 = vpop.f32.mrb[0].mxu0
        %1783 = vdwg.mxu0
        %1785 = vrot.lane.b32.xlu0 %v1781, 120
        %v1786 = vpop.permute.xlu0 %1785
        %1787 = vrot.lane.b32.xlu0 %v1781, 112
        %v1788 = vpop.permute.xlu0 %1787
        %1789 = vrot.lane.b32.xlu0 %v1781, 104
        %v1790 = vpop.permute.xlu0 %1789
        %1791 = vrot.lane.b32.xlu0 %v1781, 96
        %v1792 = vpop.permute.xlu0 %1791
        %v1793 = vsel %vm493, %v1781, 0
        %v1795 = vsel %vm493, %v1792, 0
        %1797 = vmatprep.subr.mxu0 0.0
        %1798 = vmatpush1.xpose.msra.mxu0 %v1795
        %1799 = vmatprep.subr.mxu0 0.0
        %1800 = vmatpush1.xpose.msra.mxu0 0.0
        %1801 = vmatprep.subr.mxu0 0.0
        %1802 = vmatpush1.xpose.msra.mxu0 0.0
        %1803 = vmatprep.subr.mxu0 0.0
        %1804 = vmatpush1.xpose.msra.mxu0 0.0
        %1805 = vmatprep.subr.mxu0 0.0
        %1806 = vmatpush1.xpose.msra.mxu0 0.0
        %1807 = vmatprep.subr.mxu0 0.0
        %1808 = vmatpush1.xpose.msra.mxu0 0.0
        %1809 = vmatprep.subr.mxu0 0.0
        %1810 = vmatpush1.xpose.msra.mxu0 0.0
        %1811 = vmatprep.subr.mxu0 0.0
        %1812 = vmatpush1.xpose.msra.mxu0 0.0
        %1813 = vmatprep.subr.mxu0 0.0
        %1814 = vmatpush1.xpose.msra.mxu0 0.0
        %1815 = vmatprep.subr.mxu0 0.0
        %1816 = vmatpush1.xpose.msra.mxu0 0.0
        %1817 = vmatprep.subr.mxu0 0.0
        %1818 = vmatpush1.xpose.msra.mxu0 0.0
        %1819 = vmatprep.subr.mxu0 0.0
        %1820 = vmatpush1.xpose.msra.mxu0 0.0
        %1821 = vmatprep.subr.mxu0 0.0
        %1822 = vmatpush1.xpose.msra.mxu0 0.0
        %1823 = vmatprep.subr.mxu0 0.0
        %1824 = vmatpush1.xpose.msra.mxu0 0.0
        %1825 = vmatprep.subr.mxu0 0.0
        %1826 = vmatpush1.xpose.msra.mxu0 0.0
        %1827 = vmatprep.subr.mxu0 0.0
        %1828 = vmatpush1.xpose.msra.mxu0 0.0
        %1829 = vmatprep.subr.mxu0 0.0
        %1830 = vmatpush1.xpose.msra.mxu0 0.0
        %1831 = vmatprep.subr.mxu0 0.0
        %1832 = vmatpush1.xpose.msra.mxu0 0.0
        %1833 = vmatprep.subr.mxu0 0.0
        %1834 = vmatpush1.xpose.msra.mxu0 0.0
        %1835 = vmatprep.subr.mxu0 0.0
        %1836 = vmatpush1.xpose.msra.mxu0 0.0
        %1837 = vmatprep.subr.mxu0 0.0
        %1838 = vmatpush1.xpose.msra.mxu0 0.0
        %1839 = vmatprep.subr.mxu0 0.0
        %1840 = vmatpush1.xpose.msra.mxu0 0.0
        %1841 = vmatprep.subr.mxu0 0.0
        %1842 = vmatpush1.xpose.msra.mxu0 0.0
        %1843 = vmatprep.subr.mxu0 0.0
        %1844 = vmatpush1.xpose.msra.mxu0 0.0
        %1845 = vmatprep.subr.mxu0 0.0
        %1846 = vmatpush1.xpose.msra.mxu0 0.0
        %1847 = vmatprep.subr.mxu0 0.0
        %1848 = vmatpush1.xpose.msra.mxu0 0.0
        %1849 = vmatprep.subr.mxu0 0.0
        %1850 = vmatpush1.xpose.msra.mxu0 0.0
        %1851 = vmatprep.subr.mxu0 0.0
        %1852 = vmatpush1.xpose.msra.mxu0 0.0
        %1853 = vmatprep.subr.mxu0 0.0
        %1854 = vmatpush1.xpose.msra.mxu0 0.0
        %1855 = vmatprep.subr.mxu0 0.0
        %1856 = vmatpush1.xpose.msra.mxu0 0.0
        %1857 = vmatprep.subr.mxu0 0.0
        %1858 = vmatpush1.xpose.msra.mxu0 0.0
        %1859 = vmatprep.subr.mxu0 0.0
        %1860 = vmatpush1.xpose.msra.mxu0 0.0
        %1861 = vmatprep.mubr.f32.mxu0 0.0
        %1862 = vmatmul.mubr.f32.gmra.mrb[0].mxu0 %v1793
        %v1863 = vpop.f32.mrb[0].mxu0
        %v1864 = vadd.f32 0.0, %v1863
        %v1865 = vpop.f32.mrb[0].mxu0
        %1866 = vdwg.mxu0
        %1867 = vrot.lane.b32.xlu0 %v1786, 96
        %v1868 = vpop.permute.xlu0 %1867
        %v1869 = vsel %vm493, %v1786, 0
        %v1871 = vsel %vm493, %v1868, 0
        %1873 = vmatprep.subr.mxu0 0.0
        %1874 = vmatpush1.xpose.msra.mxu0 %v1871
        %1875 = vmatprep.subr.mxu0 0.0
        %1876 = vmatpush1.xpose.msra.mxu0 0.0
        %1877 = vmatprep.subr.mxu0 0.0
        %1878 = vmatpush1.xpose.msra.mxu0 0.0
        %1879 = vmatprep.subr.mxu0 0.0
        %1880 = vmatpush1.xpose.msra.mxu0 0.0
        %1881 = vmatprep.subr.mxu0 0.0
        %1882 = vmatpush1.xpose.msra.mxu0 0.0
        %1883 = vmatprep.subr.mxu0 0.0
        %1884 = vmatpush1.xpose.msra.mxu0 0.0
        %1885 = vmatprep.subr.mxu0 0.0
        %1886 = vmatpush1.xpose.msra.mxu0 0.0
        %1887 = vmatprep.subr.mxu0 0.0
        %1888 = vmatpush1.xpose.msra.mxu0 0.0
        %1889 = vmatprep.subr.mxu0 0.0
        %1890 = vmatpush1.xpose.msra.mxu0 0.0
        %1891 = vmatprep.subr.mxu0 0.0
        %1892 = vmatpush1.xpose.msra.mxu0 0.0
        %1893 = vmatprep.subr.mxu0 0.0
        %1894 = vmatpush1.xpose.msra.mxu0 0.0
        %1895 = vmatprep.subr.mxu0 0.0
        %1896 = vmatpush1.xpose.msra.mxu0 0.0
        %1897 = vmatprep.subr.mxu0 0.0
        %1898 = vmatpush1.xpose.msra.mxu0 0.0
        %1899 = vmatprep.subr.mxu0 0.0
        %1900 = vmatpush1.xpose.msra.mxu0 0.0
        %1901 = vmatprep.subr.mxu0 0.0
        %1902 = vmatpush1.xpose.msra.mxu0 0.0
        %1903 = vmatprep.subr.mxu0 0.0
        %1904 = vmatpush1.xpose.msra.mxu0 0.0
        %1905 = vmatprep.subr.mxu0 0.0
        %1906 = vmatpush1.xpose.msra.mxu0 0.0
        %1907 = vmatprep.subr.mxu0 0.0
        %1908 = vmatpush1.xpose.msra.mxu0 0.0
        %1909 = vmatprep.subr.mxu0 0.0
        %1910 = vmatpush1.xpose.msra.mxu0 0.0
        %1911 = vmatprep.subr.mxu0 0.0
        %1912 = vmatpush1.xpose.msra.mxu0 0.0
        %1913 = vmatprep.subr.mxu0 0.0
        %1914 = vmatpush1.xpose.msra.mxu0 0.0
        %1915 = vmatprep.subr.mxu0 0.0
        %1916 = vmatpush1.xpose.msra.mxu0 0.0
        %1917 = vmatprep.subr.mxu0 0.0
        %1918 = vmatpush1.xpose.msra.mxu0 0.0
        %1919 = vmatprep.subr.mxu0 0.0
        %1920 = vmatpush1.xpose.msra.mxu0 0.0
        %1921 = vmatprep.subr.mxu0 0.0
        %1922 = vmatpush1.xpose.msra.mxu0 0.0
        %1923 = vmatprep.subr.mxu0 0.0
        %1924 = vmatpush1.xpose.msra.mxu0 0.0
        %1925 = vmatprep.subr.mxu0 0.0
        %1926 = vmatpush1.xpose.msra.mxu0 0.0
        %1927 = vmatprep.subr.mxu0 0.0
        %1928 = vmatpush1.xpose.msra.mxu0 0.0
        %1929 = vmatprep.subr.mxu0 0.0
        %1930 = vmatpush1.xpose.msra.mxu0 0.0
        %1931 = vmatprep.subr.mxu0 0.0
        %1932 = vmatpush1.xpose.msra.mxu0 0.0
        %1933 = vmatprep.subr.mxu0 0.0
        %1934 = vmatpush1.xpose.msra.mxu0 0.0
        %1935 = vmatprep.subr.mxu0 0.0
        %1936 = vmatpush1.xpose.msra.mxu0 0.0
        %1937 = vmatprep.mubr.f32.mxu0 0.0
        %1938 = vmatmul.mubr.f32.gmra.mrb[0].mxu0 %v1869
        %v1939 = vpop.f32.mrb[0].mxu0
        %v1940 = vadd.f32 0.0, %v1939
        %v1941 = vpop.f32.mrb[0].mxu0
        %1942 = vdwg.mxu0
        %1943 = vrot.lane.b32.xlu0 %v1788, 96
        %v1944 = vpop.permute.xlu0 %1943
        %v1945 = vsel %vm493, %v1788, 0
        %v1947 = vsel %vm493, %v1944, 0
        %1949 = vmatprep.subr.mxu0 0.0
        %1950 = vmatpush1.xpose.msra.mxu0 %v1947
        %1951 = vmatprep.subr.mxu0 0.0
        %1952 = vmatpush1.xpose.msra.mxu0 0.0
        %1953 = vmatprep.subr.mxu0 0.0
        %1954 = vmatpush1.xpose.msra.mxu0 0.0
        %1955 = vmatprep.subr.mxu0 0.0
        %1956 = vmatpush1.xpose.msra.mxu0 0.0
        %1957 = vmatprep.subr.mxu0 0.0
        %1958 = vmatpush1.xpose.msra.mxu0 0.0
        %1959 = vmatprep.subr.mxu0 0.0
        %1960 = vmatpush1.xpose.msra.mxu0 0.0
        %1961 = vmatprep.subr.mxu0 0.0
        %1962 = vmatpush1.xpose.msra.mxu0 0.0
        %1963 = vmatprep.subr.mxu0 0.0
        %1964 = vmatpush1.xpose.msra.mxu0 0.0
        %1965 = vmatprep.subr.mxu0 0.0
        %1966 = vmatpush1.xpose.msra.mxu0 0.0
        %1967 = vmatprep.subr.mxu0 0.0
        %1968 = vmatpush1.xpose.msra.mxu0 0.0
        %1969 = vmatprep.subr.mxu0 0.0
        %1970 = vmatpush1.xpose.msra.mxu0 0.0
        %1971 = vmatprep.subr.mxu0 0.0
        %1972 = vmatpush1.xpose.msra.mxu0 0.0
        %1973 = vmatprep.subr.mxu0 0.0
        %1974 = vmatpush1.xpose.msra.mxu0 0.0
        %1975 = vmatprep.subr.mxu0 0.0
        %1976 = vmatpush1.xpose.msra.mxu0 0.0
        %1977 = vmatprep.subr.mxu0 0.0
        %1978 = vmatpush1.xpose.msra.mxu0 0.0
        %1979 = vmatprep.subr.mxu0 0.0
        %1980 = vmatpush1.xpose.msra.mxu0 0.0
        %1981 = vmatprep.subr.mxu0 0.0
        %1982 = vmatpush1.xpose.msra.mxu0 0.0
        %1983 = vmatprep.subr.mxu0 0.0
        %1984 = vmatpush1.xpose.msra.mxu0 0.0
        %1985 = vmatprep.subr.mxu0 0.0
        %1986 = vmatpush1.xpose.msra.mxu0 0.0
        %1987 = vmatprep.subr.mxu0 0.0
        %1988 = vmatpush1.xpose.msra.mxu0 0.0
        %1989 = vmatprep.subr.mxu0 0.0
        %1990 = vmatpush1.xpose.msra.mxu0 0.0
        %1991 = vmatprep.subr.mxu0 0.0
        %1992 = vmatpush1.xpose.msra.mxu0 0.0
        %1993 = vmatprep.subr.mxu0 0.0
        %1994 = vmatpush1.xpose.msra.mxu0 0.0
        %1995 = vmatprep.subr.mxu0 0.0
        %1996 = vmatpush1.xpose.msra.mxu0 0.0
        %1997 = vmatprep.subr.mxu0 0.0
        %1998 = vmatpush1.xpose.msra.mxu0 0.0
        %1999 = vmatprep.subr.mxu0 0.0
        %2000 = vmatpush1.xpose.msra.mxu0 0.0
        %2001 = vmatprep.subr.mxu0 0.0
        %2002 = vmatpush1.xpose.msra.mxu0 0.0
        %2003 = vmatprep.subr.mxu0 0.0
        %2004 = vmatpush1.xpose.msra.mxu0 0.0
        %2005 = vmatprep.subr.mxu0 0.0
        %2006 = vmatpush1.xpose.msra.mxu0 0.0
        %2007 = vmatprep.subr.mxu0 0.0
        %2008 = vmatpush1.xpose.msra.mxu0 0.0
        %2009 = vmatprep.subr.mxu0 0.0
        %2010 = vmatpush1.xpose.msra.mxu0 0.0
        %2011 = vmatprep.subr.mxu0 0.0
        %2012 = vmatpush1.xpose.msra.mxu0 0.0
        %2013 = vmatprep.mubr.f32.mxu0 0.0
        %2014 = vmatmul.mubr.f32.gmra.mrb[0].mxu0 %v1945
        %v2015 = vpop.f32.mrb[0].mxu0
        %v2016 = vadd.f32 0.0, %v2015
        %v2017 = vpop.f32.mrb[0].mxu0
        %2018 = vdwg.mxu0
        %2019 = vrot.lane.b32.xlu0 %v1790, 96
        %v2020 = vpop.permute.xlu0 %2019
        %v2021 = vsel %vm493, %v1790, 0
        %v2023 = vsel %vm493, %v2020, 0
        %2025 = vmatprep.subr.mxu0 0.0
        %2026 = vmatpush1.xpose.msra.mxu0 %v2023
        %2027 = vmatprep.subr.mxu0 0.0
        %2028 = vmatpush1.xpose.msra.mxu0 0.0
        %2029 = vmatprep.subr.mxu0 0.0
        %2030 = vmatpush1.xpose.msra.mxu0 0.0
        %2031 = vmatprep.subr.mxu0 0.0
        %2032 = vmatpush1.xpose.msra.mxu0 0.0
        %2033 = vmatprep.subr.mxu0 0.0
        %2034 = vmatpush1.xpose.msra.mxu0 0.0
        %2035 = vmatprep.subr.mxu0 0.0
        %2036 = vmatpush1.xpose.msra.mxu0 0.0
        %2037 = vmatprep.subr.mxu0 0.0
        %2038 = vmatpush1.xpose.msra.mxu0 0.0
        %2039 = vmatprep.subr.mxu0 0.0
        %2040 = vmatpush1.xpose.msra.mxu0 0.0
        %2041 = vmatprep.subr.mxu0 0.0
        %2042 = vmatpush1.xpose.msra.mxu0 0.0
        %2043 = vmatprep.subr.mxu0 0.0
        %2044 = vmatpush1.xpose.msra.mxu0 0.0
        %2045 = vmatprep.subr.mxu0 0.0
        %2046 = vmatpush1.xpose.msra.mxu0 0.0
        %2047 = vmatprep.subr.mxu0 0.0
        %2048 = vmatpush1.xpose.msra.mxu0 0.0
        %2049 = vmatprep.subr.mxu0 0.0
        %2050 = vmatpush1.xpose.msra.mxu0 0.0
        %2051 = vmatprep.subr.mxu0 0.0
        %2052 = vmatpush1.xpose.msra.mxu0 0.0
        %2053 = vmatprep.subr.mxu0 0.0
        %2054 = vmatpush1.xpose.msra.mxu0 0.0
        %2055 = vmatprep.subr.mxu0 0.0
        %2056 = vmatpush1.xpose.msra.mxu0 0.0
        %2057 = vmatprep.subr.mxu0 0.0
        %2058 = vmatpush1.xpose.msra.mxu0 0.0
        %2059 = vmatprep.subr.mxu0 0.0
        %2060 = vmatpush1.xpose.msra.mxu0 0.0
        %2061 = vmatprep.subr.mxu0 0.0
        %2062 = vmatpush1.xpose.msra.mxu0 0.0
        %2063 = vmatprep.subr.mxu0 0.0
        %2064 = vmatpush1.xpose.msra.mxu0 0.0
        %2065 = vmatprep.subr.mxu0 0.0
        %2066 = vmatpush1.xpose.msra.mxu0 0.0
        %2067 = vmatprep.subr.mxu0 0.0
        %2068 = vmatpush1.xpose.msra.mxu0 0.0
        %2069 = vmatprep.subr.mxu0 0.0
        %2070 = vmatpush1.xpose.msra.mxu0 0.0
        %2071 = vmatprep.subr.mxu0 0.0
        %2072 = vmatpush1.xpose.msra.mxu0 0.0
        %2073 = vmatprep.subr.mxu0 0.0
        %2074 = vmatpush1.xpose.msra.mxu0 0.0
        %2075 = vmatprep.subr.mxu0 0.0
        %2076 = vmatpush1.xpose.msra.mxu0 0.0
        %2077 = vmatprep.subr.mxu0 0.0
        %2078 = vmatpush1.xpose.msra.mxu0 0.0
        %2079 = vmatprep.subr.mxu0 0.0
        %2080 = vmatpush1.xpose.msra.mxu0 0.0
        %2081 = vmatprep.subr.mxu0 0.0
        %2082 = vmatpush1.xpose.msra.mxu0 0.0
        %2083 = vmatprep.subr.mxu0 0.0
        %2084 = vmatpush1.xpose.msra.mxu0 0.0
        %2085 = vmatprep.subr.mxu0 0.0
        %2086 = vmatpush1.xpose.msra.mxu0 0.0
        %2087 = vmatprep.subr.mxu0 0.0
        %2088 = vmatpush1.xpose.msra.mxu0 0.0
        %2089 = vmatprep.mubr.f32.mxu0 0.0
        %2090 = vmatmul.mubr.f32.gmra.mrb[0].mxu0 %v2021
        %v2091 = vpop.f32.mrb[0].mxu0
        %v2092 = vadd.f32 0.0, %v2091
        %v2093 = vpop.f32.mrb[0].mxu0
        %2094 = vdwg.mxu0
        %v2095 = vsel %vm796, %v1864, -inf
        %2096 = vmax.xlane.f32.xlu0 %v2095
        %v2097 = vpop.xlane.xlu0 %2096
        %v2098 = vsel %vm796, %v1940, -inf
        %2099 = vmax.xlane.f32.xlu0 %v2098
        %v2100 = vpop.xlane.xlu0 %2099
        %v2101 = vsel %vm796, %v2016, -inf
        %2102 = vmax.xlane.f32.xlu0 %v2101
        %v2103 = vpop.xlane.xlu0 %2102
        %v2104 = vsel %vm796, %v2092, -inf
        %2105 = vmax.xlane.f32.xlu0 %v2104
        %v2106 = vpop.xlane.xlu0 %2105
        %v2107 = vsub.f32 %v1864, %v2097
        %v2108 = vsub.f32 %v1940, %v2100
        %v2109 = vsub.f32 %v2016, %v2103
        %v2110 = vsub.f32 %v2092, %v2106
        %v2111 = vmul.f32 %v2107, 1.442695
        %v2112 = vpow.pop %v2111
        %v2113 = vmul.f32 %v2108, 1.442695
        %v2114 = vpow.pop %v2113
        %v2115 = vmul.f32 %v2109, 1.442695
        %v2116 = vpow.pop %v2115
        %v2117 = vmul.f32 %v2110, 1.442695
        %v2118 = vpow.pop %v2117
        %v2119 = vsel %vm796, %v2112, 0.0
        %2120 = vadd.xlane.f32.xlu0 %v2119
        %v2121 = vpop.xlane.xlu0 %2120
        %v2122 = vsel %vm796, %v2114, 0.0
        %2123 = vadd.xlane.f32.xlu0 %v2122
        %v2124 = vpop.xlane.xlu0 %2123
        %v2125 = vsel %vm796, %v2116, 0.0
        %2126 = vadd.xlane.f32.xlu0 %v2125
        %v2127 = vpop.xlane.xlu0 %2126
        %v2128 = vsel %vm796, %v2118, 0.0
        %2129 = vadd.xlane.f32.xlu0 %v2128
        %v2130 = vpop.xlane.xlu0 %2129
        %v2131 = vrcp.pop %v2121
        %v2132 = vrcp.pop %v2124
        %v2133 = vrcp.pop %v2127
        %v2134 = vrcp.pop %v2130
        %v2135 = vmul.f32 %v2112, %v2131
        %v2136 = vmul.f32 %v2114, %v2132
        %v2137 = vmul.f32 %v2116, %v2133
        %v2138 = vmul.f32 %v2118, %v2134
        %2139 = vrot.lane.b32.xlu0 %v1781, 64
        %v2140 = vpop.permute.xlu0 %2139
        %v2142 = vsel %vm843, %v2135, 0
        %v2144 = vsel %vm847, %v2140, 0
        %2146 = vmatprep.subr.mxu0 0.0
        %2147 = vmatpush1.msra.mxu0 %v2144
        %2148 = vmatprep.subr.mxu0 0.0
        %2149 = vmatpush1.msra.mxu0 0.0
        %2150 = vmatprep.subr.mxu0 0.0
        %2151 = vmatpush1.msra.mxu0 0.0
        %2152 = vmatprep.subr.mxu0 0.0
        %2153 = vmatpush1.msra.mxu0 0.0
        %2154 = vmatprep.subr.mxu0 0.0
        %2155 = vmatpush1.msra.mxu0 0.0
        %2156 = vmatprep.subr.mxu0 0.0
        %2157 = vmatpush1.msra.mxu0 0.0
        %2158 = vmatprep.subr.mxu0 0.0
        %2159 = vmatpush1.msra.mxu0 0.0
        %2160 = vmatprep.subr.mxu0 0.0
        %2161 = vmatpush1.msra.mxu0 0.0
        %2162 = vmatprep.subr.mxu0 0.0
        %2163 = vmatpush1.msra.mxu0 0.0
        %2164 = vmatprep.subr.mxu0 0.0
        %2165 = vmatpush1.msra.mxu0 0.0
        %2166 = vmatprep.subr.mxu0 0.0
        %2167 = vmatpush1.msra.mxu0 0.0
        %2168 = vmatprep.subr.mxu0 0.0
        %2169 = vmatpush1.msra.mxu0 0.0
        %2170 = vmatprep.subr.mxu0 0.0
        %2171 = vmatpush1.msra.mxu0 0.0
        %2172 = vmatprep.subr.mxu0 0.0
        %2173 = vmatpush1.msra.mxu0 0.0
        %2174 = vmatprep.subr.mxu0 0.0
        %2175 = vmatpush1.msra.mxu0 0.0
        %2176 = vmatprep.subr.mxu0 0.0
        %2177 = vmatpush1.msra.mxu0 0.0
        %2178 = vmatprep.subr.mxu0 0.0
        %2179 = vmatpush1.msra.mxu0 0.0
        %2180 = vmatprep.subr.mxu0 0.0
        %2181 = vmatpush1.msra.mxu0 0.0
        %2182 = vmatprep.subr.mxu0 0.0
        %2183 = vmatpush1.msra.mxu0 0.0
        %2184 = vmatprep.subr.mxu0 0.0
        %2185 = vmatpush1.msra.mxu0 0.0
        %2186 = vmatprep.subr.mxu0 0.0
        %2187 = vmatpush1.msra.mxu0 0.0
        %2188 = vmatprep.subr.mxu0 0.0
        %2189 = vmatpush1.msra.mxu0 0.0
        %2190 = vmatprep.subr.mxu0 0.0
        %2191 = vmatpush1.msra.mxu0 0.0
        %2192 = vmatprep.subr.mxu0 0.0
        %2193 = vmatpush1.msra.mxu0 0.0
        %2194 = vmatprep.subr.mxu0 0.0
        %2195 = vmatpush1.msra.mxu0 0.0
        %2196 = vmatprep.subr.mxu0 0.0
        %2197 = vmatpush1.msra.mxu0 0.0
        %2198 = vmatprep.subr.mxu0 0.0
        %2199 = vmatpush1.msra.mxu0 0.0
        %2200 = vmatprep.subr.mxu0 0.0
        %2201 = vmatpush1.msra.mxu0 0.0
        %2202 = vmatprep.subr.mxu0 0.0
        %2203 = vmatpush1.msra.mxu0 0.0
        %2204 = vmatprep.subr.mxu0 0.0
        %2205 = vmatpush1.msra.mxu0 0.0
        %2206 = vmatprep.subr.mxu0 0.0
        %2207 = vmatpush1.msra.mxu0 0.0
        %2208 = vmatprep.subr.mxu0 0.0
        %2209 = vmatpush1.msra.mxu0 0.0
        %2210 = vmatprep.mubr.f32.mxu0 0.0
        %2211 = vmatmul.mubr.f32.gmra.mrb[0].mxu0 %v2142
        %v2212 = vpop.f32.mrb[0].mxu0
        %v2213 = vadd.f32 0.0, %v2212
        %v2214 = vpop.f32.mrb[0].mxu0
        %2215 = vdwg.mxu0
        %2216 = vrot.lane.b32.xlu0 %v1786, 64
        %v2217 = vpop.permute.xlu0 %2216
        %v2219 = vsel %vm843, %v2136, 0
        %v2221 = vsel %vm847, %v2217, 0
        %2223 = vmatprep.subr.mxu0 0.0
        %2224 = vmatpush1.msra.mxu0 %v2221
        %2225 = vmatprep.subr.mxu0 0.0
        %2226 = vmatpush1.msra.mxu0 0.0
        %2227 = vmatprep.subr.mxu0 0.0
        %2228 = vmatpush1.msra.mxu0 0.0
        %2229 = vmatprep.subr.mxu0 0.0
        %2230 = vmatpush1.msra.mxu0 0.0
        %2231 = vmatprep.subr.mxu0 0.0
        %2232 = vmatpush1.msra.mxu0 0.0
        %2233 = vmatprep.subr.mxu0 0.0
        %2234 = vmatpush1.msra.mxu0 0.0
        %2235 = vmatprep.subr.mxu0 0.0
        %2236 = vmatpush1.msra.mxu0 0.0
        %2237 = vmatprep.subr.mxu0 0.0
        %2238 = vmatpush1.msra.mxu0 0.0
        %2239 = vmatprep.subr.mxu0 0.0
        %2240 = vmatpush1.msra.mxu0 0.0
        %2241 = vmatprep.subr.mxu0 0.0
        %2242 = vmatpush1.msra.mxu0 0.0
        %2243 = vmatprep.subr.mxu0 0.0
        %2244 = vmatpush1.msra.mxu0 0.0
        %2245 = vmatprep.subr.mxu0 0.0
        %2246 = vmatpush1.msra.mxu0 0.0
        %2247 = vmatprep.subr.mxu0 0.0
        %2248 = vmatpush1.msra.mxu0 0.0
        %2249 = vmatprep.subr.mxu0 0.0
        %2250 = vmatpush1.msra.mxu0 0.0
        %2251 = vmatprep.subr.mxu0 0.0
        %2252 = vmatpush1.msra.mxu0 0.0
        %2253 = vmatprep.subr.mxu0 0.0
        %2254 = vmatpush1.msra.mxu0 0.0
        %2255 = vmatprep.subr.mxu0 0.0
        %2256 = vmatpush1.msra.mxu0 0.0
        %2257 = vmatprep.subr.mxu0 0.0
        %2258 = vmatpush1.msra.mxu0 0.0
        %2259 = vmatprep.subr.mxu0 0.0
        %2260 = vmatpush1.msra.mxu0 0.0
        %2261 = vmatprep.subr.mxu0 0.0
        %2262 = vmatpush1.msra.mxu0 0.0
        %2263 = vmatprep.subr.mxu0 0.0
        %2264 = vmatpush1.msra.mxu0 0.0
        %2265 = vmatprep.subr.mxu0 0.0
        %2266 = vmatpush1.msra.mxu0 0.0
        %2267 = vmatprep.subr.mxu0 0.0
        %2268 = vmatpush1.msra.mxu0 0.0
        %2269 = vmatprep.subr.mxu0 0.0
        %2270 = vmatpush1.msra.mxu0 0.0
        %2271 = vmatprep.subr.mxu0 0.0
        %2272 = vmatpush1.msra.mxu0 0.0
        %2273 = vmatprep.subr.mxu0 0.0
        %2274 = vmatpush1.msra.mxu0 0.0
        %2275 = vmatprep.subr.mxu0 0.0
        %2276 = vmatpush1.msra.mxu0 0.0
        %2277 = vmatprep.subr.mxu0 0.0
        %2278 = vmatpush1.msra.mxu0 0.0
        %2279 = vmatprep.subr.mxu0 0.0
        %2280 = vmatpush1.msra.mxu0 0.0
        %2281 = vmatprep.subr.mxu0 0.0
        %2282 = vmatpush1.msra.mxu0 0.0
        %2283 = vmatprep.subr.mxu0 0.0
        %2284 = vmatpush1.msra.mxu0 0.0
        %2285 = vmatprep.subr.mxu0 0.0
        %2286 = vmatpush1.msra.mxu0 0.0
        %2287 = vmatprep.mubr.f32.mxu0 0.0
        %2288 = vmatmul.mubr.f32.gmra.mrb[0].mxu0 %v2219
        %v2289 = vpop.f32.mrb[0].mxu0
        %v2290 = vadd.f32 0.0, %v2289
        %v2291 = vpop.f32.mrb[0].mxu0
        %2292 = vdwg.mxu0
        %2293 = vrot.lane.b32.xlu0 %v1788, 64
        %v2294 = vpop.permute.xlu0 %2293
        %v2296 = vsel %vm843, %v2137, 0
        %v2298 = vsel %vm847, %v2294, 0
        %2300 = vmatprep.subr.mxu0 0.0
        %2301 = vmatpush1.msra.mxu0 %v2298
        %2302 = vmatprep.subr.mxu0 0.0
        %2303 = vmatpush1.msra.mxu0 0.0
        %2304 = vmatprep.subr.mxu0 0.0
        %2305 = vmatpush1.msra.mxu0 0.0
        %2306 = vmatprep.subr.mxu0 0.0
        %2307 = vmatpush1.msra.mxu0 0.0
        %2308 = vmatprep.subr.mxu0 0.0
        %2309 = vmatpush1.msra.mxu0 0.0
        %2310 = vmatprep.subr.mxu0 0.0
        %2311 = vmatpush1.msra.mxu0 0.0
        %2312 = vmatprep.subr.mxu0 0.0
        %2313 = vmatpush1.msra.mxu0 0.0
        %2314 = vmatprep.subr.mxu0 0.0
        %2315 = vmatpush1.msra.mxu0 0.0
        %2316 = vmatprep.subr.mxu0 0.0
        %2317 = vmatpush1.msra.mxu0 0.0
        %2318 = vmatprep.subr.mxu0 0.0
        %2319 = vmatpush1.msra.mxu0 0.0
        %2320 = vmatprep.subr.mxu0 0.0
        %2321 = vmatpush1.msra.mxu0 0.0
        %2322 = vmatprep.subr.mxu0 0.0
        %2323 = vmatpush1.msra.mxu0 0.0
        %2324 = vmatprep.subr.mxu0 0.0
        %2325 = vmatpush1.msra.mxu0 0.0
        %2326 = vmatprep.subr.mxu0 0.0
        %2327 = vmatpush1.msra.mxu0 0.0
        %2328 = vmatprep.subr.mxu0 0.0
        %2329 = vmatpush1.msra.mxu0 0.0
        %2330 = vmatprep.subr.mxu0 0.0
        %2331 = vmatpush1.msra.mxu0 0.0
        %2332 = vmatprep.subr.mxu0 0.0
        %2333 = vmatpush1.msra.mxu0 0.0
        %2334 = vmatprep.subr.mxu0 0.0
        %2335 = vmatpush1.msra.mxu0 0.0
        %2336 = vmatprep.subr.mxu0 0.0
        %2337 = vmatpush1.msra.mxu0 0.0
        %2338 = vmatprep.subr.mxu0 0.0
        %2339 = vmatpush1.msra.mxu0 0.0
        %2340 = vmatprep.subr.mxu0 0.0
        %2341 = vmatpush1.msra.mxu0 0.0
        %2342 = vmatprep.subr.mxu0 0.0
        %2343 = vmatpush1.msra.mxu0 0.0
        %2344 = vmatprep.subr.mxu0 0.0
        %2345 = vmatpush1.msra.mxu0 0.0
        %2346 = vmatprep.subr.mxu0 0.0
        %2347 = vmatpush1.msra.mxu0 0.0
        %2348 = vmatprep.subr.mxu0 0.0
        %2349 = vmatpush1.msra.mxu0 0.0
        %2350 = vmatprep.subr.mxu0 0.0
        %2351 = vmatpush1.msra.mxu0 0.0
        %2352 = vmatprep.subr.mxu0 0.0
        %2353 = vmatpush1.msra.mxu0 0.0
        %2354 = vmatprep.subr.mxu0 0.0
        %2355 = vmatpush1.msra.mxu0 0.0
        %2356 = vmatprep.subr.mxu0 0.0
        %2357 = vmatpush1.msra.mxu0 0.0
        %2358 = vmatprep.subr.mxu0 0.0
        %2359 = vmatpush1.msra.mxu0 0.0
        %2360 = vmatprep.subr.mxu0 0.0
        %2361 = vmatpush1.msra.mxu0 0.0
        %2362 = vmatprep.subr.mxu0 0.0
        %2363 = vmatpush1.msra.mxu0 0.0
        %2364 = vmatprep.mubr.f32.mxu0 0.0
        %2365 = vmatmul.mubr.f32.gmra.mrb[0].mxu0 %v2296
        %v2366 = vpop.f32.mrb[0].mxu0
        %v2367 = vadd.f32 0.0, %v2366
        %v2368 = vpop.f32.mrb[0].mxu0
        %2369 = vdwg.mxu0
        %2370 = vrot.lane.b32.xlu0 %v1790, 64
        %v2371 = vpop.permute.xlu0 %2370
        %v2373 = vsel %vm843, %v2138, 0
        %v2375 = vsel %vm847, %v2371, 0
        %2377 = vmatprep.subr.mxu0 0.0
        %2378 = vmatpush1.msra.mxu0 %v2375
        %2379 = vmatprep.subr.mxu0 0.0
        %2380 = vmatpush1.msra.mxu0 0.0
        %2381 = vmatprep.subr.mxu0 0.0
        %2382 = vmatpush1.msra.mxu0 0.0
        %2383 = vmatprep.subr.mxu0 0.0
        %2384 = vmatpush1.msra.mxu0 0.0
        %2385 = vmatprep.subr.mxu0 0.0
        %2386 = vmatpush1.msra.mxu0 0.0
        %2387 = vmatprep.subr.mxu0 0.0
        %2388 = vmatpush1.msra.mxu0 0.0
        %2389 = vmatprep.subr.mxu0 0.0
        %2390 = vmatpush1.msra.mxu0 0.0
        %2391 = vmatprep.subr.mxu0 0.0
        %2392 = vmatpush1.msra.mxu0 0.0
        %2393 = vmatprep.subr.mxu0 0.0
        %2394 = vmatpush1.msra.mxu0 0.0
        %2395 = vmatprep.subr.mxu0 0.0
        %2396 = vmatpush1.msra.mxu0 0.0
        %2397 = vmatprep.subr.mxu0 0.0
        %2398 = vmatpush1.msra.mxu0 0.0
        %2399 = vmatprep.subr.mxu0 0.0
        %2400 = vmatpush1.msra.mxu0 0.0
        %2401 = vmatprep.subr.mxu0 0.0
        %2402 = vmatpush1.msra.mxu0 0.0
        %2403 = vmatprep.subr.mxu0 0.0
        %2404 = vmatpush1.msra.mxu0 0.0
        %2405 = vmatprep.subr.mxu0 0.0
        %2406 = vmatpush1.msra.mxu0 0.0
        %2407 = vmatprep.subr.mxu0 0.0
        %2408 = vmatpush1.msra.mxu0 0.0
        %2409 = vmatprep.subr.mxu0 0.0
        %2410 = vmatpush1.msra.mxu0 0.0
        %2411 = vmatprep.subr.mxu0 0.0
        %2412 = vmatpush1.msra.mxu0 0.0
        %2413 = vmatprep.subr.mxu0 0.0
        %2414 = vmatpush1.msra.mxu0 0.0
        %2415 = vmatprep.subr.mxu0 0.0
        %2416 = vmatpush1.msra.mxu0 0.0
        %2417 = vmatprep.subr.mxu0 0.0
        %2418 = vmatpush1.msra.mxu0 0.0
        %2419 = vmatprep.subr.mxu0 0.0
        %2420 = vmatpush1.msra.mxu0 0.0
        %2421 = vmatprep.subr.mxu0 0.0
        %2422 = vmatpush1.msra.mxu0 0.0
        %2423 = vmatprep.subr.mxu0 0.0
        %2424 = vmatpush1.msra.mxu0 0.0
        %2425 = vmatprep.subr.mxu0 0.0
        %2426 = vmatpush1.msra.mxu0 0.0
        %2427 = vmatprep.subr.mxu0 0.0
        %2428 = vmatpush1.msra.mxu0 0.0
        %2429 = vmatprep.subr.mxu0 0.0
        %2430 = vmatpush1.msra.mxu0 0.0
        %2431 = vmatprep.subr.mxu0 0.0
        %2432 = vmatpush1.msra.mxu0 0.0
        %2433 = vmatprep.subr.mxu0 0.0
        %2434 = vmatpush1.msra.mxu0 0.0
        %2435 = vmatprep.subr.mxu0 0.0
        %2436 = vmatpush1.msra.mxu0 0.0
        %2437 = vmatprep.subr.mxu0 0.0
        %2438 = vmatpush1.msra.mxu0 0.0
        %2439 = vmatprep.subr.mxu0 0.0
        %2440 = vmatpush1.msra.mxu0 0.0
        %2441 = vmatprep.mubr.f32.mxu0 0.0
        %2442 = vmatmul.mubr.f32.gmra.mrb[0].mxu0 %v2373
        %v2443 = vpop.f32.mrb[0].mxu0
        %v2444 = vadd.f32 0.0, %v2443
        %v2445 = vpop.f32.mrb[0].mxu0
        %2446 = vdwg.mxu0
        %s2447 = scalar_lea.vmem %s4, 32
        %v2448 = vld [vmem:[%s2447] sm:$0xff]
        %v2449 = vld [vmem:[%s2447 + $0x8] sm:$0xff]
        %v2450 = vld [vmem:[%s2447 + $0x10] sm:$0xff]
        %v2451 = vld [vmem:[%s2447 + $0x18] sm:$0xff]
        %v2453 = vsel %vm493, %v2213, 0
        %2455 = vmatprep.subr.mxu0 0.0
        %2456 = vmatpush1.msra.mxu0 %v2448
        %2457 = vmatprep.subr.mxu0 0.0
        %2458 = vmatpush1.msra.mxu0 0.0
        %2459 = vmatprep.subr.mxu0 0.0
        %2460 = vmatpush1.msra.mxu0 0.0
        %2461 = vmatprep.subr.mxu0 0.0
        %2462 = vmatpush1.msra.mxu0 0.0
        %2463 = vmatprep.subr.mxu0 0.0
        %2464 = vmatpush1.msra.mxu0 0.0
        %2465 = vmatprep.subr.mxu0 0.0
        %2466 = vmatpush1.msra.mxu0 0.0
        %2467 = vmatprep.subr.mxu0 0.0
        %2468 = vmatpush1.msra.mxu0 0.0
        %2469 = vmatprep.subr.mxu0 0.0
        %2470 = vmatpush1.msra.mxu0 0.0
        %2471 = vmatprep.subr.mxu0 0.0
        %2472 = vmatpush1.msra.mxu0 0.0
        %2473 = vmatprep.subr.mxu0 0.0
        %2474 = vmatpush1.msra.mxu0 0.0
        %2475 = vmatprep.subr.mxu0 0.0
        %2476 = vmatpush1.msra.mxu0 0.0
        %2477 = vmatprep.subr.mxu0 0.0
        %2478 = vmatpush1.msra.mxu0 0.0
        %2479 = vmatprep.subr.mxu0 0.0
        %2480 = vmatpush1.msra.mxu0 0.0
        %2481 = vmatprep.subr.mxu0 0.0
        %2482 = vmatpush1.msra.mxu0 0.0
        %2483 = vmatprep.subr.mxu0 0.0
        %2484 = vmatpush1.msra.mxu0 0.0
        %2485 = vmatprep.subr.mxu0 0.0
        %2486 = vmatpush1.msra.mxu0 0.0
        %2487 = vmatprep.subr.mxu0 0.0
        %2488 = vmatpush1.msra.mxu0 0.0
        %2489 = vmatprep.subr.mxu0 0.0
        %2490 = vmatpush1.msra.mxu0 0.0
        %2491 = vmatprep.subr.mxu0 0.0
        %2492 = vmatpush1.msra.mxu0 0.0
        %2493 = vmatprep.subr.mxu0 0.0
        %2494 = vmatpush1.msra.mxu0 0.0
        %2495 = vmatprep.subr.mxu0 0.0
        %2496 = vmatpush1.msra.mxu0 0.0
        %2497 = vmatprep.subr.mxu0 0.0
        %2498 = vmatpush1.msra.mxu0 0.0
        %2499 = vmatprep.subr.mxu0 0.0
        %2500 = vmatpush1.msra.mxu0 0.0
        %2501 = vmatprep.subr.mxu0 0.0
        %2502 = vmatpush1.msra.mxu0 0.0
        %2503 = vmatprep.subr.mxu0 0.0
        %2504 = vmatpush1.msra.mxu0 0.0
        %2505 = vmatprep.subr.mxu0 0.0
        %2506 = vmatpush1.msra.mxu0 0.0
        %2507 = vmatprep.subr.mxu0 0.0
        %2508 = vmatpush1.msra.mxu0 0.0
        %2509 = vmatprep.subr.mxu0 0.0
        %2510 = vmatpush1.msra.mxu0 0.0
        %2511 = vmatprep.subr.mxu0 0.0
        %2512 = vmatpush1.msra.mxu0 0.0
        %2513 = vmatprep.subr.mxu0 0.0
        %2514 = vmatpush1.msra.mxu0 0.0
        %2515 = vmatprep.subr.mxu0 0.0
        %2516 = vmatpush1.msra.mxu0 0.0
        %2517 = vmatprep.subr.mxu0 0.0
        %2518 = vmatpush1.msra.mxu0 0.0
        %2519 = vmatprep.mubr.f32.mxu0 0.0
        %2520 = vmatmul.mubr.f32.gmra.mrb[0].mxu0 %v2453
        %v2521 = vpop.f32.mrb[0].mxu0
        %v2522 = vadd.f32 0.0, %v2521
        %v2523 = vpop.f32.mrb[0].mxu0
        %2524 = vdwg.mxu0
        %v2526 = vsel %vm493, %v2290, 0
        %2528 = vmatprep.subr.mxu0 0.0
        %2529 = vmatpush1.msra.mxu0 %v2449
        %2530 = vmatprep.subr.mxu0 0.0
        %2531 = vmatpush1.msra.mxu0 0.0
        %2532 = vmatprep.subr.mxu0 0.0
        %2533 = vmatpush1.msra.mxu0 0.0
        %2534 = vmatprep.subr.mxu0 0.0
        %2535 = vmatpush1.msra.mxu0 0.0
        %2536 = vmatprep.subr.mxu0 0.0
        %2537 = vmatpush1.msra.mxu0 0.0
        %2538 = vmatprep.subr.mxu0 0.0
        %2539 = vmatpush1.msra.mxu0 0.0
        %2540 = vmatprep.subr.mxu0 0.0
        %2541 = vmatpush1.msra.mxu0 0.0
        %2542 = vmatprep.subr.mxu0 0.0
        %2543 = vmatpush1.msra.mxu0 0.0
        %2544 = vmatprep.subr.mxu0 0.0
        %2545 = vmatpush1.msra.mxu0 0.0
        %2546 = vmatprep.subr.mxu0 0.0
        %2547 = vmatpush1.msra.mxu0 0.0
        %2548 = vmatprep.subr.mxu0 0.0
        %2549 = vmatpush1.msra.mxu0 0.0
        %2550 = vmatprep.subr.mxu0 0.0
        %2551 = vmatpush1.msra.mxu0 0.0
        %2552 = vmatprep.subr.mxu0 0.0
        %2553 = vmatpush1.msra.mxu0 0.0
        %2554 = vmatprep.subr.mxu0 0.0
        %2555 = vmatpush1.msra.mxu0 0.0
        %2556 = vmatprep.subr.mxu0 0.0
        %2557 = vmatpush1.msra.mxu0 0.0
        %2558 = vmatprep.subr.mxu0 0.0
        %2559 = vmatpush1.msra.mxu0 0.0
        %2560 = vmatprep.subr.mxu0 0.0
        %2561 = vmatpush1.msra.mxu0 0.0
        %2562 = vmatprep.subr.mxu0 0.0
        %2563 = vmatpush1.msra.mxu0 0.0
        %2564 = vmatprep.subr.mxu0 0.0
        %2565 = vmatpush1.msra.mxu0 0.0
        %2566 = vmatprep.subr.mxu0 0.0
        %2567 = vmatpush1.msra.mxu0 0.0
        %2568 = vmatprep.subr.mxu0 0.0
        %2569 = vmatpush1.msra.mxu0 0.0
        %2570 = vmatprep.subr.mxu0 0.0
        %2571 = vmatpush1.msra.mxu0 0.0
        %2572 = vmatprep.subr.mxu0 0.0
        %2573 = vmatpush1.msra.mxu0 0.0
        %2574 = vmatprep.subr.mxu0 0.0
        %2575 = vmatpush1.msra.mxu0 0.0
        %2576 = vmatprep.subr.mxu0 0.0
        %2577 = vmatpush1.msra.mxu0 0.0
        %2578 = vmatprep.subr.mxu0 0.0
        %2579 = vmatpush1.msra.mxu0 0.0
        %2580 = vmatprep.subr.mxu0 0.0
        %2581 = vmatpush1.msra.mxu0 0.0
        %2582 = vmatprep.subr.mxu0 0.0
        %2583 = vmatpush1.msra.mxu0 0.0
        %2584 = vmatprep.subr.mxu0 0.0
        %2585 = vmatpush1.msra.mxu0 0.0
        %2586 = vmatprep.subr.mxu0 0.0
        %2587 = vmatpush1.msra.mxu0 0.0
        %2588 = vmatprep.subr.mxu0 0.0
        %2589 = vmatpush1.msra.mxu0 0.0
        %2590 = vmatprep.subr.mxu0 0.0
        %2591 = vmatpush1.msra.mxu0 0.0
        %2592 = vmatprep.mubr.f32.mxu0 0.0
        %2593 = vmatmul.mubr.f32.gmra.mrb[0].mxu0 %v2526
        %v2594 = vpop.f32.mrb[0].mxu0
        %v2595 = vadd.f32 0.0, %v2594
        %v2596 = vpop.f32.mrb[0].mxu0
        %2597 = vdwg.mxu0
        %v2599 = vsel %vm493, %v2367, 0
        %2601 = vmatprep.subr.mxu0 0.0
        %2602 = vmatpush1.msra.mxu0 %v2450
        %2603 = vmatprep.subr.mxu0 0.0
        %2604 = vmatpush1.msra.mxu0 0.0
        %2605 = vmatprep.subr.mxu0 0.0
        %2606 = vmatpush1.msra.mxu0 0.0
        %2607 = vmatprep.subr.mxu0 0.0
        %2608 = vmatpush1.msra.mxu0 0.0
        %2609 = vmatprep.subr.mxu0 0.0
        %2610 = vmatpush1.msra.mxu0 0.0
        %2611 = vmatprep.subr.mxu0 0.0
        %2612 = vmatpush1.msra.mxu0 0.0
        %2613 = vmatprep.subr.mxu0 0.0
        %2614 = vmatpush1.msra.mxu0 0.0
        %2615 = vmatprep.subr.mxu0 0.0
        %2616 = vmatpush1.msra.mxu0 0.0
        %2617 = vmatprep.subr.mxu0 0.0
        %2618 = vmatpush1.msra.mxu0 0.0
        %2619 = vmatprep.subr.mxu0 0.0
        %2620 = vmatpush1.msra.mxu0 0.0
        %2621 = vmatprep.subr.mxu0 0.0
        %2622 = vmatpush1.msra.mxu0 0.0
        %2623 = vmatprep.subr.mxu0 0.0
        %2624 = vmatpush1.msra.mxu0 0.0
        %2625 = vmatprep.subr.mxu0 0.0
        %2626 = vmatpush1.msra.mxu0 0.0
        %2627 = vmatprep.subr.mxu0 0.0
        %2628 = vmatpush1.msra.mxu0 0.0
        %2629 = vmatprep.subr.mxu0 0.0
        %2630 = vmatpush1.msra.mxu0 0.0
        %2631 = vmatprep.subr.mxu0 0.0
        %2632 = vmatpush1.msra.mxu0 0.0
        %2633 = vmatprep.subr.mxu0 0.0
        %2634 = vmatpush1.msra.mxu0 0.0
        %2635 = vmatprep.subr.mxu0 0.0
        %2636 = vmatpush1.msra.mxu0 0.0
        %2637 = vmatprep.subr.mxu0 0.0
        %2638 = vmatpush1.msra.mxu0 0.0
        %2639 = vmatprep.subr.mxu0 0.0
        %2640 = vmatpush1.msra.mxu0 0.0
        %2641 = vmatprep.subr.mxu0 0.0
        %2642 = vmatpush1.msra.mxu0 0.0
        %2643 = vmatprep.subr.mxu0 0.0
        %2644 = vmatpush1.msra.mxu0 0.0
        %2645 = vmatprep.subr.mxu0 0.0
        %2646 = vmatpush1.msra.mxu0 0.0
        %2647 = vmatprep.subr.mxu0 0.0
        %2648 = vmatpush1.msra.mxu0 0.0
        %2649 = vmatprep.subr.mxu0 0.0
        %2650 = vmatpush1.msra.mxu0 0.0
        %2651 = vmatprep.subr.mxu0 0.0
        %2652 = vmatpush1.msra.mxu0 0.0
        %2653 = vmatprep.subr.mxu0 0.0
        %2654 = vmatpush1.msra.mxu0 0.0
        %2655 = vmatprep.subr.mxu0 0.0
        %2656 = vmatpush1.msra.mxu0 0.0
        %2657 = vmatprep.subr.mxu0 0.0
        %2658 = vmatpush1.msra.mxu0 0.0
        %2659 = vmatprep.subr.mxu0 0.0
        %2660 = vmatpush1.msra.mxu0 0.0
        %2661 = vmatprep.subr.mxu0 0.0
        %2662 = vmatpush1.msra.mxu0 0.0
        %2663 = vmatprep.subr.mxu0 0.0
        %2664 = vmatpush1.msra.mxu0 0.0
        %2665 = vmatprep.mubr.f32.mxu0 0.0
        %2666 = vmatmul.mubr.f32.gmra.mrb[0].mxu0 %v2599
        %v2667 = vpop.f32.mrb[0].mxu0
        %v2668 = vadd.f32 0.0, %v2667
        %v2669 = vpop.f32.mrb[0].mxu0
        %2670 = vdwg.mxu0
        %v2672 = vsel %vm493, %v2444, 0
        %2674 = vmatprep.subr.mxu0 0.0
        %2675 = vmatpush1.msra.mxu0 %v2451
        %2676 = vmatprep.subr.mxu0 0.0
        %2677 = vmatpush1.msra.mxu0 0.0
        %2678 = vmatprep.subr.mxu0 0.0
        %2679 = vmatpush1.msra.mxu0 0.0
        %2680 = vmatprep.subr.mxu0 0.0
        %2681 = vmatpush1.msra.mxu0 0.0
        %2682 = vmatprep.subr.mxu0 0.0
        %2683 = vmatpush1.msra.mxu0 0.0
        %2684 = vmatprep.subr.mxu0 0.0
        %2685 = vmatpush1.msra.mxu0 0.0
        %2686 = vmatprep.subr.mxu0 0.0
        %2687 = vmatpush1.msra.mxu0 0.0
        %2688 = vmatprep.subr.mxu0 0.0
        %2689 = vmatpush1.msra.mxu0 0.0
        %2690 = vmatprep.subr.mxu0 0.0
        %2691 = vmatpush1.msra.mxu0 0.0
        %2692 = vmatprep.subr.mxu0 0.0
        %2693 = vmatpush1.msra.mxu0 0.0
        %2694 = vmatprep.subr.mxu0 0.0
        %2695 = vmatpush1.msra.mxu0 0.0
        %2696 = vmatprep.subr.mxu0 0.0
        %2697 = vmatpush1.msra.mxu0 0.0
        %2698 = vmatprep.subr.mxu0 0.0
        %2699 = vmatpush1.msra.mxu0 0.0
        %2700 = vmatprep.subr.mxu0 0.0
        %2701 = vmatpush1.msra.mxu0 0.0
        %2702 = vmatprep.subr.mxu0 0.0
        %2703 = vmatpush1.msra.mxu0 0.0
        %2704 = vmatprep.subr.mxu0 0.0
        %2705 = vmatpush1.msra.mxu0 0.0
        %2706 = vmatprep.subr.mxu0 0.0
        %2707 = vmatpush1.msra.mxu0 0.0
        %2708 = vmatprep.subr.mxu0 0.0
        %2709 = vmatpush1.msra.mxu0 0.0
        %2710 = vmatprep.subr.mxu0 0.0
        %2711 = vmatpush1.msra.mxu0 0.0
        %2712 = vmatprep.subr.mxu0 0.0
        %2713 = vmatpush1.msra.mxu0 0.0
        %2714 = vmatprep.subr.mxu0 0.0
        %2715 = vmatpush1.msra.mxu0 0.0
        %2716 = vmatprep.subr.mxu0 0.0
        %2717 = vmatpush1.msra.mxu0 0.0
        %2718 = vmatprep.subr.mxu0 0.0
        %2719 = vmatpush1.msra.mxu0 0.0
        %2720 = vmatprep.subr.mxu0 0.0
        %2721 = vmatpush1.msra.mxu0 0.0
        %2722 = vmatprep.subr.mxu0 0.0
        %2723 = vmatpush1.msra.mxu0 0.0
        %2724 = vmatprep.subr.mxu0 0.0
        %2725 = vmatpush1.msra.mxu0 0.0
        %2726 = vmatprep.subr.mxu0 0.0
        %2727 = vmatpush1.msra.mxu0 0.0
        %2728 = vmatprep.subr.mxu0 0.0
        %2729 = vmatpush1.msra.mxu0 0.0
        %2730 = vmatprep.subr.mxu0 0.0
        %2731 = vmatpush1.msra.mxu0 0.0
        %2732 = vmatprep.subr.mxu0 0.0
        %2733 = vmatpush1.msra.mxu0 0.0
        %2734 = vmatprep.subr.mxu0 0.0
        %2735 = vmatpush1.msra.mxu0 0.0
        %2736 = vmatprep.subr.mxu0 0.0
        %2737 = vmatpush1.msra.mxu0 0.0
        %2738 = vmatprep.mubr.f32.mxu0 0.0
        %2739 = vmatmul.mubr.f32.gmra.mrb[0].mxu0 %v2672
        %v2740 = vpop.f32.mrb[0].mxu0
        %v2741 = vadd.f32 0.0, %v2740
        %v2742 = vpop.f32.mrb[0].mxu0
        %2743 = vdwg.mxu0
        %v2744 = vsel %vm1447, %v2522, 0.0
        %v2745 = vsel %vm1447, %v2595, 0.0
        %v2746 = vadd.f32 %v2744, %v2745
        %v2747 = vsel %vm1447, %v2668, 0.0
        %v2748 = vadd.f32 %v2746, %v2747
        %v2749 = vsel %vm1447, %v2741, 0.0
        %v2750 = vadd.f32 %v2748, %v2749
        %v2751 = vlaneseq
        %v2752 = vshrl.u32 %v2751, 7
        %v2753 = vsub.s32 0, %v2752
        %v2754 = vrot.slane %v302, %v2753
        %v2755 = vadd.f32 %v2750, %v2754
        %v2756 = vadd.f32 %v1701, %v2755
        %v2757 = vsel %vm1447, %v2756, 0.0
        %2758 = vadd.xlane.f32.xlu0 %v2757
        %v2759 = vpop.xlane.xlu0 %2758
        %v2760 = vmul.f32 %v2759, %v1464
        %v2761 = vsub.f32 %v2756, %v2760
        %v2762 = vmul.f32 %v2761, %v2761
        %v2763 = vsel %vm1447, %v2762, 0.0
        %2764 = vadd.xlane.f32.xlu0 %v2763
        %v2765 = vpop.xlane.xlu0 %2764
        %v2766 = vmul.f32 %v2765, %v1464
        %v2767 = vadd.f32 %v2766, 1e-05
        %v2768 = vrsqrt.pop %v2767
        %v2769 = vmul.f32 %v2761, %v2768
        %v2770 = vlaneseq
        %v2771 = vshrl.u32 %v2770, 7
        %v2772 = vsub.s32 3, %v2771
        %v2773 = vrot.slane %v302, %v2772
        %v2774 = vmul.f32 %v2769, %v2773
        %v2775 = vlaneseq
        %v2776 = vshrl.u32 %v2775, 7
        %v2777 = vsub.s32 4, %v2776
        %v2778 = vrot.slane %v302, %v2777
        %v2779 = vadd.f32 %v2774, %v2778
        %s2780 = scalar_lea.vmem %s5, 32
        %v2781 = vld [vmem:[%s2780] sm:$0xff]
        %v2782 = vld [vmem:[%s2780 + $0x8] sm:$0xff]
        %v2783 = vld [vmem:[%s2780 + $0x10] sm:$0xff]
        %v2784 = vld [vmem:[%s2780 + $0x18] sm:$0xff]
        %v2785 = vlaneseq
        %v2786 = vshrl.u32 %v2785, 7
        %v2787 = vsub.s32 1, %v2786
        %v2788 = vrot.slane %v302, %v2787
        %v2790 = vsel %vm410, %v2779, 0
        %2792 = vmatprep.subr.mxu0 0.0
        %2793 = vmatpush1.msra.mxu0 %v2781
        %2794 = vmatprep.subr.mxu0 0.0
        %2795 = vmatpush1.msra.mxu0 %v2782
        %2796 = vmatprep.subr.mxu0 0.0
        %2797 = vmatpush1.msra.mxu0 %v2783
        %2798 = vmatprep.subr.mxu0 0.0
        %2799 = vmatpush1.msra.mxu0 %v2784
        %2800 = vmatprep.subr.mxu0 0.0
        %2801 = vmatpush1.msra.mxu0 0.0
        %2802 = vmatprep.subr.mxu0 0.0
        %2803 = vmatpush1.msra.mxu0 0.0
        %2804 = vmatprep.subr.mxu0 0.0
        %2805 = vmatpush1.msra.mxu0 0.0
        %2806 = vmatprep.subr.mxu0 0.0
        %2807 = vmatpush1.msra.mxu0 0.0
        %2808 = vmatprep.subr.mxu0 0.0
        %2809 = vmatpush1.msra.mxu0 0.0
        %2810 = vmatprep.subr.mxu0 0.0
        %2811 = vmatpush1.msra.mxu0 0.0
        %2812 = vmatprep.subr.mxu0 0.0
        %2813 = vmatpush1.msra.mxu0 0.0
        %2814 = vmatprep.subr.mxu0 0.0
        %2815 = vmatpush1.msra.mxu0 0.0
        %2816 = vmatprep.subr.mxu0 0.0
        %2817 = vmatpush1.msra.mxu0 0.0
        %2818 = vmatprep.subr.mxu0 0.0
        %2819 = vmatpush1.msra.mxu0 0.0
        %2820 = vmatprep.subr.mxu0 0.0
        %2821 = vmatpush1.msra.mxu0 0.0
        %2822 = vmatprep.subr.mxu0 0.0
        %2823 = vmatpush1.msra.mxu0 0.0
        %2824 = vmatprep.subr.mxu0 0.0
        %2825 = vmatpush1.msra.mxu0 0.0
        %2826 = vmatprep.subr.mxu0 0.0
        %2827 = vmatpush1.msra.mxu0 0.0
        %2828 = vmatprep.subr.mxu0 0.0
        %2829 = vmatpush1.msra.mxu0 0.0
        %2830 = vmatprep.subr.mxu0 0.0
        %2831 = vmatpush1.msra.mxu0 0.0
        %2832 = vmatprep.subr.mxu0 0.0
        %2833 = vmatpush1.msra.mxu0 0.0
        %2834 = vmatprep.subr.mxu0 0.0
        %2835 = vmatpush1.msra.mxu0 0.0
        %2836 = vmatprep.subr.mxu0 0.0
        %2837 = vmatpush1.msra.mxu0 0.0
        %2838 = vmatprep.subr.mxu0 0.0
        %2839 = vmatpush1.msra.mxu0 0.0
        %2840 = vmatprep.subr.mxu0 0.0
        %2841 = vmatpush1.msra.mxu0 0.0
        %2842 = vmatprep.subr.mxu0 0.0
        %2843 = vmatpush1.msra.mxu0 0.0
        %2844 = vmatprep.subr.mxu0 0.0
        %2845 = vmatpush1.msra.mxu0 0.0
        %2846 = vmatprep.subr.mxu0 0.0
        %2847 = vmatpush1.msra.mxu0 0.0
        %2848 = vmatprep.subr.mxu0 0.0
        %2849 = vmatpush1.msra.mxu0 0.0
        %2850 = vmatprep.subr.mxu0 0.0
        %2851 = vmatpush1.msra.mxu0 0.0
        %2852 = vmatprep.subr.mxu0 0.0
        %2853 = vmatpush1.msra.mxu0 0.0
        %2854 = vmatprep.subr.mxu0 0.0
        %2855 = vmatpush1.msra.mxu0 0.0
        %2856 = vmatprep.mubr.f32.mxu0 0.0
        %2857 = vmatmul.mubr.f32.gmra.mrb[0].mxu0 %v2790
        %v2858 = vpop.f32.mrb[0].mxu0
        %v2859 = vadd.f32 %v2788, %v2858
        %v2860 = vpop.f32.mrb[0].mxu0
        %2861 = vdwg.mxu0
        %v2862 = vmul.f32 %v2859, 0.5
        %v2863 = vmul.f32 %v2859, 0.70710677
        %vm2864 = vcmp.ge.f32.partialorder %v2863, 0.0
        %v2865 = vsel %vm2864, 1.0, -1.0
        %v2866 = vand.u32 2147483647, %v2863
        %v2867 = vmul.f32 %v2866, 0.3275911
        %v2868 = vadd.f32 %v2867, 1.0
        %v2869 = vrcp.pop %v2868
        %v2870 = vmul.f32 1.0, %v2869
        %v2871 = vmul.f32 %v2870, 1.0614054
        %v2872 = vadd.f32 %v2871, -1.4531521
        %v2873 = vmul.f32 %v2872, %v2870
        %v2874 = vadd.f32 %v2873, 1.4214138
        %v2875 = vmul.f32 %v2874, %v2870
        %v2876 = vadd.f32 %v2875, -0.28449672
        %v2877 = vmul.f32 %v2876, %v2870
        %v2878 = vadd.f32 %v2877, 0.2548296
        %v2879 = vmul.f32 %v2878, %v2870
        %v2880 = vsub.f32 0.0, %v2866
        %v2881 = vmul.f32 %v2880, %v2866
        %v2882 = vmul.f32 %v2881, 1.442695
        %v2883 = vpow.pop %v2882
        %v2884 = vmul.f32 %v2879, %v2883
        %v2885 = vsub.f32 1.0, %v2884
        %v2886 = vmul.f32 %v2865, %v2885
        %v2887 = vadd.f32 %v2886, 1.0
        %v2888 = vmul.f32 %v2862, %v2887
        %s2889 = scalar_lea.vmem %s6, 64
        %v2890 = vld [vmem:[%s2889] sm:$0xff]
        %v2891 = vld [vmem:[%s2889 + $0x8] sm:$0xff]
        %v2892 = vld [vmem:[%s2889 + $0x10] sm:$0xff]
        %v2893 = vld [vmem:[%s2889 + $0x18] sm:$0xff]
        %v2894 = vld [vmem:[%s2889 + $0x20] sm:$0xff]
        %v2895 = vld [vmem:[%s2889 + $0x28] sm:$0xff]
        %v2896 = vld [vmem:[%s2889 + $0x30] sm:$0xff]
        %v2897 = vld [vmem:[%s2889 + $0x38] sm:$0xff]
        %v2898 = vlaneseq
        %v2899 = vshrl.u32 %v2898, 7
        %v2900 = vsub.s32 2, %v2899
        %v2901 = vrot.slane %v302, %v2900
        %v2903 = vsel %vm317, %v2888, 0
        %2905 = vmatprep.subr.mxu0 0.0
        %2906 = vmatpush1.msra.mxu0 %v2890
        %2907 = vmatprep.subr.mxu0 0.0
        %2908 = vmatpush1.msra.mxu0 %v2891
        %2909 = vmatprep.subr.mxu0 0.0
        %2910 = vmatpush1.msra.mxu0 %v2892
        %2911 = vmatprep.subr.mxu0 0.0
        %2912 = vmatpush1.msra.mxu0 %v2893
        %2913 = vmatprep.subr.mxu0 0.0
        %2914 = vmatpush1.msra.mxu0 %v2894
        %2915 = vmatprep.subr.mxu0 0.0
        %2916 = vmatpush1.msra.mxu0 %v2895
        %2917 = vmatprep.subr.mxu0 0.0
        %2918 = vmatpush1.msra.mxu0 %v2896
        %2919 = vmatprep.subr.mxu0 0.0
        %2920 = vmatpush1.msra.mxu0 %v2897
        %2921 = vmatprep.subr.mxu0 0.0
        %2922 = vmatpush1.msra.mxu0 0.0
        %2923 = vmatprep.subr.mxu0 0.0
        %2924 = vmatpush1.msra.mxu0 0.0
        %2925 = vmatprep.subr.mxu0 0.0
        %2926 = vmatpush1.msra.mxu0 0.0
        %2927 = vmatprep.subr.mxu0 0.0
        %2928 = vmatpush1.msra.mxu0 0.0
        %2929 = vmatprep.subr.mxu0 0.0
        %2930 = vmatpush1.msra.mxu0 0.0
        %2931 = vmatprep.subr.mxu0 0.0
        %2932 = vmatpush1.msra.mxu0 0.0
        %2933 = vmatprep.subr.mxu0 0.0
        %2934 = vmatpush1.msra.mxu0 0.0
        %2935 = vmatprep.subr.mxu0 0.0
        %2936 = vmatpush1.msra.mxu0 0.0
        %2937 = vmatprep.subr.mxu0 0.0
        %2938 = vmatpush1.msra.mxu0 0.0
        %2939 = vmatprep.subr.mxu0 0.0
        %2940 = vmatpush1.msra.mxu0 0.0
        %2941 = vmatprep.subr.mxu0 0.0
        %2942 = vmatpush1.msra.mxu0 0.0
        %2943 = vmatprep.subr.mxu0 0.0
        %2944 = vmatpush1.msra.mxu0 0.0
        %2945 = vmatprep.subr.mxu0 0.0
        %2946 = vmatpush1.msra.mxu0 0.0
        %2947 = vmatprep.subr.mxu0 0.0
        %2948 = vmatpush1.msra.mxu0 0.0
        %2949 = vmatprep.subr.mxu0 0.0
        %2950 = vmatpush1.msra.mxu0 0.0
        %2951 = vmatprep.subr.mxu0 0.0
        %2952 = vmatpush1.msra.mxu0 0.0
        %2953 = vmatprep.subr.mxu0 0.0
        %2954 = vmatpush1.msra.mxu0 0.0
        %2955 = vmatprep.subr.mxu0 0.0
        %2956 = vmatpush1.msra.mxu0 0.0
        %2957 = vmatprep.subr.mxu0 0.0
        %2958 = vmatpush1.msra.mxu0 0.0
        %2959 = vmatprep.subr.mxu0 0.0
        %2960 = vmatpush1.msra.mxu0 0.0
        %2961 = vmatprep.subr.mxu0 0.0
        %2962 = vmatpush1.msra.mxu0 0.0
        %2963 = vmatprep.subr.mxu0 0.0
        %2964 = vmatpush1.msra.mxu0 0.0
        %2965 = vmatprep.subr.mxu0 0.0
        %2966 = vmatpush1.msra.mxu0 0.0
        %2967 = vmatprep.subr.mxu0 0.0
        %2968 = vmatpush1.msra.mxu0 0.0
        %2969 = vmatprep.mubr.f32.mxu0 0.0
        %2970 = vmatmul.mubr.f32.gmra.mrb[0].mxu0 %v2903
        %v2971 = vpop.f32.mrb[0].mxu0
        %v2972 = vadd.f32 %v2901, %v2971
        %v2973 = vpop.f32.mrb[0].mxu0
        %2974 = vdwg.mxu0
        %v2975 = vadd.f32 %v2779, %v2972
        %v2976 = vsel %vm1447, %v2975, 0.0
        %2977 = vadd.xlane.f32.xlu0 %v2976
        %v2978 = vpop.xlane.xlu0 %2977
        %v2979 = vmul.f32 %v2978, %v1464
        %v2980 = vsub.f32 %v2975, %v2979
        %v2981 = vmul.f32 %v2980, %v2980
        %v2982 = vsel %vm1447, %v2981, 0.0
        %2983 = vadd.xlane.f32.xlu0 %v2982
        %v2984 = vpop.xlane.xlu0 %2983
        %v2985 = vmul.f32 %v2984, %v1464
        %v2986 = vadd.f32 %v2985, 1e-05
        %v2987 = vrsqrt.pop %v2986
        %v2988 = vmul.f32 %v2980, %v2987
        %v2989 = vlaneseq
        %v2990 = vshrl.u32 %v2989, 7
        %v2991 = vsub.s32 5, %v2990
        %v2992 = vrot.slane %v302, %v2991
        %v2993 = vmul.f32 %v2988, %v2992
        %v2994 = vlaneseq
        %v2995 = vshrl.u32 %v2994, 7
        %v2996 = vsub.s32 6, %v2995
        %v2997 = vrot.slane %v302, %v2996
        %v2998 = vadd.f32 %v2993, %v2997
        %v3000 = vrot.slane %v2998, 1
        %vm3002 = vcmask 257024
        %v3003 = vsel %vm3002, %v3000, 0.0
        %v3004 = vrot.slane %v3003, 4
        %v3005 = vadd.f32 %v3003, %v3004
        %v3006 = vrot.slane %v3005, 2
        %v3007 = vadd.f32 %v3005, %v3006
        %v3008 = vrot.slane %v3007, 1
        %v3009 = vadd.f32 %v3007, %v3008
        %v3010 = vmul.f32 %v3009, 0.25
        %v3011 = vadd.f32 %v2998, %v3010
        %vm3012 = vcmask 253952
        %v3013 = vsel %vm3012, %v3011, 0.0
        %3014 = vadd.xlane.f32.xlu0 %v3013
        %v3015 = vpop.xlane.xlu0 %3014
        %v3016 = vmul.f32 %v3015, %v1464
        %v3017 = vsub.f32 %v3011, %v3016
        %v3018 = vmul.f32 %v3017, %v3017
        %v3019 = vsel %vm3012, %v3018, 0.0
        %3020 = vadd.xlane.f32.xlu0 %v3019
        %v3021 = vpop.xlane.xlu0 %3020
        %v3022 = vmul.f32 %v3021, %v1464
        %v3023 = vadd.f32 %v3022, 1e-05
        %v3024 = vrsqrt.pop %v3023
        %v3025 = vmul.f32 %v3017, %v3024
        %v3027 = vrot.slane %v302, 7
        %v3029 = vmul.f32 %v3025, %v3027
        %v3030 = vadd.f32 %v3029, %v303
        %v3031 = vld [vmem:[%s7] sm:$0xff]
        %v3032 = vld [vmem:[%s7 + $0x8] sm:$0xff]
        %v3033 = vld [vmem:[%s7 + $0x10] sm:$0xff]
        %v3034 = vld [vmem:[%s7 + $0x18] sm:$0xff]
        %v3036 = vrot.slane %v303, 1
        %v3039 = vsel %vm410, %v3030, 0
        %3041 = vmatprep.subr.mxu0 0.0
        %3042 = vmatpush1.msra.mxu0 %v3031
        %3043 = vmatprep.subr.mxu0 0.0
        %3044 = vmatpush1.msra.mxu0 %v3032
        %3045 = vmatprep.subr.mxu0 0.0
        %3046 = vmatpush1.msra.mxu0 %v3033
        %3047 = vmatprep.subr.mxu0 0.0
        %3048 = vmatpush1.msra.mxu0 %v3034
        %3049 = vmatprep.subr.mxu0 0.0
        %3050 = vmatpush1.msra.mxu0 0.0
        %3051 = vmatprep.subr.mxu0 0.0
        %3052 = vmatpush1.msra.mxu0 0.0
        %3053 = vmatprep.subr.mxu0 0.0
        %3054 = vmatpush1.msra.mxu0 0.0
        %3055 = vmatprep.subr.mxu0 0.0
        %3056 = vmatpush1.msra.mxu0 0.0
        %3057 = vmatprep.subr.mxu0 0.0
        %3058 = vmatpush1.msra.mxu0 0.0
        %3059 = vmatprep.subr.mxu0 0.0
        %3060 = vmatpush1.msra.mxu0 0.0
        %3061 = vmatprep.subr.mxu0 0.0
        %3062 = vmatpush1.msra.mxu0 0.0
        %3063 = vmatprep.subr.mxu0 0.0
        %3064 = vmatpush1.msra.mxu0 0.0
        %3065 = vmatprep.subr.mxu0 0.0
        %3066 = vmatpush1.msra.mxu0 0.0
        %3067 = vmatprep.subr.mxu0 0.0
        %3068 = vmatpush1.msra.mxu0 0.0
        %3069 = vmatprep.subr.mxu0 0.0
        %3070 = vmatpush1.msra.mxu0 0.0
        %3071 = vmatprep.subr.mxu0 0.0
        %3072 = vmatpush1.msra.mxu0 0.0
        %3073 = vmatprep.subr.mxu0 0.0
        %3074 = vmatpush1.msra.mxu0 0.0
        %3075 = vmatprep.subr.mxu0 0.0
        %3076 = vmatpush1.msra.mxu0 0.0
        %3077 = vmatprep.subr.mxu0 0.0
        %3078 = vmatpush1.msra.mxu0 0.0
        %3079 = vmatprep.subr.mxu0 0.0
        %3080 = vmatpush1.msra.mxu0 0.0
        %3081 = vmatprep.subr.mxu0 0.0
        %3082 = vmatpush1.msra.mxu0 0.0
        %3083 = vmatprep.subr.mxu0 0.0
        %3084 = vmatpush1.msra.mxu0 0.0
        %3085 = vmatprep.subr.mxu0 0.0
        %3086 = vmatpush1.msra.mxu0 0.0
        %3087 = vmatprep.subr.mxu0 0.0
        %3088 = vmatpush1.msra.mxu0 0.0
        %3089 = vmatprep.subr.mxu0 0.0
        %3090 = vmatpush1.msra.mxu0 0.0
        %3091 = vmatprep.subr.mxu0 0.0
        %3092 = vmatpush1.msra.mxu0 0.0
        %3093 = vmatprep.subr.mxu0 0.0
        %3094 = vmatpush1.msra.mxu0 0.0
        %3095 = vmatprep.subr.mxu0 0.0
        %3096 = vmatpush1.msra.mxu0 0.0
        %3097 = vmatprep.subr.mxu0 0.0
        %3098 = vmatpush1.msra.mxu0 0.0
        %3099 = vmatprep.subr.mxu0 0.0
        %3100 = vmatpush1.msra.mxu0 0.0
        %3101 = vmatprep.subr.mxu0 0.0
        %3102 = vmatpush1.msra.mxu0 0.0
        %3103 = vmatprep.subr.mxu0 0.0
        %3104 = vmatpush1.msra.mxu0 0.0
        %3105 = vmatprep.mubr.f32.mxu0 0.0
        %3106 = vmatmul.mubr.f32.gmra.mrb[0].mxu0 %v3039
        %v3107 = vpop.f32.mrb[0].mxu0
        %v3108 = vadd.f32 %v3036, %v3107
        %v3109 = vpop.f32.mrb[0].mxu0
        %3110 = vdwg.mxu0
        %vm3111 = vcmask 24576
        %3112 = vst.msk [vmem:[%s295] sm:$0x1] %vm3111, %v3108
        %s3113 = sand.u32 %s203, 1
        %s3114 = scalar_lea.sflag [#allocation3], %s3113
        %s3115 = sand.u32 %s203, 1
        %s3116 = scalar_lea.vmem [#allocation2], %s3115
        // Predicated region
        $region53: #{vit_forward.1} parent=51 // pred_check
          %p3117 = pneg %p213
        $region54: #{vit_forward.1} parent=51 // pred_check_branch
          %3119 = sbr.rel (%p3117) target = $region56
        $region55: #{vit_forward.1} parent=51 // pred_region
          %s3121 = ssub.s32 16, 16
          %3122 = vsyncadd %s3114, %s3121
          %s3123 = smul.addr %s22, 16
          %s3124 = scalar_lea.hbm %s8, %s3123
          %s3126 = sshll.u32 %s3116, 4
          %s3127 = int_to_ptr.vmem [resolvable:$true] %s3126
          %3129 = dma.vmem_to_hbm [thread:$0]  %s3127, 16, %s3124, %s3114
        $region56: #{vit_forward.1} parent=51 // pred_fallthru
          _
      $region52: #{vit_forward.1} parent=5 // pred_fallthru
        _
      %p3130 = scmp.le.s32.totalorder 2, %s17
      // Predicated region
      $region57: #{vit_forward.1} parent=5 // pred_check
        %p3131 = pneg %p3130
      $region58: #{vit_forward.1} parent=5 // pred_check_branch
        %3133 = sbr.rel (%p3131) target = $region60
      $region59: #{vit_forward.1} parent=5 // pred_region
        %s3134 = ssub.s32 %s17, 2
        // Predicated region
        $region61: #{vit_forward.1} parent=59 // pred_check
          %p3135 = pneg %p219
        $region62: #{vit_forward.1} parent=59 // pred_check_branch
          %3137 = sbr.rel (%p3135) target = $region64
        $region63: #{vit_forward.1} parent=59 // pred_region
          %s3138 = sand.u32 %s204, 1
          %s3139 = scalar_lea.sflag [#allocation3], %s3138
          %s3140 = sand.u32 %s204, 1
          %s3141 = scalar_lea.vmem [#allocation2], %s3140
          %3142 = dma.done %s3139, 16
        $region64: #{vit_forward.1} parent=59 // pred_fallthru
          _
      $region60: #{vit_forward.1} parent=5 // pred_fallthru
        _
    $region6: #{vit_forward.1} parent=1 // loop_footer
      %s21 = sadd.s32 1, %s17
    $region7: #{vit_forward.1} parent=1 // loop_footer_branch
      %16 = sbr.rel target = $region3
    $region8: #{vit_forward.1} parent=1 // loop_exit
      _
    %3143 = vsyncpa [#allocation3], 1
    %s3144 = scalar_lea.sflag [#allocation3], 1
    %3145 = vsyncpa %s3144, 1

</llo_original>
